<compile_context>
chip_gen: v6e
topology: v6e:2x2x1
jax: 0.10.0
libtpu: 0.0.40
codegen_flags: <defaults>
</compile_context>

<pallas_src>
import jax
import jax.numpy as jnp
from jax.experimental import pallas as pl
from jax.experimental.pallas import tpu as pltpu


def _decoder_fused_kernel(xx_ref, w1e_ref, w1o_ref, v2_ref, w3_ref,
                          b1_ref, b2_ref, o_ref):
    f32, bf16 = jnp.float32, jnp.bfloat16
    tile = o_ref.shape[2]            # rows of final-layer positions j=4m+r per step
    xx = xx_ref[0, 0]                # (tile+1, 128) bf16: row i = [x[m-1] | x[m]], m=t0+i
    t1 = xx.shape[0]                 # tile + 1

    def mm(a, w):
        return jnp.dot(a, w, preferred_element_type=f32)

    b1 = b1_ref[...]                 # (1, 512) f32
    b2 = b2_ref[...]                 # (1, 256) f32

    # ---- layer 1: ConvT(64->512, k4 s2 p1) + ReLU (polyphase, taps packed to
    # a 128-deep contraction; bf16 operands, f32 accumulation).
    a_raw = jnp.maximum(mm(xx, w1e_ref[...]) + b1, 0.0)   # (tile+1,512)  A[i]=x1[2(t0+i)]
    b_raw = jnp.maximum(mm(xx, w1o_ref[...]) + b1, 0.0)   # (tile+1,512)  B[i]=x1[2(t0-1+i)+1]

    # Boundary conditions: x1[-1] (row used only by the first tile) and
    # x1[2L] (row used only by the last tile) do not exist -> must be zero,
    # not relu(bias + zero-input).
    rows = jax.lax.broadcasted_iota(jnp.int32, (t1, 1), 0)
    is_first = pl.program_id(1) == 0
    is_last = pl.program_id(1) == pl.num_programs(1) - 1
    b_raw = jnp.where(jnp.logical_and(rows == 0, is_first), 0.0, b_raw)
    a_raw = jnp.where(jnp.logical_and(rows == t1 - 1, is_last), 0.0, a_raw)

    a_act = a_raw.astype(bf16)
    b_act = b_raw.astype(bf16)

    # ---- layer 2: ConvT(512->256, k4 s2 p1) + ReLU.  One wide RHS
    # [v0|v1|v2|v3] (512x1024); the "+1 row" shifts are static row-offset
    # slices of the f32 products (commuted past the matmul, per review).
    q = mm(a_act, v2_ref[...])       # (tile+1, 1024) = [A v0 | A v1 | A v2 | A v3]
    p = mm(b_act, v2_ref[...])       # (tile+1, 1024) = [B v0 | B v1 | B v2 | B v3]

    def relu(v):
        return jnp.maximum(v, 0.0)

    c0 = relu(p[:tile, 768:1024] + q[:tile, 256:512] + b2).astype(bf16)  # x2[4m]
    c1 = relu(q[:tile, 512:768] + p[1:, 0:256] + b2).astype(bf16)        # x2[4m+1]
    c2 = relu(q[:tile, 768:1024] + p[1:, 256:512] + b2).astype(bf16)     # x2[4m+2]
    c3 = relu(p[1:, 512:768] + q[1:, 0:256] + b2).astype(bf16)           # x2[4m+3]

    # ---- layer 3 taps: D_r[i, 4k+c] = x2[4m+r] . W3_k[:, c]  (bias + the
    # final (tap, position) interleave are done by tiny XLA glue outside).
    w3c = w3_ref[...]                # (256, 16) = [W0|W1|W2|W3]
    o_ref[0, 0] = mm(c0, w3c)
    o_ref[0, 1] = mm(c1, w3c)
    o_ref[0, 2] = mm(c2, w3c)
    o_ref[0, 3] = mm(c3, w3c)


def _pick_tile(length, max_tile):
    """Largest multiple-of-8 tile <= max_tile that divides `length`."""
    max_tile = max(8, (max_tile // 8) * 8)
    if length <= max_tile:
        return length
    t = max_tile
    while t >= 8:
        if length % t == 0:
            return t
        t -= 8
    # TODO(synk): pad ragged sequence lengths instead of falling back to a
    # whole-sequence tile (only hit when L has no multiple-of-8 divisor <= 512).
    return length


class DecoderPallas:
    """Pallas TPU port of find_parameter/VQRNA_find_parameter.py::Decoder."""

    def __init__(self, key):
        k1, k2, k3, k4, k5, k6 = jax.random.split(key, 6)
        scale = 0.05
        # Raw parameters in PyTorch ConvTranspose1d layout (C_in, C_out, K).
        self.w1 = scale * jax.random.normal(k1, (64, 512, 4), jnp.float32)
        self.b1 = scale * jax.random.normal(k2, (512,), jnp.float32)
        self.w2 = scale * jax.random.normal(k3, (512, 256, 4), jnp.float32)
        self.b2 = scale * jax.random.normal(k4, (256,), jnp.float32)
        self.w3 = scale * jax.random.normal(k5, (256, 4, 4), jnp.float32)
        self.b3 = scale * jax.random.normal(k6, (4,), jnp.float32)

        bf16 = jnp.bfloat16
        # --- packed bf16 weights (hoisted, done once). ---
        w1k = [self.w1[:, :, k] for k in range(4)]                     # (64,512)
        # A[m] = x[m-1]*W3 + x[m]*W1 ; operand rows are [x[m-1] | x[m]].
        self.w1_even = jnp.concatenate([w1k[3], w1k[1]], 0).astype(bf16)  # (128,512)
        # B[m] = x[m]*W2 + x[m+1]*W0 ; operand rows are [x[m] | x[m+1]].
        self.w1_odd = jnp.concatenate([w1k[2], w1k[0]], 0).astype(bf16)   # (128,512)
        # Layer-2 taps fused into one wide RHS [v0|v1|v2|v3].
        self.v2cat = jnp.concatenate(
            [self.w2[:, :, k] for k in range(4)], axis=1).astype(bf16)    # (512,1024)
        # Layer-3 taps fused into one narrow RHS [W0|W1|W2|W3].
        self.w3cat = jnp.concatenate(
            [self.w3[:, :, k] for k in range(4)], axis=1).astype(bf16)    # (256,16)

        self.b1_row = self.b1.reshape(1, 512)
        self.b2_row = self.b2.reshape(1, 256)

    def __call__(self, x_ncl, max_tile=512):
        # x_ncl: (N, 64, L) -- PyTorch NCL layout.
        N, c_in, L = x_ncl.shape
        assert c_in == 64
        tile = _pick_tile(L, max_tile)
        num_tiles = L // tile

        # ---- wrapper-side input packing (cheap XLA, once per call) ----
        # xx_glob[m] = [x[m-1] | x[m]] for m in [0, L] (out-of-range rows = 0).
        x_nlc = jnp.transpose(x_ncl, (0, 2, 1)).astype(jnp.float32)       # (N, L, 64)
        zrow = jnp.zeros((N, 1, 64), jnp.float32)
        xa = jnp.concatenate([zrow, x_nlc], axis=1)                       # row m: x[m-1]
        xb = jnp.concatenate([x_nlc, zrow], axis=1)                       # row m: x[m]
        xx_glob = jnp.concatenate([xa, xb], axis=-1)                      # (N, L+1, 128)
        idx = (jnp.arange(num_tiles)[:, None] * tile
               + jnp.arange(tile + 1)[None, :])                           # (T, tile+1)
        xx_tiles = xx_glob[:, idx, :].astype(jnp.bfloat16)                # (N,T,tile+1,128)

        # NOTE: the constant-index weight specs could be single-buffered via
        # pipeline_mode=pl.Buffered(1) to save ~1.3 MiB of VMEM; left at the
        # default double-buffering for portability.
        z = pl.pallas_call(
            _decoder_fused_kernel,
            out_shape=jax.ShapeDtypeStruct((N, 4, L, 16), jnp.float32),
            grid=(N, num_tiles),
            in_specs=[
                pl.BlockSpec((1, 1, tile + 1, 128), lambda b, t: (b, t, 0, 0)),
                pl.BlockSpec((128, 512), lambda b, t: (0, 0)),
                pl.BlockSpec((128, 512), lambda b, t: (0, 0)),
                pl.BlockSpec((512, 1024), lambda b, t: (0, 0)),
                pl.BlockSpec((256, 16), lambda b, t: (0, 0)),
                pl.BlockSpec((1, 512), lambda b, t: (0, 0)),
                pl.BlockSpec((1, 256), lambda b, t: (0, 0)),
            ],
            out_specs=pl.BlockSpec((1, 4, tile, 16), lambda b, t: (b, 0, t, 0)),
            compiler_params=pltpu.CompilerParams(
                dimension_semantics=("parallel", "parallel"),
                vmem_limit_bytes=32 * 1024 * 1024),
        )(xx_tiles, self.w1_even, self.w1_odd, self.v2cat, self.w3cat,
          self.b1_row, self.b2_row)

        # ---- tiny XLA glue: interleave layer-3 taps into final positions ----
        # z[b, r, m, 4k+c] = x2[b, 4m+r] . W3_k[:, c]
        z5 = z.reshape(N, 4, L, 4, 4)                                   # (b, r, m, k, c)
        d0_next = jnp.concatenate(
            [z5[:, 0, 1:], jnp.zeros((N, 1, 4, 4), jnp.float32)], axis=1)  # D0 at m+1
        nxt = jnp.concatenate([z5[:, 1:], d0_next[:, None]], axis=1)    # taps of x2[j+1]
        p0 = z5[:, :, :, 2, :]                                          # y[3j]   = x2[j].W2
        p1 = z5[:, :, :, 3, :] + nxt[:, :, :, 0, :]                     # y[3j+1]
        p2 = nxt[:, :, :, 1, :]                                         # y[3j+2]
        y = jnp.stack([p0, p1, p2], axis=3) + self.b3.reshape(1, 1, 1, 1, 4)
        # (b, r, m, p, c) -> t = 12m + 3r + p; drop the 3 out-of-range tail rows.
        y = jnp.transpose(y, (0, 2, 1, 3, 4)).reshape(N, 12 * L, 4)
        y = y[:, : 12 * L - 3, :]
        return jnp.transpose(y, (0, 2, 1))                              # (N, 4, 12L-3)


# ----------------------------- pure-JAX reference ---------------------------
def conv_transpose1d_ref(x_ncl, weight, bias, *, stride, padding):
    N, C_in, L = x_ncl.shape
    _, C_out, K = weight.shape
    L_out = (L - 1) * stride - 2 * padding + K
    y = jnp.zeros((N, C_out, L_out + 2 * padding), jnp.float32)
    for li in range(L):
        for kk in range(K):
            lo = li * stride + kk
            contrib = jnp.einsum('nc,cd->nd', x_ncl[:, :, li], weight[:, :, kk],
                                 precision=jax.lax.Precision.HIGHEST)
            y = y.at[:, :, lo].add(contrib)
    y = y[:, :, padding:padding + L_out]
    return y + bias[None, :, None]


def decoder_ref(x_ncl, dec):
    x = conv_transpose1d_ref(x_ncl, dec.w1, dec.b1, stride=2, padding=1)
    x = jnp.maximum(x, 0.0)
    x = conv_transpose1d_ref(x, dec.w2, dec.b2, stride=2, padding=1)
    x = jnp.maximum(x, 0.0)
    x = conv_transpose1d_ref(x, dec.w3, dec.b3, stride=3, padding=2)
    return x


if __name__ == "__main__":
    key = jax.random.PRNGKey(0)
    pkey, xkey = jax.random.split(key)

    dec = DecoderPallas(pkey)

    N, C_in, L = 2, 64, 16
    x = jax.random.normal(xkey, (N, C_in, L), jnp.float32)

    # Whole-sequence tile (T=1) and forced 2-tile run (exercises the halo /
    # boundary-mask path across L-tiles).
    out = jax.block_until_ready(dec(x))
    out_tiled = jax.block_until_ready(dec(x, max_tile=8))

    assert out.shape == (N, 4, 12 * L - 3), out.shape
    assert out_tiled.shape == (N, 4, 12 * L - 3), out_tiled.shape

    ref = jax.block_until_ready(decoder_ref(x, dec))
    # bf16 inputs/weights with f32 accumulation -> relaxed tolerance vs f32 ref.
    err1 = float(jnp.max(jnp.abs(out - ref)))
    err2 = float(jnp.max(jnp.abs(out_tiled - ref)))
    assert jnp.allclose(out, ref, rtol=2.5e-2, atol=2.5e-2), err1
    assert jnp.allclose(out_tiled, ref, rtol=2.5e-2, atol=2.5e-2), err2

    print("KERNEL_OK")
</pallas_src>

<mosaic_0001>
module attributes {stable_mosaic.version = 11 : i64} {
  func.func @_decoder_fused_kernel(%arg0: i32, %arg1: i32, %arg2: memref<1x1x17x128xbf16, #tpu.memory_space<vmem>>, %arg3: memref<128x512xbf16, #tpu.memory_space<vmem>>, %arg4: memref<128x512xbf16, #tpu.memory_space<vmem>>, %arg5: memref<512x1024xbf16, #tpu.memory_space<vmem>>, %arg6: memref<256x16xbf16, #tpu.memory_space<vmem>>, %arg7: memref<1x512xf32, #tpu.memory_space<vmem>>, %arg8: memref<1x256xf32, #tpu.memory_space<vmem>>, %arg9: memref<1x4x16x16xf32, #tpu.memory_space<vmem>>) attributes {dimension_semantics = [#tpu.dimension_semantics<parallel>, #tpu.dimension_semantics<parallel>], iteration_bounds = array<i64: 2, 1>, scalar_prefetch = 0 : i64, scratch_operands = 0 : i64, tpu.core_type = #tpu.core_type<tc>, window_params = [{transform_indices = @transform_0, window_bounds = array<i64: 1, 1, 17, 128>}, {pipeline_mode = #tpu.pipeline_mode<synchronous>, transform_indices = @transform_1, window_bounds = array<i64: 128, 512>}, {pipeline_mode = #tpu.pipeline_mode<synchronous>, transform_indices = @transform_2, window_bounds = array<i64: 128, 512>}, {pipeline_mode = #tpu.pipeline_mode<synchronous>, transform_indices = @transform_3, window_bounds = array<i64: 512, 1024>}, {pipeline_mode = #tpu.pipeline_mode<synchronous>, transform_indices = @transform_4, window_bounds = array<i64: 256, 16>}, {pipeline_mode = #tpu.pipeline_mode<synchronous>, transform_indices = @transform_5, window_bounds = array<i64: 1, 512>}, {pipeline_mode = #tpu.pipeline_mode<synchronous>, transform_indices = @transform_6, window_bounds = array<i64: 1, 256>}, {transform_indices = @transform_7, window_bounds = array<i64: 1, 4, 16, 16>}]} {
    %c0 = arith.constant 0 : index
    %c0_0 = arith.constant 0 : index
    %c0_1 = arith.constant 0 : index
    %c0_2 = arith.constant 0 : index
    %0 = vector.load %arg2[%c0, %c0_0, %c0_1, %c0_2] : memref<1x1x17x128xbf16, #tpu.memory_space<vmem>>, vector<1x1x17x128xbf16>
    %1 = vector.shape_cast %0 : vector<1x1x17x128xbf16> to vector<17x128xbf16>
    %c0_3 = arith.constant 0 : index
    %c0_4 = arith.constant 0 : index
    %2 = vector.load %arg7[%c0_3, %c0_4] : memref<1x512xf32, #tpu.memory_space<vmem>>, vector<1x512xf32>
    %c0_5 = arith.constant 0 : index
    %c0_6 = arith.constant 0 : index
    %3 = vector.load %arg8[%c0_5, %c0_6] : memref<1x256xf32, #tpu.memory_space<vmem>>, vector<1x256xf32>
    %c0_7 = arith.constant 0 : index
    %c0_8 = arith.constant 0 : index
    %4 = vector.load %arg3[%c0_7, %c0_8] : memref<128x512xbf16, #tpu.memory_space<vmem>>, vector<128x512xbf16>
    %cst = arith.constant dense<0.000000e+00> : vector<17x512xf32>
    %5 = tpu.matmul %1, %4, %cst {dimension_numbers = #tpu.dot_dimension_numbers<[1], [0], [0], [1], [0, 0, 1, 1], [], []>} : vector<17x128xbf16>, vector<128x512xbf16>, vector<17x512xf32> -> vector<17x512xf32>
    %6 = vector.broadcast %2 : vector<1x512xf32> to vector<17x512xf32>
    %7 = arith.addf %5, %6 : vector<17x512xf32>
    %cst_9 = arith.constant 0.000000e+00 : f32
    %8 = vector.broadcast %cst_9 : f32 to vector<17x512xf32>
    %9 = arith.maximumf %7, %8 : vector<17x512xf32>
    %c0_10 = arith.constant 0 : index
    %c0_11 = arith.constant 0 : index
    %10 = vector.load %arg4[%c0_10, %c0_11] : memref<128x512xbf16, #tpu.memory_space<vmem>>, vector<128x512xbf16>
    %cst_12 = arith.constant dense<0.000000e+00> : vector<17x512xf32>
    %11 = tpu.matmul %1, %10, %cst_12 {dimension_numbers = #tpu.dot_dimension_numbers<[1], [0], [0], [1], [0, 0, 1, 1], [], []>} : vector<17x128xbf16>, vector<128x512xbf16>, vector<17x512xf32> -> vector<17x512xf32>
    %12 = vector.broadcast %2 : vector<1x512xf32> to vector<17x512xf32>
    %13 = arith.addf %11, %12 : vector<17x512xf32>
    %cst_13 = arith.constant 0.000000e+00 : f32
    %14 = vector.broadcast %cst_13 : f32 to vector<17x512xf32>
    %15 = arith.maximumf %13, %14 : vector<17x512xf32>
    %16 = tpu.iota {dimensions = array<i32: 0>} : vector<17x1xi32>
    %c0_i32 = arith.constant 0 : i32
    %17 = arith.cmpi eq, %arg1, %c0_i32 : i32
    %c0_i32_14 = arith.constant 0 : i32
    %18 = arith.cmpi eq, %arg1, %c0_i32_14 : i32
    %c0_i32_15 = arith.constant 0 : i32
    %19 = vector.broadcast %c0_i32_15 : i32 to vector<17x1xi32>
    %20 = arith.cmpi eq, %16, %19 : vector<17x1xi32>
    %21 = vector.broadcast %17 : i1 to vector<17x1xi1>
    %22 = arith.andi %20, %21 : vector<17x1xi1>
    %cst_16 = arith.constant 0.000000e+00 : f32
    %23 = vector.shape_cast %22 : vector<17x1xi1> to vector<17x1xi1>
    %24 = vector.broadcast %23 : vector<17x1xi1> to vector<17x512xi1>
    %25 = vector.broadcast %cst_16 : f32 to vector<17x512xf32>
    %26 = arith.select %24, %25, %15 : vector<17x512xi1>, vector<17x512xf32>
    %c16_i32 = arith.constant 16 : i32
    %27 = vector.broadcast %c16_i32 : i32 to vector<17x1xi32>
    %28 = arith.cmpi eq, %16, %27 : vector<17x1xi32>
    %29 = vector.broadcast %18 : i1 to vector<17x1xi1>
    %30 = arith.andi %28, %29 : vector<17x1xi1>
    %cst_17 = arith.constant 0.000000e+00 : f32
    %31 = vector.shape_cast %30 : vector<17x1xi1> to vector<17x1xi1>
    %32 = vector.broadcast %31 : vector<17x1xi1> to vector<17x512xi1>
    %33 = vector.broadcast %cst_17 : f32 to vector<17x512xf32>
    %34 = arith.select %32, %33, %9 : vector<17x512xi1>, vector<17x512xf32>
    %35 = arith.truncf %34 : vector<17x512xf32> to vector<17x512xbf16>
    %36 = arith.truncf %26 : vector<17x512xf32> to vector<17x512xbf16>
    %c0_18 = arith.constant 0 : index
    %c0_19 = arith.constant 0 : index
    %37 = vector.load %arg5[%c0_18, %c0_19] : memref<512x1024xbf16, #tpu.memory_space<vmem>>, vector<512x1024xbf16>
    %cst_20 = arith.constant dense<0.000000e+00> : vector<17x1024xf32>
    %38 = tpu.matmul %35, %37, %cst_20 {dimension_numbers = #tpu.dot_dimension_numbers<[1], [0], [0], [1], [0, 0, 1, 1], [], []>} : vector<17x512xbf16>, vector<512x1024xbf16>, vector<17x1024xf32> -> vector<17x1024xf32>
    %c0_21 = arith.constant 0 : index
    %c0_22 = arith.constant 0 : index
    %39 = vector.load %arg5[%c0_21, %c0_22] : memref<512x1024xbf16, #tpu.memory_space<vmem>>, vector<512x1024xbf16>
    %cst_23 = arith.constant dense<0.000000e+00> : vector<17x1024xf32>
    %40 = tpu.matmul %36, %39, %cst_23 {dimension_numbers = #tpu.dot_dimension_numbers<[1], [0], [0], [1], [0, 0, 1, 1], [], []>} : vector<17x512xbf16>, vector<512x1024xbf16>, vector<17x1024xf32> -> vector<17x1024xf32>
    %41 = vector.extract_strided_slice %40 {offsets = [0, 768], sizes = [16, 256], strides = [1, 1]} : vector<17x1024xf32> to vector<16x256xf32>
    %42 = vector.extract_strided_slice %38 {offsets = [0, 256], sizes = [16, 256], strides = [1, 1]} : vector<17x1024xf32> to vector<16x256xf32>
    %43 = arith.addf %41, %42 : vector<16x256xf32>
    %44 = vector.broadcast %3 : vector<1x256xf32> to vector<16x256xf32>
    %45 = arith.addf %43, %44 : vector<16x256xf32>
    %cst_24 = arith.constant 0.000000e+00 : f32
    %46 = vector.broadcast %cst_24 : f32 to vector<16x256xf32>
    %47 = arith.maximumf %45, %46 : vector<16x256xf32>
    %48 = arith.truncf %47 : vector<16x256xf32> to vector<16x256xbf16>
    %49 = vector.extract_strided_slice %38 {offsets = [0, 512], sizes = [16, 256], strides = [1, 1]} : vector<17x1024xf32> to vector<16x256xf32>
    %50 = vector.extract_strided_slice %40 {offsets = [1, 0], sizes = [16, 256], strides = [1, 1]} : vector<17x1024xf32> to vector<16x256xf32>
    %51 = arith.addf %49, %50 : vector<16x256xf32>
    %52 = vector.broadcast %3 : vector<1x256xf32> to vector<16x256xf32>
    %53 = arith.addf %51, %52 : vector<16x256xf32>
    %cst_25 = arith.constant 0.000000e+00 : f32
    %54 = vector.broadcast %cst_25 : f32 to vector<16x256xf32>
    %55 = arith.maximumf %53, %54 : vector<16x256xf32>
    %56 = arith.truncf %55 : vector<16x256xf32> to vector<16x256xbf16>
    %57 = vector.extract_strided_slice %38 {offsets = [0, 768], sizes = [16, 256], strides = [1, 1]} : vector<17x1024xf32> to vector<16x256xf32>
    %58 = vector.extract_strided_slice %40 {offsets = [1, 256], sizes = [16, 256], strides = [1, 1]} : vector<17x1024xf32> to vector<16x256xf32>
    %59 = arith.addf %57, %58 : vector<16x256xf32>
    %60 = vector.broadcast %3 : vector<1x256xf32> to vector<16x256xf32>
    %61 = arith.addf %59, %60 : vector<16x256xf32>
    %cst_26 = arith.constant 0.000000e+00 : f32
    %62 = vector.broadcast %cst_26 : f32 to vector<16x256xf32>
    %63 = arith.maximumf %61, %62 : vector<16x256xf32>
    %64 = arith.truncf %63 : vector<16x256xf32> to vector<16x256xbf16>
    %65 = vector.extract_strided_slice %40 {offsets = [1, 512], sizes = [16, 256], strides = [1, 1]} : vector<17x1024xf32> to vector<16x256xf32>
    %66 = vector.extract_strided_slice %38 {offsets = [1, 0], sizes = [16, 256], strides = [1, 1]} : vector<17x1024xf32> to vector<16x256xf32>
    %67 = arith.addf %65, %66 : vector<16x256xf32>
    %68 = vector.broadcast %3 : vector<1x256xf32> to vector<16x256xf32>
    %69 = arith.addf %67, %68 : vector<16x256xf32>
    %cst_27 = arith.constant 0.000000e+00 : f32
    %70 = vector.broadcast %cst_27 : f32 to vector<16x256xf32>
    %71 = arith.maximumf %69, %70 : vector<16x256xf32>
    %72 = arith.truncf %71 : vector<16x256xf32> to vector<16x256xbf16>
    %c0_28 = arith.constant 0 : index
    %c0_29 = arith.constant 0 : index
    %73 = vector.load %arg6[%c0_28, %c0_29] : memref<256x16xbf16, #tpu.memory_space<vmem>>, vector<256x16xbf16>
    %cst_30 = arith.constant dense<0.000000e+00> : vector<16x16xf32>
    %74 = tpu.matmul %48, %73, %cst_30 {dimension_numbers = #tpu.dot_dimension_numbers<[1], [0], [0], [1], [0, 0, 1, 1], [], []>} : vector<16x256xbf16>, vector<256x16xbf16>, vector<16x16xf32> -> vector<16x16xf32>
    %c0_31 = arith.constant 0 : index
    %c0_32 = arith.constant 0 : index
    %c0_33 = arith.constant 0 : index
    %c0_34 = arith.constant 0 : index
    %75 = vector.load %arg9[%c0_31, %c0_32, %c0_33, %c0_34] : memref<1x4x16x16xf32, #tpu.memory_space<vmem>>, vector<1x1x16x16xf32>
    %76 = vector.shape_cast %75 : vector<1x1x16x16xf32> to vector<16x16xf32>
    %77 = vector.shape_cast %74 : vector<16x16xf32> to vector<1x1x16x16xf32>
    tpu.vector_store %arg9[%c0_31, %c0_32, %c0_33, %c0_34], %77 {strides = array<i32>} : memref<1x4x16x16xf32, #tpu.memory_space<vmem>>, vector<1x1x16x16xf32>,
    %cst_35 = arith.constant dense<0.000000e+00> : vector<16x16xf32>
    %78 = tpu.matmul %56, %73, %cst_35 {dimension_numbers = #tpu.dot_dimension_numbers<[1], [0], [0], [1], [0, 0, 1, 1], [], []>} : vector<16x256xbf16>, vector<256x16xbf16>, vector<16x16xf32> -> vector<16x16xf32>
    %c0_36 = arith.constant 0 : index
    %c1 = arith.constant 1 : index
    %c0_37 = arith.constant 0 : index
    %c0_38 = arith.constant 0 : index
    %79 = vector.load %arg9[%c0_36, %c1, %c0_37, %c0_38] : memref<1x4x16x16xf32, #tpu.memory_space<vmem>>, vector<1x1x16x16xf32>
    %80 = vector.shape_cast %79 : vector<1x1x16x16xf32> to vector<16x16xf32>
    %81 = vector.shape_cast %78 : vector<16x16xf32> to vector<1x1x16x16xf32>
    tpu.vector_store %arg9[%c0_36, %c1, %c0_37, %c0_38], %81 {strides = array<i32>} : memref<1x4x16x16xf32, #tpu.memory_space<vmem>>, vector<1x1x16x16xf32>,
    %cst_39 = arith.constant dense<0.000000e+00> : vector<16x16xf32>
    %82 = tpu.matmul %64, %73, %cst_39 {dimension_numbers = #tpu.dot_dimension_numbers<[1], [0], [0], [1], [0, 0, 1, 1], [], []>} : vector<16x256xbf16>, vector<256x16xbf16>, vector<16x16xf32> -> vector<16x16xf32>
    %c0_40 = arith.constant 0 : index
    %c2 = arith.constant 2 : index
    %c0_41 = arith.constant 0 : index
    %c0_42 = arith.constant 0 : index
    %83 = vector.load %arg9[%c0_40, %c2, %c0_41, %c0_42] : memref<1x4x16x16xf32, #tpu.memory_space<vmem>>, vector<1x1x16x16xf32>
    %84 = vector.shape_cast %83 : vector<1x1x16x16xf32> to vector<16x16xf32>
    %85 = vector.shape_cast %82 : vector<16x16xf32> to vector<1x1x16x16xf32>
    tpu.vector_store %arg9[%c0_40, %c2, %c0_41, %c0_42], %85 {strides = array<i32>} : memref<1x4x16x16xf32, #tpu.memory_space<vmem>>, vector<1x1x16x16xf32>,
    %cst_43 = arith.constant dense<0.000000e+00> : vector<16x16xf32>
    %86 = tpu.matmul %72, %73, %cst_43 {dimension_numbers = #tpu.dot_dimension_numbers<[1], [0], [0], [1], [0, 0, 1, 1], [], []>} : vector<16x256xbf16>, vector<256x16xbf16>, vector<16x16xf32> -> vector<16x16xf32>
    %c0_44 = arith.constant 0 : index
    %c3 = arith.constant 3 : index
    %c0_45 = arith.constant 0 : index
    %c0_46 = arith.constant 0 : index
    %87 = vector.load %arg9[%c0_44, %c3, %c0_45, %c0_46] : memref<1x4x16x16xf32, #tpu.memory_space<vmem>>, vector<1x1x16x16xf32>
    %88 = vector.shape_cast %87 : vector<1x1x16x16xf32> to vector<16x16xf32>
    %89 = vector.shape_cast %86 : vector<16x16xf32> to vector<1x1x16x16xf32>
    tpu.vector_store %arg9[%c0_44, %c3, %c0_45, %c0_46], %89 {strides = array<i32>} : memref<1x4x16x16xf32, #tpu.memory_space<vmem>>, vector<1x1x16x16xf32>,
    return
  }
  func.func @transform_0(%arg0: i32, %arg1: i32) -> (i32, i32, i32, i32) {
    %c0_i32 = arith.constant 0 : i32
    %c0_i32_0 = arith.constant 0 : i32
    %c0_i32_1 = arith.constant 0 : i32
    return %arg0, %arg1, %c0_i32, %c0_i32_0 : i32, i32, i32, i32
  }
  func.func @transform_1(%arg0: i32, %arg1: i32) -> (i32, i32) {
    %c0_i32 = arith.constant 0 : i32
    %c0_i32_0 = arith.constant 0 : i32
    %c0_i32_1 = arith.constant 0 : i32
    return %c0_i32, %c0_i32_0 : i32, i32
  }
  func.func @transform_2(%arg0: i32, %arg1: i32) -> (i32, i32) {
    %c0_i32 = arith.constant 0 : i32
    %c0_i32_0 = arith.constant 0 : i32
    %c0_i32_1 = arith.constant 0 : i32
    return %c0_i32, %c0_i32_0 : i32, i32
  }
  func.func @transform_3(%arg0: i32, %arg1: i32) -> (i32, i32) {
    %c0_i32 = arith.constant 0 : i32
    %c0_i32_0 = arith.constant 0 : i32
    %c0_i32_1 = arith.constant 0 : i32
    return %c0_i32, %c0_i32_0 : i32, i32
  }
  func.func @transform_4(%arg0: i32, %arg1: i32) -> (i32, i32) {
    %c0_i32 = arith.constant 0 : i32
    %c0_i32_0 = arith.constant 0 : i32
    %c0_i32_1 = arith.constant 0 : i32
    return %c0_i32, %c0_i32_0 : i32, i32
  }
  func.func @transform_5(%arg0: i32, %arg1: i32) -> (i32, i32) {
    %c0_i32 = arith.constant 0 : i32
    %c0_i32_0 = arith.constant 0 : i32
    %c0_i32_1 = arith.constant 0 : i32
    return %c0_i32, %c0_i32_0 : i32, i32
  }
  func.func @transform_6(%arg0: i32, %arg1: i32) -> (i32, i32) {
    %c0_i32 = arith.constant 0 : i32
    %c0_i32_0 = arith.constant 0 : i32
    %c0_i32_1 = arith.constant 0 : i32
    return %c0_i32, %c0_i32_0 : i32, i32
  }
  func.func @transform_7(%arg0: i32, %arg1: i32) -> (i32, i32, i32, i32) {
    %c0_i32 = arith.constant 0 : i32
    %c0_i32_0 = arith.constant 0 : i32
    %c0_i32_1 = arith.constant 0 : i32
    return %arg0, %c0_i32, %arg1, %c0_i32_0 : i32, i32, i32, i32
  }
}

</mosaic_0001>

<llo_original>
// kernel: tpu_custom_call.1
$region0: #{tpu_custom_call.1}
  #allocation0 [shape = 'u32[]', space=smem, size = 0x4, offset = 0x4, fixed_abs, tag = 'smem constant byte address 0x4 - core index']
  #allocation1 [shape = 'u32[144,128]{1,0:T(1,128)}', space=vmem, size = 0x12000, scoped, tag = 'internal scratch']
  %s0 = inlined_call_operand.vmem [shape: bf16[2,1,17,128], index: 0, kind: input, shape index: {}]
  %s1 = inlined_call_operand.hbm [shape: bf16[128,512], index: 1, kind: input, shape index: {}]
  %s2 = inlined_call_operand.hbm [shape: bf16[128,512], index: 2, kind: input, shape index: {}]
  %s3 = inlined_call_operand.hbm [shape: bf16[512,1024], index: 3, kind: input, shape index: {}]
  %s4 = inlined_call_operand.vmem [shape: bf16[256,16], index: 4, kind: input, shape index: {}]
  %s5 = inlined_call_operand.vmem [shape: f32[1,512], index: 5, kind: input, shape index: {}]
  %s6 = inlined_call_operand.vmem [shape: f32[1,256], index: 6, kind: input, shape index: {}]
  %s7 = inlined_call_operand.hbm [shape: f32[2,4,16,16], index: 7, kind: output, shape index: {}]
  %s8 = sld [smem:[#allocation0]]
  $region73: #{tpu_custom_call.1} parent=0
    _
  %s10 = ssub.s32 1, %s8
  %s11 = scalar_select 0, %s10, %s8
  $region1: #{tpu_custom_call.1} parent=0
    #allocation2 [shape = 'u8[131072]{0}', space=vmem, size = 0x20000, scoped, tag = 'input window, operand 1, single buffered']
    #allocation3 [shape = 's32[2]{0}', space=sflag, size = 0x8, scoped, tag = 'scoped memory for tpu_custom_call.1']
    #allocation4 [shape = 's32[2]{0}', space=sflag, size = 0x8, scoped, tag = 'scoped memory for tpu_custom_call.1']
    #allocation5 [shape = 'u8[131072]{0}', space=vmem, size = 0x20000, scoped, tag = 'input window, operand 2, single buffered']
    #allocation6 [shape = 's32[1]{0}', space=sflag, size = 0x4, scoped, tag = 'scoped memory for tpu_custom_call.1']
    #allocation7 [shape = 'u8[1048576]{0}', space=vmem, size = 0x100000, scoped, tag = 'input window, operand 3, single buffered']
    #allocation8 [shape = 'u8[65536]{0}', space=vmem, size = 0x10000, scoped, tag = 'output window, operand 0']
    %12 = vsyncpa [#allocation3], 0
    %13 = vsyncpa [#allocation6], 0
    %14 = vsyncpa [#allocation4], 0
    %s15 = scalar_lea.sflag [#allocation4], 1
    %16 = vsyncpa %s15, 0
    loop: start=0, step=1, limit=4
    $region2: #{tpu_custom_call.1} parent=1 // loop_pre_header
      _
    $region3: #{tpu_custom_call.1} parent=1 // loop_header
      %s18 = sphi 0, %s22
      %p19 = scmp.ge.s32.totalorder %s18, 4
      %s25 = sphi 0, %s37
      %s26 = sphi 0, %s33
      %s27 = sphi 0, %s25
      %s28 = sphi 0, %s26
      %s29 = sphi 0, %s27
      %s30 = sphi 0, %s28
      %s42 = sphi 0, %s44
      %s45 = sphi 0, %s42
      %s46 = sphi 0, %s45
      %s62 = sphi 0, %s46
      %s66 = sphi 0, %s66
      %s68 = sphi 0, %s66
      %s69 = sphi 0, %s68
      %s83 = sphi 0, %s69
      %s87 = sphi 0, %s87
      %s89 = sphi 0, %s87
      %s90 = sphi 0, %s89
      %s104 = sphi 0, %s90
      %s108 = sphi 0, %s108
      %s110 = sphi 0, %s108
      %s111 = sphi 0, %s110
      %s125 = sphi 0, %s111
      %s129 = sphi 0, %s129
      %s131 = sphi 0, %s129
      %s132 = sphi 0, %s131
      %s146 = sphi 0, %s132
      %s150 = sphi 0, %s150
      %s152 = sphi 0, %s150
      %s153 = sphi 0, %s152
      %s167 = sphi 0, %s153
      %s171 = sphi 0, %s171
      %s173 = sphi 0, %s171
      %s174 = sphi 0, %s173
      %s188 = sphi 0, %s174
      %s196 = sphi 0, %s198
      %s199 = sphi 0, %s196
      %s200 = sphi 0, %s199
      %s216 = sphi 0, %s200
    $region4: #{tpu_custom_call.1} parent=1 // loop_header_branch
      %21 = sbr.rel (%p19) target = $region8
    $region5: #{tpu_custom_call.1} parent=1 // loop_body
      %s23 = ssub.s32 %s18, 1
      %s24 = ssub.s32 %s18, 2
      %s31 = sadd.s32 1, %s26
      %p32 = scmp.ge.s32.totalorder %s31, 1
      %s33 = scalar_select %p32, 0, %s31
      %s34 = sadd.s32 1, %s25
      %s35 = scalar_select %p32, %s34, %s25
      %p36 = scmp.ge.s32.totalorder %s35, 2
      %s37 = scalar_select %p36, 0, %s35
      %s38 = ssub.s32 %s25, %s37
      %s39 = ssub.s32 %s26, %s33
      %s40 = sor.u32 %s38, %s39
      %p41 = scmp.eq.s32.totalorder %s40, 0
      %s43 = sadd.s32 %s42, 1
      %s44 = scalar_select %p41, %s42, %s43
      %p47 = pneg %p41
      %p48 = scmp.eq.s32.totalorder %s18, 1
      %p49 = por %p47, %p48
      %p50 = scmp.ne.s32.totalorder %s42, %s45
      %p51 = scmp.eq.s32.totalorder %s18, 0
      %p52 = por %p50, %p51
      %p53 = scmp.ne.s32.totalorder %s42, %s45
      %p54 = scmp.eq.s32.totalorder %s23, 1
      %p55 = por %p53, %p54
      %p56 = scmp.ne.s32.totalorder %s45, %s46
      %p57 = scmp.eq.s32.totalorder %s23, 0
      %p58 = por %p56, %p57
      %p59 = scmp.ne.s32.totalorder %s45, %s46
      %p60 = scmp.eq.s32.totalorder %s24, 1
      %p61 = por %p59, %p60
      %p63 = scmp.ne.s32.totalorder %s46, %s62
      %p64 = scmp.eq.s32.totalorder %s24, 0
      %p65 = por %p63, %p64
      %s67 = sadd.s32 %s66, 1
      %p70 = scmp.eq.s32.totalorder %s18, 1
      %p71 = scmp.ne.s32.totalorder %s66, %s68
      %p72 = scmp.eq.s32.totalorder %s18, 0
      %p73 = por %p71, %p72
      %p74 = scmp.ne.s32.totalorder %s66, %s68
      %p75 = scmp.eq.s32.totalorder %s23, 1
      %p76 = por %p74, %p75
      %p77 = scmp.ne.s32.totalorder %s68, %s69
      %p78 = scmp.eq.s32.totalorder %s23, 0
      %p79 = por %p77, %p78
      %p80 = scmp.ne.s32.totalorder %s68, %s69
      %p81 = scmp.eq.s32.totalorder %s24, 1
      %p82 = por %p80, %p81
      %p84 = scmp.ne.s32.totalorder %s69, %s83
      %p85 = scmp.eq.s32.totalorder %s24, 0
      %p86 = por %p84, %p85
      %s88 = sadd.s32 %s87, 1
      %p91 = scmp.eq.s32.totalorder %s18, 1
      %p92 = scmp.ne.s32.totalorder %s87, %s89
      %p93 = scmp.eq.s32.totalorder %s18, 0
      %p94 = por %p92, %p93
      %p95 = scmp.ne.s32.totalorder %s87, %s89
      %p96 = scmp.eq.s32.totalorder %s23, 1
      %p97 = por %p95, %p96
      %p98 = scmp.ne.s32.totalorder %s89, %s90
      %p99 = scmp.eq.s32.totalorder %s23, 0
      %p100 = por %p98, %p99
      %p101 = scmp.ne.s32.totalorder %s89, %s90
      %p102 = scmp.eq.s32.totalorder %s24, 1
      %p103 = por %p101, %p102
      %p105 = scmp.ne.s32.totalorder %s90, %s104
      %p106 = scmp.eq.s32.totalorder %s24, 0
      %p107 = por %p105, %p106
      %s109 = sadd.s32 %s108, 1
      %p112 = scmp.eq.s32.totalorder %s18, 1
      %p113 = scmp.ne.s32.totalorder %s108, %s110
      %p114 = scmp.eq.s32.totalorder %s18, 0
      %p115 = por %p113, %p114
      %p116 = scmp.ne.s32.totalorder %s108, %s110
      %p117 = scmp.eq.s32.totalorder %s23, 1
      %p118 = por %p116, %p117
      %p119 = scmp.ne.s32.totalorder %s110, %s111
      %p120 = scmp.eq.s32.totalorder %s23, 0
      %p121 = por %p119, %p120
      %p122 = scmp.ne.s32.totalorder %s110, %s111
      %p123 = scmp.eq.s32.totalorder %s24, 1
      %p124 = por %p122, %p123
      %p126 = scmp.ne.s32.totalorder %s111, %s125
      %p127 = scmp.eq.s32.totalorder %s24, 0
      %p128 = por %p126, %p127
      %s130 = sadd.s32 %s129, 1
      %p133 = scmp.eq.s32.totalorder %s18, 1
      %p134 = scmp.ne.s32.totalorder %s129, %s131
      %p135 = scmp.eq.s32.totalorder %s18, 0
      %p136 = por %p134, %p135
      %p137 = scmp.ne.s32.totalorder %s129, %s131
      %p138 = scmp.eq.s32.totalorder %s23, 1
      %p139 = por %p137, %p138
      %p140 = scmp.ne.s32.totalorder %s131, %s132
      %p141 = scmp.eq.s32.totalorder %s23, 0
      %p142 = por %p140, %p141
      %p143 = scmp.ne.s32.totalorder %s131, %s132
      %p144 = scmp.eq.s32.totalorder %s24, 1
      %p145 = por %p143, %p144
      %p147 = scmp.ne.s32.totalorder %s132, %s146
      %p148 = scmp.eq.s32.totalorder %s24, 0
      %p149 = por %p147, %p148
      %s151 = sadd.s32 %s150, 1
      %p154 = scmp.eq.s32.totalorder %s18, 1
      %p155 = scmp.ne.s32.totalorder %s150, %s152
      %p156 = scmp.eq.s32.totalorder %s18, 0
      %p157 = por %p155, %p156
      %p158 = scmp.ne.s32.totalorder %s150, %s152
      %p159 = scmp.eq.s32.totalorder %s23, 1
      %p160 = por %p158, %p159
      %p161 = scmp.ne.s32.totalorder %s152, %s153
      %p162 = scmp.eq.s32.totalorder %s23, 0
      %p163 = por %p161, %p162
      %p164 = scmp.ne.s32.totalorder %s152, %s153
      %p165 = scmp.eq.s32.totalorder %s24, 1
      %p166 = por %p164, %p165
      %p168 = scmp.ne.s32.totalorder %s153, %s167
      %p169 = scmp.eq.s32.totalorder %s24, 0
      %p170 = por %p168, %p169
      %s172 = sadd.s32 %s171, 1
      %p175 = scmp.eq.s32.totalorder %s18, 1
      %p176 = scmp.ne.s32.totalorder %s171, %s173
      %p177 = scmp.eq.s32.totalorder %s18, 0
      %p178 = por %p176, %p177
      %p179 = scmp.ne.s32.totalorder %s171, %s173
      %p180 = scmp.eq.s32.totalorder %s23, 1
      %p181 = por %p179, %p180
      %p182 = scmp.ne.s32.totalorder %s173, %s174
      %p183 = scmp.eq.s32.totalorder %s23, 0
      %p184 = por %p182, %p183
      %p185 = scmp.ne.s32.totalorder %s173, %s174
      %p186 = scmp.eq.s32.totalorder %s24, 1
      %p187 = por %p185, %p186
      %p189 = scmp.ne.s32.totalorder %s174, %s188
      %p190 = scmp.eq.s32.totalorder %s24, 0
      %p191 = por %p189, %p190
      %s192 = ssub.s32 %s25, %s37
      %s193 = ssub.s32 %s26, %s33
      %s194 = sor.u32 %s192, %s193
      %p195 = scmp.eq.s32.totalorder %s194, 0
      %s197 = sadd.s32 %s196, 1
      %s198 = scalar_select %p195, %s196, %s197
      %p201 = pneg %p195
      %p202 = scmp.eq.s32.totalorder %s18, 1
      %p203 = por %p201, %p202
      %p204 = scmp.ne.s32.totalorder %s196, %s199
      %p205 = scmp.eq.s32.totalorder %s18, 0
      %p206 = por %p204, %p205
      %p207 = scmp.ne.s32.totalorder %s196, %s199
      %p208 = scmp.eq.s32.totalorder %s23, 1
      %p209 = por %p207, %p208
      %p210 = scmp.ne.s32.totalorder %s199, %s200
      %p211 = scmp.eq.s32.totalorder %s23, 0
      %p212 = por %p210, %p211
      %p213 = scmp.ne.s32.totalorder %s199, %s200
      %p214 = scmp.eq.s32.totalorder %s24, 1
      %p215 = por %p213, %p214
      %p217 = scmp.ne.s32.totalorder %s200, %s216
      %p218 = scmp.eq.s32.totalorder %s24, 0
      %p219 = por %p217, %p218
      %p220 = scmp.le.s32.totalorder 1, %s18
      %p221 = scmp.lt.s32.totalorder %s18, 3
      %p222 = pnand %p220, %p221
      %p223 = pneg %p222
      // Predicated region
      $region9: #{tpu_custom_call.1} parent=5 // pred_check
        _
      $region10: #{tpu_custom_call.1} parent=5 // pred_check_branch
        %225 = sbr.rel (%p222) target = $region12
      $region11: #{tpu_custom_call.1} parent=5 // pred_region
        %s226 = ssub.s32 %s18, 1
        // Predicated region
        $region13: #{tpu_custom_call.1} parent=11 // pred_check
          %p227 = pneg %p79
        $region14: #{tpu_custom_call.1} parent=11 // pred_check_branch
          %229 = sbr.rel (%p227) target = $region16
        $region15: #{tpu_custom_call.1} parent=11 // pred_region
          %s231 = ssub.s32 4096, 4096
          %232 = vsyncadd [#allocation3], %s231
          %s233 = sshll.u32 [#allocation2], 4
          %s234 = int_to_ptr.vmem [resolvable:$true] %s233
          %239 = dma.hbm_to_vmem [thread:$0]  %s1, 4096, %s234, [#allocation3], 256, 256, 16
        $region16: #{tpu_custom_call.1} parent=11 // pred_fallthru
          _
        // Predicated region
        $region17: #{tpu_custom_call.1} parent=11 // pred_check
          %p240 = pneg %p100
        $region18: #{tpu_custom_call.1} parent=11 // pred_check_branch
          %242 = sbr.rel (%p240) target = $region20
        $region19: #{tpu_custom_call.1} parent=11 // pred_region
          %s244 = ssub.s32 4096, 4096
          %245 = vsyncadd [#allocation6], %s244
          %s246 = sshll.u32 [#allocation5], 4
          %s247 = int_to_ptr.vmem [resolvable:$true] %s246
          %252 = dma.hbm_to_vmem [thread:$0]  %s2, 4096, %s247, [#allocation6], 256, 256, 16
        $region20: #{tpu_custom_call.1} parent=11 // pred_fallthru
          _
        // Predicated region
        $region21: #{tpu_custom_call.1} parent=11 // pred_check
          %p253 = pneg %p121
        $region22: #{tpu_custom_call.1} parent=11 // pred_check_branch
          %255 = sbr.rel (%p253) target = $region24
        $region23: #{tpu_custom_call.1} parent=11 // pred_region
          %s257 = ssub.s32 32768, 32768
          %258 = vsyncadd [#allocation6], %s257
          %s259 = sshll.u32 [#allocation7], 4
          %s260 = int_to_ptr.vmem [resolvable:$true] %s259
          %265 = dma.hbm_to_vmem [thread:$0]  %s3, 32768, %s260, [#allocation6], 512, 512, 32
        $region24: #{tpu_custom_call.1} parent=11 // pred_fallthru
          _
        // Predicated region
        $region25: #{tpu_custom_call.1} parent=11 // pred_check
          %p266 = pneg %p142
        $region26: #{tpu_custom_call.1} parent=11 // pred_check_branch
          %268 = sbr.rel (%p266) target = $region28
        $region27: #{tpu_custom_call.1} parent=11 // pred_region
          _
        $region28: #{tpu_custom_call.1} parent=11 // pred_fallthru
          _
        // Predicated region
        $region29: #{tpu_custom_call.1} parent=11 // pred_check
          %p269 = pneg %p163
        $region30: #{tpu_custom_call.1} parent=11 // pred_check_branch
          %271 = sbr.rel (%p269) target = $region32
        $region31: #{tpu_custom_call.1} parent=11 // pred_region
          _
        $region32: #{tpu_custom_call.1} parent=11 // pred_fallthru
          _
        // Predicated region
        $region33: #{tpu_custom_call.1} parent=11 // pred_check
          %p272 = pneg %p184
        $region34: #{tpu_custom_call.1} parent=11 // pred_check_branch
          %274 = sbr.rel (%p272) target = $region36
        $region35: #{tpu_custom_call.1} parent=11 // pred_region
          _
        $region36: #{tpu_custom_call.1} parent=11 // pred_fallthru
          _
      $region12: #{tpu_custom_call.1} parent=5 // pred_fallthru
        _
      %p275 = scmp.lt.s32.totalorder %s18, 2
      // Predicated region
      $region37: #{tpu_custom_call.1} parent=5 // pred_check
        %p276 = pneg %p275
      $region38: #{tpu_custom_call.1} parent=5 // pred_check_branch
        %278 = sbr.rel (%p276) target = $region40
      $region39: #{tpu_custom_call.1} parent=5 // pred_region
        // Predicated region
        $region41: #{tpu_custom_call.1} parent=39 // pred_check
          %p279 = pneg %p52
        $region42: #{tpu_custom_call.1} parent=39 // pred_check_branch
          %281 = sbr.rel (%p279) target = $region44
        $region43: #{tpu_custom_call.1} parent=39 // pred_region
          %p282 = scmp.lt.s32.totalorder %s25, 1
          %s283 = scalar_select %p282, %s25, 1
          %p284 = scmp.lt.s32.totalorder %s26, 0
          %s285 = scalar_select %p284, %s26, 0
          %s286 = smul.addr %s285, 3
          %s287 = smul.addr %s283, 3
          %s288 = sadd.s32 %s286, %s287
          %s289 = smul.addr %s288, 4
          %s290 = scalar_lea.vmem %s0, %s289
        $region44: #{tpu_custom_call.1} parent=39 // pred_fallthru
          _
      $region40: #{tpu_custom_call.1} parent=5 // pred_fallthru
        _
      %p291 = scmp.le.s32.totalorder 1, %s18
      %p292 = scmp.lt.s32.totalorder %s18, 3
      %p293 = pnand %p291, %p292
      %p294 = pneg %p293
      // Predicated region
      $region45: #{tpu_custom_call.1} parent=5 // pred_check
        _
      $region46: #{tpu_custom_call.1} parent=5 // pred_check_branch
        %296 = sbr.rel (%p293) target = $region48
      $region47: #{tpu_custom_call.1} parent=5 // pred_region
        %s297 = ssub.s32 %s18, 1
        // Predicated region
        $region49: #{tpu_custom_call.1} parent=47 // pred_check
          %p298 = pneg %p79
        $region50: #{tpu_custom_call.1} parent=47 // pred_check_branch
          %300 = sbr.rel (%p298) target = $region52
        $region51: #{tpu_custom_call.1} parent=47 // pred_region
          %301 = dma.done [#allocation3], 4096
        $region52: #{tpu_custom_call.1} parent=47 // pred_fallthru
          _
        // Predicated region
        $region53: #{tpu_custom_call.1} parent=47 // pred_check
          %p302 = pneg %p100
        $region54: #{tpu_custom_call.1} parent=47 // pred_check_branch
          %304 = sbr.rel (%p302) target = $region56
        $region55: #{tpu_custom_call.1} parent=47 // pred_region
          %305 = dma.done [#allocation6], 4096
        $region56: #{tpu_custom_call.1} parent=47 // pred_fallthru
          _
        // Predicated region
        $region57: #{tpu_custom_call.1} parent=47 // pred_check
          %p306 = pneg %p121
        $region58: #{tpu_custom_call.1} parent=47 // pred_check_branch
          %308 = sbr.rel (%p306) target = $region60
        $region59: #{tpu_custom_call.1} parent=47 // pred_region
          %309 = dma.done [#allocation6], 32768
        $region60: #{tpu_custom_call.1} parent=47 // pred_fallthru
          _
        %p310 = scmp.lt.s32.totalorder %s27, 1
        %s311 = scalar_select %p310, %s27, 1
        %p312 = scmp.lt.s32.totalorder %s28, 0
        %s313 = scalar_select %p312, %s28, 0
        %s314 = smul.addr %s313, 3
        %s315 = smul.addr %s311, 3
        %s316 = sadd.s32 %s314, %s315
        %s317 = smul.addr %s316, 4
        %s318 = scalar_lea.vmem %s0, %s317
        %p319 = pneg %p58
        %p320 = pneg %p55
        %p321 = pneg %p79
        %p322 = pneg %p76
        %p323 = pneg %p100
        %p324 = pneg %p97
        %p325 = pneg %p121
        %p326 = pneg %p118
        %p327 = pneg %p142
        %p328 = pneg %p139
        %p329 = pneg %p163
        %p330 = pneg %p160
        %p331 = pneg %p184
        %p332 = pneg %p181
        %p333 = pneg %p212
        %p334 = pneg %p209
        %s335 = sand.u32 %s199, 1
        %s336 = scalar_lea.sflag [#allocation4], %s335
        %s337 = sand.u32 %s199, 1
        %s338 = smul.addr %s337, 64
        %s339 = scalar_lea.vmem [#allocation8], %s338
        %p340 = scmp.lt.s32.totalorder %s27, 1
        %s341 = scalar_select %p340, %s27, 1
        %p342 = scmp.lt.s32.totalorder %s28, 0
        %s343 = scalar_select %p342, %s28, 0
        %s344 = smul.addr %s343, 3
        %s345 = smul.addr %s341, 3
        %s346 = sadd.s32 %s344, %s345
        %s347 = smul.addr %s346, 4
        %s348 = scalar_lea.vmem %s0, %s347
        %s349 = smul.u32 2, %s28
        %v351 = vld [vmem:[%s348] sm:$0xf]
        %v352 = vld [vmem:[%s348 + $0x4] sm:$0xf]
        %v353 = vld [vmem:[%s348 + $0x8] sm:$0x1]
        %v354 = vld [vmem:[%s5] sm:$0xf]
        %v355 = vld [vmem:[%s6] sm:$0x3]
        %v356 = vld [vmem:[#allocation2] sm:$0xff]
        %v357 = vld [vmem:[#allocation2 + $0x8] sm:$0xff]
        %v358 = vld [vmem:[#allocation2 + $0x10] sm:$0xff]
        %v359 = vld [vmem:[#allocation2 + $0x18] sm:$0xff]
        %v360 = vld [vmem:[#allocation2 + $0x20] sm:$0xff]
        %v361 = vld [vmem:[#allocation2 + $0x28] sm:$0xff]
        %v362 = vld [vmem:[#allocation2 + $0x30] sm:$0xff]
        %v363 = vld [vmem:[#allocation2 + $0x38] sm:$0xff]
        %v364 = vld [vmem:[#allocation2 + $0x40] sm:$0xff]
        %v365 = vld [vmem:[#allocation2 + $0x48] sm:$0xff]
        %v366 = vld [vmem:[#allocation2 + $0x50] sm:$0xff]
        %v367 = vld [vmem:[#allocation2 + $0x58] sm:$0xff]
        %v368 = vld [vmem:[#allocation2 + $0x60] sm:$0xff]
        %v369 = vld [vmem:[#allocation2 + $0x68] sm:$0xff]
        %v370 = vld [vmem:[#allocation2 + $0x70] sm:$0xff]
        %v371 = vld [vmem:[#allocation2 + $0x78] sm:$0xff]
        %v372 = vld [vmem:[#allocation2 + $0x80] sm:$0xff]
        %v373 = vld [vmem:[#allocation2 + $0x88] sm:$0xff]
        %v374 = vld [vmem:[#allocation2 + $0x90] sm:$0xff]
        %v375 = vld [vmem:[#allocation2 + $0x98] sm:$0xff]
        %v376 = vld [vmem:[#allocation2 + $0xa0] sm:$0xff]
        %v377 = vld [vmem:[#allocation2 + $0xa8] sm:$0xff]
        %v378 = vld [vmem:[#allocation2 + $0xb0] sm:$0xff]
        %v379 = vld [vmem:[#allocation2 + $0xb8] sm:$0xff]
        %v380 = vld [vmem:[#allocation2 + $0xc0] sm:$0xff]
        %v381 = vld [vmem:[#allocation2 + $0xc8] sm:$0xff]
        %v382 = vld [vmem:[#allocation2 + $0xd0] sm:$0xff]
        %v383 = vld [vmem:[#allocation2 + $0xd8] sm:$0xff]
        %v384 = vld [vmem:[#allocation2 + $0xe0] sm:$0xff]
        %v385 = vld [vmem:[#allocation2 + $0xe8] sm:$0xff]
        %v386 = vld [vmem:[#allocation2 + $0xf0] sm:$0xff]
        %v387 = vld [vmem:[#allocation2 + $0xf8] sm:$0xff]
        %v389 = vlaneseq
        %v390 = vshrl.u32 %v389, 7
        %v391 = vsub.s32 0, %v390
        %v392 = vrot.slane %v354, %v391
        %v393 = vlaneseq
        %v394 = vshrl.u32 %v393, 7
        %v395 = vsub.s32 1, %v394
        %v396 = vrot.slane %v354, %v395
        %v397 = vlaneseq
        %v398 = vshrl.u32 %v397, 7
        %v399 = vsub.s32 2, %v398
        %v400 = vrot.slane %v354, %v399
        %v401 = vlaneseq
        %v402 = vshrl.u32 %v401, 7
        %v403 = vsub.s32 3, %v402
        %v404 = vrot.slane %v354, %v403
        %v412 = vunpack.c.l.b16 %v351
        %v413 = vunpack.c.l.b16 %v352
        %v414 = vunpack.c.l.b16 %v353
        %v415 = vpack.c.b16 %v413, %v412
        %v416 = vpack.c.b16 %v414, %v414
        %v451 = vunpack.c.l.b16 %v356
        %v452 = vunpack.c.h.b16 %v356
        %v453 = vunpack.c.l.b16 %v357
        %v454 = vunpack.c.h.b16 %v357
        %v455 = vunpack.c.l.b16 %v358
        %v456 = vunpack.c.h.b16 %v358
        %v457 = vunpack.c.l.b16 %v359
        %v458 = vunpack.c.h.b16 %v359
        %v459 = vunpack.c.l.b16 %v360
        %v460 = vunpack.c.h.b16 %v360
        %v461 = vunpack.c.l.b16 %v361
        %v462 = vunpack.c.h.b16 %v361
        %v463 = vunpack.c.l.b16 %v362
        %v464 = vunpack.c.h.b16 %v362
        %v465 = vunpack.c.l.b16 %v363
        %v466 = vunpack.c.h.b16 %v363
        %v467 = vunpack.c.l.b16 %v364
        %v468 = vunpack.c.h.b16 %v364
        %v469 = vunpack.c.l.b16 %v365
        %v470 = vunpack.c.h.b16 %v365
        %v471 = vunpack.c.l.b16 %v366
        %v472 = vunpack.c.h.b16 %v366
        %v473 = vunpack.c.l.b16 %v367
        %v474 = vunpack.c.h.b16 %v367
        %v475 = vunpack.c.l.b16 %v368
        %v476 = vunpack.c.h.b16 %v368
        %v477 = vunpack.c.l.b16 %v369
        %v478 = vunpack.c.h.b16 %v369
        %v479 = vunpack.c.l.b16 %v370
        %v480 = vunpack.c.h.b16 %v370
        %v481 = vunpack.c.l.b16 %v371
        %v482 = vunpack.c.h.b16 %v371
        %v483 = vunpack.c.l.b16 %v372
        %v484 = vunpack.c.h.b16 %v372
        %v485 = vunpack.c.l.b16 %v373
        %v486 = vunpack.c.h.b16 %v373
        %v487 = vunpack.c.l.b16 %v374
        %v488 = vunpack.c.h.b16 %v374
        %v489 = vunpack.c.l.b16 %v375
        %v490 = vunpack.c.h.b16 %v375
        %v491 = vunpack.c.l.b16 %v376
        %v492 = vunpack.c.h.b16 %v376
        %v493 = vunpack.c.l.b16 %v377
        %v494 = vunpack.c.h.b16 %v377
        %v495 = vunpack.c.l.b16 %v378
        %v496 = vunpack.c.h.b16 %v378
        %v497 = vunpack.c.l.b16 %v379
        %v498 = vunpack.c.h.b16 %v379
        %v499 = vunpack.c.l.b16 %v380
        %v500 = vunpack.c.h.b16 %v380
        %v501 = vunpack.c.l.b16 %v381
        %v502 = vunpack.c.h.b16 %v381
        %v503 = vunpack.c.l.b16 %v382
        %v504 = vunpack.c.h.b16 %v382
        %v505 = vunpack.c.l.b16 %v383
        %v506 = vunpack.c.h.b16 %v383
        %v507 = vunpack.c.l.b16 %v384
        %v508 = vunpack.c.h.b16 %v384
        %v509 = vunpack.c.l.b16 %v385
        %v510 = vunpack.c.h.b16 %v385
        %v511 = vunpack.c.l.b16 %v386
        %v512 = vunpack.c.h.b16 %v386
        %v513 = vunpack.c.l.b16 %v387
        %v514 = vunpack.c.h.b16 %v387
        %v515 = vpack.c.b16 %v455, %v451
        %v516 = vpack.c.b16 %v456, %v452
        %v517 = vpack.c.b16 %v457, %v453
        %v518 = vpack.c.b16 %v458, %v454
        %v519 = vpack.c.b16 %v463, %v459
        %v520 = vpack.c.b16 %v464, %v460
        %v521 = vpack.c.b16 %v465, %v461
        %v522 = vpack.c.b16 %v466, %v462
        %v523 = vpack.c.b16 %v471, %v467
        %v524 = vpack.c.b16 %v472, %v468
        %v525 = vpack.c.b16 %v473, %v469
        %v526 = vpack.c.b16 %v474, %v470
        %v527 = vpack.c.b16 %v479, %v475
        %v528 = vpack.c.b16 %v480, %v476
        %v529 = vpack.c.b16 %v481, %v477
        %v530 = vpack.c.b16 %v482, %v478
        %v531 = vpack.c.b16 %v487, %v483
        %v532 = vpack.c.b16 %v488, %v484
        %v533 = vpack.c.b16 %v489, %v485
        %v534 = vpack.c.b16 %v490, %v486
        %v535 = vpack.c.b16 %v495, %v491
        %v536 = vpack.c.b16 %v496, %v492
        %v537 = vpack.c.b16 %v497, %v493
        %v538 = vpack.c.b16 %v498, %v494
        %v539 = vpack.c.b16 %v503, %v499
        %v540 = vpack.c.b16 %v504, %v500
        %v541 = vpack.c.b16 %v505, %v501
        %v542 = vpack.c.b16 %v506, %v502
        %v543 = vpack.c.b16 %v511, %v507
        %v544 = vpack.c.b16 %v512, %v508
        %v545 = vpack.c.b16 %v513, %v509
        %v546 = vpack.c.b16 %v514, %v510
        %579 = vmatprep.subr.bf16.mxu0 %v544
        %580 = vmatpush1.bf16.msra.mxu0 %v543
        %581 = vmatprep.subr.bf16.mxu0 %v540
        %582 = vmatpush1.bf16.msra.mxu0 %v539
        %583 = vmatprep.subr.bf16.mxu0 %v536
        %584 = vmatpush1.bf16.msra.mxu0 %v535
        %585 = vmatprep.subr.bf16.mxu0 %v532
        %586 = vmatpush1.bf16.msra.mxu0 %v531
        %587 = vmatprep.subr.bf16.mxu0 %v528
        %588 = vmatpush1.bf16.msra.mxu0 %v527
        %589 = vmatprep.subr.bf16.mxu0 %v524
        %590 = vmatpush1.bf16.msra.mxu0 %v523
        %591 = vmatprep.subr.bf16.mxu0 %v520
        %592 = vmatpush1.bf16.msra.mxu0 %v519
        %593 = vmatprep.subr.bf16.mxu0 %v516
        %594 = vmatpush1.bf16.msra.mxu0 %v515
        %595 = vmatprep.subr.bf16.mxu0 0
        %596 = vmatpush2.bf16.msra.mxu0 0
        %597 = vmatprep.subr.bf16.mxu0 0
        %598 = vmatpush2.bf16.msra.mxu0 0
        %599 = vmatprep.subr.bf16.mxu0 0
        %600 = vmatpush2.bf16.msra.mxu0 0
        %601 = vmatprep.subr.bf16.mxu0 0
        %602 = vmatpush2.bf16.msra.mxu0 0
        %603 = vmatprep.subr.bf16.mxu0 0
        %604 = vmatpush2.bf16.msra.mxu0 0
        %605 = vmatprep.subr.bf16.mxu0 0
        %606 = vmatpush2.bf16.msra.mxu0 0
        %607 = vmatprep.subr.bf16.mxu0 0
        %608 = vmatpush2.bf16.msra.mxu0 0
        %609 = vmatprep.subr.bf16.mxu0 0
        %610 = vmatpush2.bf16.msra.mxu0 0
        %611 = vmatprep.mubr.bf16.mxu0 0
        %612 = vmatmul.mubr.bf16.gmra.mxu0 %v415
        %v613 = vpop.f32.mrf.mxu0
        %v614 = vadd.f32 %v392, %v613
        %v615 = vpop.f32.mrf.mxu0
        %v616 = vadd.f32 %v396, %v615
        %v617 = vpop.f32.mrf.mxu0
        %v618 = vadd.f32 %v392, %v617
        %v619 = vpop.f32.mrf.mxu0
        %v620 = vadd.f32 %v396, %v619
        %621 = vmatprep.mubr.bf16.mxu0 0
        %622 = vmatmul.mubr.bf16.gmra.mxu0 %v416
        %v623 = vpop.f32.mrf.mxu0
        %v624 = vadd.f32 %v392, %v623
        %v625 = vpop.f32.mrf.mxu0
        %v626 = vadd.f32 %v396, %v625
        %v627 = vpop.f32.mrf.mxu0
        %v628 = vpop.f32.mrf.mxu0
        %629 = vdwg.mxu0
        %630 = vmatprep.subr.bf16.mxu0 %v546
        %631 = vmatpush1.bf16.msra.mxu0 %v545
        %632 = vmatprep.subr.bf16.mxu0 %v542
        %633 = vmatpush1.bf16.msra.mxu0 %v541
        %634 = vmatprep.subr.bf16.mxu0 %v538
        %635 = vmatpush1.bf16.msra.mxu0 %v537
        %636 = vmatprep.subr.bf16.mxu0 %v534
        %637 = vmatpush1.bf16.msra.mxu0 %v533
        %638 = vmatprep.subr.bf16.mxu0 %v530
        %639 = vmatpush1.bf16.msra.mxu0 %v529
        %640 = vmatprep.subr.bf16.mxu0 %v526
        %641 = vmatpush1.bf16.msra.mxu0 %v525
        %642 = vmatprep.subr.bf16.mxu0 %v522
        %643 = vmatpush1.bf16.msra.mxu0 %v521
        %644 = vmatprep.subr.bf16.mxu0 %v518
        %645 = vmatpush1.bf16.msra.mxu0 %v517
        %646 = vmatprep.subr.bf16.mxu0 0
        %647 = vmatpush2.bf16.msra.mxu0 0
        %648 = vmatprep.subr.bf16.mxu0 0
        %649 = vmatpush2.bf16.msra.mxu0 0
        %650 = vmatprep.subr.bf16.mxu0 0
        %651 = vmatpush2.bf16.msra.mxu0 0
        %652 = vmatprep.subr.bf16.mxu0 0
        %653 = vmatpush2.bf16.msra.mxu0 0
        %654 = vmatprep.subr.bf16.mxu0 0
        %655 = vmatpush2.bf16.msra.mxu0 0
        %656 = vmatprep.subr.bf16.mxu0 0
        %657 = vmatpush2.bf16.msra.mxu0 0
        %658 = vmatprep.subr.bf16.mxu0 0
        %659 = vmatpush2.bf16.msra.mxu0 0
        %660 = vmatprep.subr.bf16.mxu0 0
        %661 = vmatpush2.bf16.msra.mxu0 0
        %662 = vmatprep.mubr.bf16.mxu0 0
        %663 = vmatmul.mubr.bf16.gmra.mxu0 %v415
        %v664 = vpop.f32.mrf.mxu0
        %v665 = vadd.f32 %v400, %v664
        %v666 = vpop.f32.mrf.mxu0
        %v667 = vadd.f32 %v404, %v666
        %v668 = vpop.f32.mrf.mxu0
        %v669 = vadd.f32 %v400, %v668
        %v670 = vpop.f32.mrf.mxu0
        %v671 = vadd.f32 %v404, %v670
        %672 = vmatprep.mubr.bf16.mxu0 0
        %673 = vmatmul.mubr.bf16.gmra.mxu0 %v416
        %v674 = vpop.f32.mrf.mxu0
        %v675 = vadd.f32 %v400, %v674
        %v676 = vpop.f32.mrf.mxu0
        %v677 = vadd.f32 %v404, %v676
        %v678 = vpop.f32.mrf.mxu0
        %v679 = vpop.f32.mrf.mxu0
        %680 = vdwg.mxu0
        %v681 = vmax.f32 %v614, 0.0
        %v682 = vmax.f32 %v616, 0.0
        %v683 = vmax.f32 %v665, 0.0
        %v684 = vmax.f32 %v667, 0.0
        %v685 = vmax.f32 %v618, 0.0
        %v686 = vmax.f32 %v620, 0.0
        %v687 = vmax.f32 %v669, 0.0
        %v688 = vmax.f32 %v671, 0.0
        %v689 = vmax.f32 %v624, 0.0
        %v690 = vmax.f32 %v626, 0.0
        %v691 = vmax.f32 %v675, 0.0
        %v692 = vmax.f32 %v677, 0.0
        %v693 = vld [vmem:[#allocation5] sm:$0xff]
        %v694 = vld [vmem:[#allocation5 + $0x8] sm:$0xff]
        %v695 = vld [vmem:[#allocation5 + $0x10] sm:$0xff]
        %v696 = vld [vmem:[#allocation5 + $0x18] sm:$0xff]
        %v697 = vld [vmem:[#allocation5 + $0x20] sm:$0xff]
        %v698 = vld [vmem:[#allocation5 + $0x28] sm:$0xff]
        %v699 = vld [vmem:[#allocation5 + $0x30] sm:$0xff]
        %v700 = vld [vmem:[#allocation5 + $0x38] sm:$0xff]
        %v701 = vld [vmem:[#allocation5 + $0x40] sm:$0xff]
        %v702 = vld [vmem:[#allocation5 + $0x48] sm:$0xff]
        %v703 = vld [vmem:[#allocation5 + $0x50] sm:$0xff]
        %v704 = vld [vmem:[#allocation5 + $0x58] sm:$0xff]
        %v705 = vld [vmem:[#allocation5 + $0x60] sm:$0xff]
        %v706 = vld [vmem:[#allocation5 + $0x68] sm:$0xff]
        %v707 = vld [vmem:[#allocation5 + $0x70] sm:$0xff]
        %v708 = vld [vmem:[#allocation5 + $0x78] sm:$0xff]
        %v709 = vld [vmem:[#allocation5 + $0x80] sm:$0xff]
        %v710 = vld [vmem:[#allocation5 + $0x88] sm:$0xff]
        %v711 = vld [vmem:[#allocation5 + $0x90] sm:$0xff]
        %v712 = vld [vmem:[#allocation5 + $0x98] sm:$0xff]
        %v713 = vld [vmem:[#allocation5 + $0xa0] sm:$0xff]
        %v714 = vld [vmem:[#allocation5 + $0xa8] sm:$0xff]
        %v715 = vld [vmem:[#allocation5 + $0xb0] sm:$0xff]
        %v716 = vld [vmem:[#allocation5 + $0xb8] sm:$0xff]
        %v717 = vld [vmem:[#allocation5 + $0xc0] sm:$0xff]
        %v718 = vld [vmem:[#allocation5 + $0xc8] sm:$0xff]
        %v719 = vld [vmem:[#allocation5 + $0xd0] sm:$0xff]
        %v720 = vld [vmem:[#allocation5 + $0xd8] sm:$0xff]
        %v721 = vld [vmem:[#allocation5 + $0xe0] sm:$0xff]
        %v722 = vld [vmem:[#allocation5 + $0xe8] sm:$0xff]
        %v723 = vld [vmem:[#allocation5 + $0xf0] sm:$0xff]
        %v724 = vld [vmem:[#allocation5 + $0xf8] sm:$0xff]
        %v757 = vunpack.c.l.b16 %v693
        %v758 = vunpack.c.h.b16 %v693
        %v759 = vunpack.c.l.b16 %v694
        %v760 = vunpack.c.h.b16 %v694
        %v761 = vunpack.c.l.b16 %v695
        %v762 = vunpack.c.h.b16 %v695
        %v763 = vunpack.c.l.b16 %v696
        %v764 = vunpack.c.h.b16 %v696
        %v765 = vunpack.c.l.b16 %v697
        %v766 = vunpack.c.h.b16 %v697
        %v767 = vunpack.c.l.b16 %v698
        %v768 = vunpack.c.h.b16 %v698
        %v769 = vunpack.c.l.b16 %v699
        %v770 = vunpack.c.h.b16 %v699
        %v771 = vunpack.c.l.b16 %v700
        %v772 = vunpack.c.h.b16 %v700
        %v773 = vunpack.c.l.b16 %v701
        %v774 = vunpack.c.h.b16 %v701
        %v775 = vunpack.c.l.b16 %v702
        %v776 = vunpack.c.h.b16 %v702
        %v777 = vunpack.c.l.b16 %v703
        %v778 = vunpack.c.h.b16 %v703
        %v779 = vunpack.c.l.b16 %v704
        %v780 = vunpack.c.h.b16 %v704
        %v781 = vunpack.c.l.b16 %v705
        %v782 = vunpack.c.h.b16 %v705
        %v783 = vunpack.c.l.b16 %v706
        %v784 = vunpack.c.h.b16 %v706
        %v785 = vunpack.c.l.b16 %v707
        %v786 = vunpack.c.h.b16 %v707
        %v787 = vunpack.c.l.b16 %v708
        %v788 = vunpack.c.h.b16 %v708
        %v789 = vunpack.c.l.b16 %v709
        %v790 = vunpack.c.h.b16 %v709
        %v791 = vunpack.c.l.b16 %v710
        %v792 = vunpack.c.h.b16 %v710
        %v793 = vunpack.c.l.b16 %v711
        %v794 = vunpack.c.h.b16 %v711
        %v795 = vunpack.c.l.b16 %v712
        %v796 = vunpack.c.h.b16 %v712
        %v797 = vunpack.c.l.b16 %v713
        %v798 = vunpack.c.h.b16 %v713
        %v799 = vunpack.c.l.b16 %v714
        %v800 = vunpack.c.h.b16 %v714
        %v801 = vunpack.c.l.b16 %v715
        %v802 = vunpack.c.h.b16 %v715
        %v803 = vunpack.c.l.b16 %v716
        %v804 = vunpack.c.h.b16 %v716
        %v805 = vunpack.c.l.b16 %v717
        %v806 = vunpack.c.h.b16 %v717
        %v807 = vunpack.c.l.b16 %v718
        %v808 = vunpack.c.h.b16 %v718
        %v809 = vunpack.c.l.b16 %v719
        %v810 = vunpack.c.h.b16 %v719
        %v811 = vunpack.c.l.b16 %v720
        %v812 = vunpack.c.h.b16 %v720
        %v813 = vunpack.c.l.b16 %v721
        %v814 = vunpack.c.h.b16 %v721
        %v815 = vunpack.c.l.b16 %v722
        %v816 = vunpack.c.h.b16 %v722
        %v817 = vunpack.c.l.b16 %v723
        %v818 = vunpack.c.h.b16 %v723
        %v819 = vunpack.c.l.b16 %v724
        %v820 = vunpack.c.h.b16 %v724
        %v821 = vpack.c.b16 %v761, %v757
        %v822 = vpack.c.b16 %v762, %v758
        %v823 = vpack.c.b16 %v763, %v759
        %v824 = vpack.c.b16 %v764, %v760
        %v825 = vpack.c.b16 %v769, %v765
        %v826 = vpack.c.b16 %v770, %v766
        %v827 = vpack.c.b16 %v771, %v767
        %v828 = vpack.c.b16 %v772, %v768
        %v829 = vpack.c.b16 %v777, %v773
        %v830 = vpack.c.b16 %v778, %v774
        %v831 = vpack.c.b16 %v779, %v775
        %v832 = vpack.c.b16 %v780, %v776
        %v833 = vpack.c.b16 %v785, %v781
        %v834 = vpack.c.b16 %v786, %v782
        %v835 = vpack.c.b16 %v787, %v783
        %v836 = vpack.c.b16 %v788, %v784
        %v837 = vpack.c.b16 %v793, %v789
        %v838 = vpack.c.b16 %v794, %v790
        %v839 = vpack.c.b16 %v795, %v791
        %v840 = vpack.c.b16 %v796, %v792
        %v841 = vpack.c.b16 %v801, %v797
        %v842 = vpack.c.b16 %v802, %v798
        %v843 = vpack.c.b16 %v803, %v799
        %v844 = vpack.c.b16 %v804, %v800
        %v845 = vpack.c.b16 %v809, %v805
        %v846 = vpack.c.b16 %v810, %v806
        %v847 = vpack.c.b16 %v811, %v807
        %v848 = vpack.c.b16 %v812, %v808
        %v849 = vpack.c.b16 %v817, %v813
        %v850 = vpack.c.b16 %v818, %v814
        %v851 = vpack.c.b16 %v819, %v815
        %v852 = vpack.c.b16 %v820, %v816
        %885 = vmatprep.subr.bf16.mxu0 %v850
        %886 = vmatpush1.bf16.msra.mxu0 %v849
        %887 = vmatprep.subr.bf16.mxu0 %v846
        %888 = vmatpush1.bf16.msra.mxu0 %v845
        %889 = vmatprep.subr.bf16.mxu0 %v842
        %890 = vmatpush1.bf16.msra.mxu0 %v841
        %891 = vmatprep.subr.bf16.mxu0 %v838
        %892 = vmatpush1.bf16.msra.mxu0 %v837
        %893 = vmatprep.subr.bf16.mxu0 %v834
        %894 = vmatpush1.bf16.msra.mxu0 %v833
        %895 = vmatprep.subr.bf16.mxu0 %v830
        %896 = vmatpush1.bf16.msra.mxu0 %v829
        %897 = vmatprep.subr.bf16.mxu0 %v826
        %898 = vmatpush1.bf16.msra.mxu0 %v825
        %899 = vmatprep.subr.bf16.mxu0 %v822
        %900 = vmatpush1.bf16.msra.mxu0 %v821
        %901 = vmatprep.subr.bf16.mxu0 0
        %902 = vmatpush2.bf16.msra.mxu0 0
        %903 = vmatprep.subr.bf16.mxu0 0
        %904 = vmatpush2.bf16.msra.mxu0 0
        %905 = vmatprep.subr.bf16.mxu0 0
        %906 = vmatpush2.bf16.msra.mxu0 0
        %907 = vmatprep.subr.bf16.mxu0 0
        %908 = vmatpush2.bf16.msra.mxu0 0
        %909 = vmatprep.subr.bf16.mxu0 0
        %910 = vmatpush2.bf16.msra.mxu0 0
        %911 = vmatprep.subr.bf16.mxu0 0
        %912 = vmatpush2.bf16.msra.mxu0 0
        %913 = vmatprep.subr.bf16.mxu0 0
        %914 = vmatpush2.bf16.msra.mxu0 0
        %915 = vmatprep.subr.bf16.mxu0 0
        %916 = vmatpush2.bf16.msra.mxu0 0
        %917 = vmatprep.mubr.bf16.mxu0 0
        %918 = vmatmul.mubr.bf16.gmra.mxu0 %v415
        %v919 = vpop.f32.mrf.mxu0
        %v920 = vadd.f32 %v392, %v919
        %v921 = vpop.f32.mrf.mxu0
        %v922 = vadd.f32 %v396, %v921
        %v923 = vpop.f32.mrf.mxu0
        %v924 = vadd.f32 %v392, %v923
        %v925 = vpop.f32.mrf.mxu0
        %v926 = vadd.f32 %v396, %v925
        %927 = vmatprep.mubr.bf16.mxu0 0
        %928 = vmatmul.mubr.bf16.gmra.mxu0 %v416
        %v929 = vpop.f32.mrf.mxu0
        %v930 = vadd.f32 %v392, %v929
        %v931 = vpop.f32.mrf.mxu0
        %v932 = vadd.f32 %v396, %v931
        %v933 = vpop.f32.mrf.mxu0
        %v934 = vpop.f32.mrf.mxu0
        %935 = vdwg.mxu0
        %936 = vmatprep.subr.bf16.mxu0 %v852
        %937 = vmatpush1.bf16.msra.mxu0 %v851
        %938 = vmatprep.subr.bf16.mxu0 %v848
        %939 = vmatpush1.bf16.msra.mxu0 %v847
        %940 = vmatprep.subr.bf16.mxu0 %v844
        %941 = vmatpush1.bf16.msra.mxu0 %v843
        %942 = vmatprep.subr.bf16.mxu0 %v840
        %943 = vmatpush1.bf16.msra.mxu0 %v839
        %944 = vmatprep.subr.bf16.mxu0 %v836
        %945 = vmatpush1.bf16.msra.mxu0 %v835
        %946 = vmatprep.subr.bf16.mxu0 %v832
        %947 = vmatpush1.bf16.msra.mxu0 %v831
        %948 = vmatprep.subr.bf16.mxu0 %v828
        %949 = vmatpush1.bf16.msra.mxu0 %v827
        %950 = vmatprep.subr.bf16.mxu0 %v824
        %951 = vmatpush1.bf16.msra.mxu0 %v823
        %952 = vmatprep.subr.bf16.mxu0 0
        %953 = vmatpush2.bf16.msra.mxu0 0
        %954 = vmatprep.subr.bf16.mxu0 0
        %955 = vmatpush2.bf16.msra.mxu0 0
        %956 = vmatprep.subr.bf16.mxu0 0
        %957 = vmatpush2.bf16.msra.mxu0 0
        %958 = vmatprep.subr.bf16.mxu0 0
        %959 = vmatpush2.bf16.msra.mxu0 0
        %960 = vmatprep.subr.bf16.mxu0 0
        %961 = vmatpush2.bf16.msra.mxu0 0
        %962 = vmatprep.subr.bf16.mxu0 0
        %963 = vmatpush2.bf16.msra.mxu0 0
        %964 = vmatprep.subr.bf16.mxu0 0
        %965 = vmatpush2.bf16.msra.mxu0 0
        %966 = vmatprep.subr.bf16.mxu0 0
        %967 = vmatpush2.bf16.msra.mxu0 0
        %968 = vmatprep.mubr.bf16.mxu0 0
        %969 = vmatmul.mubr.bf16.gmra.mxu0 %v415
        %v970 = vpop.f32.mrf.mxu0
        %v971 = vadd.f32 %v400, %v970
        %v972 = vpop.f32.mrf.mxu0
        %v973 = vadd.f32 %v404, %v972
        %v974 = vpop.f32.mrf.mxu0
        %v975 = vadd.f32 %v400, %v974
        %v976 = vpop.f32.mrf.mxu0
        %v977 = vadd.f32 %v404, %v976
        %978 = vmatprep.mubr.bf16.mxu0 0
        %979 = vmatmul.mubr.bf16.gmra.mxu0 %v416
        %v980 = vpop.f32.mrf.mxu0
        %v981 = vadd.f32 %v400, %v980
        %v982 = vpop.f32.mrf.mxu0
        %v983 = vadd.f32 %v404, %v982
        %v984 = vpop.f32.mrf.mxu0
        %v985 = vpop.f32.mrf.mxu0
        %986 = vdwg.mxu0
        %v987 = vmax.f32 %v920, 0.0
        %v988 = vmax.f32 %v922, 0.0
        %v989 = vmax.f32 %v971, 0.0
        %v990 = vmax.f32 %v973, 0.0
        %v991 = vmax.f32 %v924, 0.0
        %v992 = vmax.f32 %v926, 0.0
        %v993 = vmax.f32 %v975, 0.0
        %v994 = vmax.f32 %v977, 0.0
        %v995 = vmax.f32 %v930, 0.0
        %v996 = vmax.f32 %v932, 0.0
        %v997 = vmax.f32 %v981, 0.0
        %v998 = vmax.f32 %v983, 0.0
        %v999 = vlaneseq
        %v1000 = vshrl.u32 %v999, 7
        %v1001 = vadd.s32 %v1000, 8
        %v1002 = vadd.s32 %v1000, 16
        %p1003 = scmp.eq.s32.totalorder %s28, 0
        %vm1004 = vcmp.eq.s32.totalorder %v1000, 0
        %vm1005 = vcmp.eq.s32.totalorder %v1001, 0
        %vm1006 = vcmp.eq.s32.totalorder %v1002, 0
        %s1007 = scalar_select %p1003, 1, 0
        %v1008 = vstv %s1007
        %vm1009 = vcmp.eq.s32.totalorder %v1008, 1
        %vm1010 = vmand %vm1004, %vm1009
        %vm1011 = vmand %vm1005, %vm1009
        %vm1012 = vmand %vm1006, %vm1009
        %v1013 = vsel %vm1010, 1, 0
        %v1014 = vsel %vm1011, 1, 0
        %v1015 = vsel %vm1012, 1, 0
        %vm1016 = vcmp.eq.s32.totalorder %v1013, 1
        %vm1017 = vcmp.eq.s32.totalorder %v1014, 1
        %vm1018 = vcmp.eq.s32.totalorder %v1015, 1
        %v1019 = vsel %vm1016, 0.0, %v987
        %v1020 = vsel %vm1016, 0.0, %v988
        %v1021 = vsel %vm1016, 0.0, %v989
        %v1022 = vsel %vm1016, 0.0, %v990
        %v1023 = vsel %vm1017, 0.0, %v991
        %v1024 = vsel %vm1017, 0.0, %v992
        %v1025 = vsel %vm1017, 0.0, %v993
        %v1026 = vsel %vm1017, 0.0, %v994
        %v1027 = vsel %vm1018, 0.0, %v995
        %v1028 = vsel %vm1018, 0.0, %v996
        %v1029 = vsel %vm1018, 0.0, %v997
        %v1030 = vsel %vm1018, 0.0, %v998
        %vm1031 = vcmp.eq.s32.totalorder %v1000, 16
        %vm1032 = vcmp.eq.s32.totalorder %v1001, 16
        %vm1033 = vcmp.eq.s32.totalorder %v1002, 16
        %vm1034 = vmand %vm1031, %vm1009
        %vm1035 = vmand %vm1032, %vm1009
        %vm1036 = vmand %vm1033, %vm1009
        %v1037 = vsel %vm1034, 1, 0
        %v1038 = vsel %vm1035, 1, 0
        %v1039 = vsel %vm1036, 1, 0
        %vm1040 = vcmp.eq.s32.totalorder %v1037, 1
        %vm1041 = vcmp.eq.s32.totalorder %v1038, 1
        %vm1042 = vcmp.eq.s32.totalorder %v1039, 1
        %v1043 = vsel %vm1040, 0.0, %v681
        %v1044 = vsel %vm1040, 0.0, %v682
        %v1045 = vsel %vm1040, 0.0, %v683
        %v1046 = vsel %vm1040, 0.0, %v684
        %v1047 = vsel %vm1041, 0.0, %v685
        %v1048 = vsel %vm1041, 0.0, %v686
        %v1049 = vsel %vm1041, 0.0, %v687
        %v1050 = vsel %vm1041, 0.0, %v688
        %v1051 = vsel %vm1042, 0.0, %v689
        %v1052 = vsel %vm1042, 0.0, %v690
        %v1053 = vsel %vm1042, 0.0, %v691
        %v1054 = vsel %vm1042, 0.0, %v692
        %v1055 = vpack.c.bf16 %v1047, %v1043
        %v1056 = vpack.c.bf16 %v1048, %v1044
        %v1057 = vpack.c.bf16 %v1049, %v1045
        %v1058 = vpack.c.bf16 %v1050, %v1046
        %v1059 = vpack.c.bf16 %v1051, %v1051
        %v1060 = vpack.c.bf16 %v1052, %v1052
        %v1061 = vpack.c.bf16 %v1053, %v1053
        %v1062 = vpack.c.bf16 %v1054, %v1054
        %v1063 = vpack.c.bf16 %v1023, %v1019
        %v1064 = vpack.c.bf16 %v1024, %v1020
        %v1065 = vpack.c.bf16 %v1025, %v1021
        %v1066 = vpack.c.bf16 %v1026, %v1022
        %v1067 = vpack.c.bf16 %v1027, %v1027
        %v1068 = vpack.c.bf16 %v1028, %v1028
        %v1069 = vpack.c.bf16 %v1029, %v1029
        %v1070 = vpack.c.bf16 %v1030, %v1030
        %v1071 = vld [vmem:[#allocation7] sm:$0xff]
        %v1072 = vld [vmem:[#allocation7 + $0x8] sm:$0xff]
        %v1073 = vld [vmem:[#allocation7 + $0x10] sm:$0xff]
        %v1074 = vld [vmem:[#allocation7 + $0x18] sm:$0xff]
        %v1075 = vld [vmem:[#allocation7 + $0x20] sm:$0xff]
        %v1076 = vld [vmem:[#allocation7 + $0x28] sm:$0xff]
        %v1077 = vld [vmem:[#allocation7 + $0x30] sm:$0xff]
        %v1078 = vld [vmem:[#allocation7 + $0x38] sm:$0xff]
        %v1079 = vld [vmem:[#allocation7 + $0x40] sm:$0xff]
        %v1080 = vld [vmem:[#allocation7 + $0x48] sm:$0xff]
        %v1081 = vld [vmem:[#allocation7 + $0x50] sm:$0xff]
        %v1082 = vld [vmem:[#allocation7 + $0x58] sm:$0xff]
        %v1083 = vld [vmem:[#allocation7 + $0x60] sm:$0xff]
        %v1084 = vld [vmem:[#allocation7 + $0x68] sm:$0xff]
        %v1085 = vld [vmem:[#allocation7 + $0x70] sm:$0xff]
        %v1086 = vld [vmem:[#allocation7 + $0x78] sm:$0xff]
        %v1087 = vld [vmem:[#allocation7 + $0x80] sm:$0xff]
        %v1088 = vld [vmem:[#allocation7 + $0x88] sm:$0xff]
        %v1089 = vld [vmem:[#allocation7 + $0x90] sm:$0xff]
        %v1090 = vld [vmem:[#allocation7 + $0x98] sm:$0xff]
        %v1091 = vld [vmem:[#allocation7 + $0xa0] sm:$0xff]
        %v1092 = vld [vmem:[#allocation7 + $0xa8] sm:$0xff]
        %v1093 = vld [vmem:[#allocation7 + $0xb0] sm:$0xff]
        %v1094 = vld [vmem:[#allocation7 + $0xb8] sm:$0xff]
        %v1095 = vld [vmem:[#allocation7 + $0xc0] sm:$0xff]
        %v1096 = vld [vmem:[#allocation7 + $0xc8] sm:$0xff]
        %v1097 = vld [vmem:[#allocation7 + $0xd0] sm:$0xff]
        %v1098 = vld [vmem:[#allocation7 + $0xd8] sm:$0xff]
        %v1099 = vld [vmem:[#allocation7 + $0xe0] sm:$0xff]
        %v1100 = vld [vmem:[#allocation7 + $0xe8] sm:$0xff]
        %v1101 = vld [vmem:[#allocation7 + $0xf0] sm:$0xff]
        %v1102 = vld [vmem:[#allocation7 + $0xf8] sm:$0xff]
        %v1103 = vld [vmem:[#allocation7 + $0x100] sm:$0xff]
        %v1104 = vld [vmem:[#allocation7 + $0x108] sm:$0xff]
        %v1105 = vld [vmem:[#allocation7 + $0x110] sm:$0xff]
        %v1106 = vld [vmem:[#allocation7 + $0x118] sm:$0xff]
        %v1107 = vld [vmem:[#allocation7 + $0x120] sm:$0xff]
        %v1108 = vld [vmem:[#allocation7 + $0x128] sm:$0xff]
        %v1109 = vld [vmem:[#allocation7 + $0x130] sm:$0xff]
        %v1110 = vld [vmem:[#allocation7 + $0x138] sm:$0xff]
        %v1111 = vld [vmem:[#allocation7 + $0x140] sm:$0xff]
        %v1112 = vld [vmem:[#allocation7 + $0x148] sm:$0xff]
        %v1113 = vld [vmem:[#allocation7 + $0x150] sm:$0xff]
        %v1114 = vld [vmem:[#allocation7 + $0x158] sm:$0xff]
        %v1115 = vld [vmem:[#allocation7 + $0x160] sm:$0xff]
        %v1116 = vld [vmem:[#allocation7 + $0x168] sm:$0xff]
        %v1117 = vld [vmem:[#allocation7 + $0x170] sm:$0xff]
        %v1118 = vld [vmem:[#allocation7 + $0x178] sm:$0xff]
        %v1119 = vld [vmem:[#allocation7 + $0x180] sm:$0xff]
        %v1120 = vld [vmem:[#allocation7 + $0x188] sm:$0xff]
        %v1121 = vld [vmem:[#allocation7 + $0x190] sm:$0xff]
        %v1122 = vld [vmem:[#allocation7 + $0x198] sm:$0xff]
        %v1123 = vld [vmem:[#allocation7 + $0x1a0] sm:$0xff]
        %v1124 = vld [vmem:[#allocation7 + $0x1a8] sm:$0xff]
        %v1125 = vld [vmem:[#allocation7 + $0x1b0] sm:$0xff]
        %v1126 = vld [vmem:[#allocation7 + $0x1b8] sm:$0xff]
        %v1127 = vld [vmem:[#allocation7 + $0x1c0] sm:$0xff]
        %v1128 = vld [vmem:[#allocation7 + $0x1c8] sm:$0xff]
        %v1129 = vld [vmem:[#allocation7 + $0x1d0] sm:$0xff]
        %v1130 = vld [vmem:[#allocation7 + $0x1d8] sm:$0xff]
        %v1131 = vld [vmem:[#allocation7 + $0x1e0] sm:$0xff]
        %v1132 = vld [vmem:[#allocation7 + $0x1e8] sm:$0xff]
        %v1133 = vld [vmem:[#allocation7 + $0x1f0] sm:$0xff]
        %v1134 = vld [vmem:[#allocation7 + $0x1f8] sm:$0xff]
        %v1135 = vld [vmem:[#allocation7 + $0x200] sm:$0xff]
        %v1136 = vld [vmem:[#allocation7 + $0x208] sm:$0xff]
        %v1137 = vld [vmem:[#allocation7 + $0x210] sm:$0xff]
        %v1138 = vld [vmem:[#allocation7 + $0x218] sm:$0xff]
        %v1139 = vld [vmem:[#allocation7 + $0x220] sm:$0xff]
        %v1140 = vld [vmem:[#allocation7 + $0x228] sm:$0xff]
        %v1141 = vld [vmem:[#allocation7 + $0x230] sm:$0xff]
        %v1142 = vld [vmem:[#allocation7 + $0x238] sm:$0xff]
        %v1143 = vld [vmem:[#allocation7 + $0x240] sm:$0xff]
        %v1144 = vld [vmem:[#allocation7 + $0x248] sm:$0xff]
        %v1145 = vld [vmem:[#allocation7 + $0x250] sm:$0xff]
        %v1146 = vld [vmem:[#allocation7 + $0x258] sm:$0xff]
        %v1147 = vld [vmem:[#allocation7 + $0x260] sm:$0xff]
        %v1148 = vld [vmem:[#allocation7 + $0x268] sm:$0xff]
        %v1149 = vld [vmem:[#allocation7 + $0x270] sm:$0xff]
        %v1150 = vld [vmem:[#allocation7 + $0x278] sm:$0xff]
        %v1151 = vld [vmem:[#allocation7 + $0x280] sm:$0xff]
        %v1152 = vld [vmem:[#allocation7 + $0x288] sm:$0xff]
        %v1153 = vld [vmem:[#allocation7 + $0x290] sm:$0xff]
        %v1154 = vld [vmem:[#allocation7 + $0x298] sm:$0xff]
        %v1155 = vld [vmem:[#allocation7 + $0x2a0] sm:$0xff]
        %v1156 = vld [vmem:[#allocation7 + $0x2a8] sm:$0xff]
        %v1157 = vld [vmem:[#allocation7 + $0x2b0] sm:$0xff]
        %v1158 = vld [vmem:[#allocation7 + $0x2b8] sm:$0xff]
        %v1159 = vld [vmem:[#allocation7 + $0x2c0] sm:$0xff]
        %v1160 = vld [vmem:[#allocation7 + $0x2c8] sm:$0xff]
        %v1161 = vld [vmem:[#allocation7 + $0x2d0] sm:$0xff]
        %v1162 = vld [vmem:[#allocation7 + $0x2d8] sm:$0xff]
        %v1163 = vld [vmem:[#allocation7 + $0x2e0] sm:$0xff]
        %v1164 = vld [vmem:[#allocation7 + $0x2e8] sm:$0xff]
        %v1165 = vld [vmem:[#allocation7 + $0x2f0] sm:$0xff]
        %v1166 = vld [vmem:[#allocation7 + $0x2f8] sm:$0xff]
        %v1167 = vld [vmem:[#allocation7 + $0x300] sm:$0xff]
        %v1168 = vld [vmem:[#allocation7 + $0x308] sm:$0xff]
        %v1169 = vld [vmem:[#allocation7 + $0x310] sm:$0xff]
        %v1170 = vld [vmem:[#allocation7 + $0x318] sm:$0xff]
        %v1171 = vld [vmem:[#allocation7 + $0x320] sm:$0xff]
        %v1172 = vld [vmem:[#allocation7 + $0x328] sm:$0xff]
        %v1173 = vld [vmem:[#allocation7 + $0x330] sm:$0xff]
        %v1174 = vld [vmem:[#allocation7 + $0x338] sm:$0xff]
        %v1175 = vld [vmem:[#allocation7 + $0x340] sm:$0xff]
        %v1176 = vld [vmem:[#allocation7 + $0x348] sm:$0xff]
        %v1177 = vld [vmem:[#allocation7 + $0x350] sm:$0xff]
        %v1178 = vld [vmem:[#allocation7 + $0x358] sm:$0xff]
        %v1179 = vld [vmem:[#allocation7 + $0x360] sm:$0xff]
        %v1180 = vld [vmem:[#allocation7 + $0x368] sm:$0xff]
        %v1181 = vld [vmem:[#allocation7 + $0x370] sm:$0xff]
        %v1182 = vld [vmem:[#allocation7 + $0x378] sm:$0xff]
        %v1183 = vld [vmem:[#allocation7 + $0x380] sm:$0xff]
        %v1184 = vld [vmem:[#allocation7 + $0x388] sm:$0xff]
        %v1185 = vld [vmem:[#allocation7 + $0x390] sm:$0xff]
        %v1186 = vld [vmem:[#allocation7 + $0x398] sm:$0xff]
        %v1187 = vld [vmem:[#allocation7 + $0x3a0] sm:$0xff]
        %v1188 = vld [vmem:[#allocation7 + $0x3a8] sm:$0xff]
        %v1189 = vld [vmem:[#allocation7 + $0x3b0] sm:$0xff]
        %v1190 = vld [vmem:[#allocation7 + $0x3b8] sm:$0xff]
        %v1191 = vld [vmem:[#allocation7 + $0x3c0] sm:$0xff]
        %v1192 = vld [vmem:[#allocation7 + $0x3c8] sm:$0xff]
        %v1193 = vld [vmem:[#allocation7 + $0x3d0] sm:$0xff]
        %v1194 = vld [vmem:[#allocation7 + $0x3d8] sm:$0xff]
        %v1195 = vld [vmem:[#allocation7 + $0x3e0] sm:$0xff]
        %v1196 = vld [vmem:[#allocation7 + $0x3e8] sm:$0xff]
        %v1197 = vld [vmem:[#allocation7 + $0x3f0] sm:$0xff]
        %v1198 = vld [vmem:[#allocation7 + $0x3f8] sm:$0xff]
        %v1199 = vld [vmem:[#allocation7 + $0x400] sm:$0xff]
        %v1200 = vld [vmem:[#allocation7 + $0x408] sm:$0xff]
        %v1201 = vld [vmem:[#allocation7 + $0x410] sm:$0xff]
        %v1202 = vld [vmem:[#allocation7 + $0x418] sm:$0xff]
        %v1203 = vld [vmem:[#allocation7 + $0x420] sm:$0xff]
        %v1204 = vld [vmem:[#allocation7 + $0x428] sm:$0xff]
        %v1205 = vld [vmem:[#allocation7 + $0x430] sm:$0xff]
        %v1206 = vld [vmem:[#allocation7 + $0x438] sm:$0xff]
        %v1207 = vld [vmem:[#allocation7 + $0x440] sm:$0xff]
        %v1208 = vld [vmem:[#allocation7 + $0x448] sm:$0xff]
        %v1209 = vld [vmem:[#allocation7 + $0x450] sm:$0xff]
        %v1210 = vld [vmem:[#allocation7 + $0x458] sm:$0xff]
        %v1211 = vld [vmem:[#allocation7 + $0x460] sm:$0xff]
        %v1212 = vld [vmem:[#allocation7 + $0x468] sm:$0xff]
        %v1213 = vld [vmem:[#allocation7 + $0x470] sm:$0xff]
        %v1214 = vld [vmem:[#allocation7 + $0x478] sm:$0xff]
        %v1215 = vld [vmem:[#allocation7 + $0x480] sm:$0xff]
        %v1216 = vld [vmem:[#allocation7 + $0x488] sm:$0xff]
        %v1217 = vld [vmem:[#allocation7 + $0x490] sm:$0xff]
        %v1218 = vld [vmem:[#allocation7 + $0x498] sm:$0xff]
        %v1219 = vld [vmem:[#allocation7 + $0x4a0] sm:$0xff]
        %v1220 = vld [vmem:[#allocation7 + $0x4a8] sm:$0xff]
        %v1221 = vld [vmem:[#allocation7 + $0x4b0] sm:$0xff]
        %v1222 = vld [vmem:[#allocation7 + $0x4b8] sm:$0xff]
        %v1223 = vld [vmem:[#allocation7 + $0x4c0] sm:$0xff]
        %v1224 = vld [vmem:[#allocation7 + $0x4c8] sm:$0xff]
        %v1225 = vld [vmem:[#allocation7 + $0x4d0] sm:$0xff]
        %v1226 = vld [vmem:[#allocation7 + $0x4d8] sm:$0xff]
        %v1227 = vld [vmem:[#allocation7 + $0x4e0] sm:$0xff]
        %v1228 = vld [vmem:[#allocation7 + $0x4e8] sm:$0xff]
        %v1229 = vld [vmem:[#allocation7 + $0x4f0] sm:$0xff]
        %v1230 = vld [vmem:[#allocation7 + $0x4f8] sm:$0xff]
        %v1231 = vld [vmem:[#allocation7 + $0x500] sm:$0xff]
        %v1232 = vld [vmem:[#allocation7 + $0x508] sm:$0xff]
        %v1233 = vld [vmem:[#allocation7 + $0x510] sm:$0xff]
        %v1234 = vld [vmem:[#allocation7 + $0x518] sm:$0xff]
        %v1235 = vld [vmem:[#allocation7 + $0x520] sm:$0xff]
        %v1236 = vld [vmem:[#allocation7 + $0x528] sm:$0xff]
        %v1237 = vld [vmem:[#allocation7 + $0x530] sm:$0xff]
        %v1238 = vld [vmem:[#allocation7 + $0x538] sm:$0xff]
        %v1239 = vld [vmem:[#allocation7 + $0x540] sm:$0xff]
        %v1240 = vld [vmem:[#allocation7 + $0x548] sm:$0xff]
        %v1241 = vld [vmem:[#allocation7 + $0x550] sm:$0xff]
        %v1242 = vld [vmem:[#allocation7 + $0x558] sm:$0xff]
        %v1243 = vld [vmem:[#allocation7 + $0x560] sm:$0xff]
        %v1244 = vld [vmem:[#allocation7 + $0x568] sm:$0xff]
        %v1245 = vld [vmem:[#allocation7 + $0x570] sm:$0xff]
        %v1246 = vld [vmem:[#allocation7 + $0x578] sm:$0xff]
        %v1247 = vld [vmem:[#allocation7 + $0x580] sm:$0xff]
        %v1248 = vld [vmem:[#allocation7 + $0x588] sm:$0xff]
        %v1249 = vld [vmem:[#allocation7 + $0x590] sm:$0xff]
        %v1250 = vld [vmem:[#allocation7 + $0x598] sm:$0xff]
        %v1251 = vld [vmem:[#allocation7 + $0x5a0] sm:$0xff]
        %v1252 = vld [vmem:[#allocation7 + $0x5a8] sm:$0xff]
        %v1253 = vld [vmem:[#allocation7 + $0x5b0] sm:$0xff]
        %v1254 = vld [vmem:[#allocation7 + $0x5b8] sm:$0xff]
        %v1255 = vld [vmem:[#allocation7 + $0x5c0] sm:$0xff]
        %v1256 = vld [vmem:[#allocation7 + $0x5c8] sm:$0xff]
        %v1257 = vld [vmem:[#allocation7 + $0x5d0] sm:$0xff]
        %v1258 = vld [vmem:[#allocation7 + $0x5d8] sm:$0xff]
        %v1259 = vld [vmem:[#allocation7 + $0x5e0] sm:$0xff]
        %v1260 = vld [vmem:[#allocation7 + $0x5e8] sm:$0xff]
        %v1261 = vld [vmem:[#allocation7 + $0x5f0] sm:$0xff]
        %v1262 = vld [vmem:[#allocation7 + $0x5f8] sm:$0xff]
        %v1263 = vld [vmem:[#allocation7 + $0x600] sm:$0xff]
        %v1264 = vld [vmem:[#allocation7 + $0x608] sm:$0xff]
        %v1265 = vld [vmem:[#allocation7 + $0x610] sm:$0xff]
        %v1266 = vld [vmem:[#allocation7 + $0x618] sm:$0xff]
        %v1267 = vld [vmem:[#allocation7 + $0x620] sm:$0xff]
        %v1268 = vld [vmem:[#allocation7 + $0x628] sm:$0xff]
        %v1269 = vld [vmem:[#allocation7 + $0x630] sm:$0xff]
        %v1270 = vld [vmem:[#allocation7 + $0x638] sm:$0xff]
        %v1271 = vld [vmem:[#allocation7 + $0x640] sm:$0xff]
        %v1272 = vld [vmem:[#allocation7 + $0x648] sm:$0xff]
        %v1273 = vld [vmem:[#allocation7 + $0x650] sm:$0xff]
        %v1274 = vld [vmem:[#allocation7 + $0x658] sm:$0xff]
        %v1275 = vld [vmem:[#allocation7 + $0x660] sm:$0xff]
        %v1276 = vld [vmem:[#allocation7 + $0x668] sm:$0xff]
        %v1277 = vld [vmem:[#allocation7 + $0x670] sm:$0xff]
        %v1278 = vld [vmem:[#allocation7 + $0x678] sm:$0xff]
        %v1279 = vld [vmem:[#allocation7 + $0x680] sm:$0xff]
        %v1280 = vld [vmem:[#allocation7 + $0x688] sm:$0xff]
        %v1281 = vld [vmem:[#allocation7 + $0x690] sm:$0xff]
        %v1282 = vld [vmem:[#allocation7 + $0x698] sm:$0xff]
        %v1283 = vld [vmem:[#allocation7 + $0x6a0] sm:$0xff]
        %v1284 = vld [vmem:[#allocation7 + $0x6a8] sm:$0xff]
        %v1285 = vld [vmem:[#allocation7 + $0x6b0] sm:$0xff]
        %v1286 = vld [vmem:[#allocation7 + $0x6b8] sm:$0xff]
        %v1287 = vld [vmem:[#allocation7 + $0x6c0] sm:$0xff]
        %v1288 = vld [vmem:[#allocation7 + $0x6c8] sm:$0xff]
        %v1289 = vld [vmem:[#allocation7 + $0x6d0] sm:$0xff]
        %v1290 = vld [vmem:[#allocation7 + $0x6d8] sm:$0xff]
        %v1291 = vld [vmem:[#allocation7 + $0x6e0] sm:$0xff]
        %v1292 = vld [vmem:[#allocation7 + $0x6e8] sm:$0xff]
        %v1293 = vld [vmem:[#allocation7 + $0x6f0] sm:$0xff]
        %v1294 = vld [vmem:[#allocation7 + $0x6f8] sm:$0xff]
        %v1295 = vld [vmem:[#allocation7 + $0x700] sm:$0xff]
        %v1296 = vld [vmem:[#allocation7 + $0x708] sm:$0xff]
        %v1297 = vld [vmem:[#allocation7 + $0x710] sm:$0xff]
        %v1298 = vld [vmem:[#allocation7 + $0x718] sm:$0xff]
        %v1299 = vld [vmem:[#allocation7 + $0x720] sm:$0xff]
        %v1300 = vld [vmem:[#allocation7 + $0x728] sm:$0xff]
        %v1301 = vld [vmem:[#allocation7 + $0x730] sm:$0xff]
        %v1302 = vld [vmem:[#allocation7 + $0x738] sm:$0xff]
        %v1303 = vld [vmem:[#allocation7 + $0x740] sm:$0xff]
        %v1304 = vld [vmem:[#allocation7 + $0x748] sm:$0xff]
        %v1305 = vld [vmem:[#allocation7 + $0x750] sm:$0xff]
        %v1306 = vld [vmem:[#allocation7 + $0x758] sm:$0xff]
        %v1307 = vld [vmem:[#allocation7 + $0x760] sm:$0xff]
        %v1308 = vld [vmem:[#allocation7 + $0x768] sm:$0xff]
        %v1309 = vld [vmem:[#allocation7 + $0x770] sm:$0xff]
        %v1310 = vld [vmem:[#allocation7 + $0x778] sm:$0xff]
        %v1311 = vld [vmem:[#allocation7 + $0x780] sm:$0xff]
        %v1312 = vld [vmem:[#allocation7 + $0x788] sm:$0xff]
        %v1313 = vld [vmem:[#allocation7 + $0x790] sm:$0xff]
        %v1314 = vld [vmem:[#allocation7 + $0x798] sm:$0xff]
        %v1315 = vld [vmem:[#allocation7 + $0x7a0] sm:$0xff]
        %v1316 = vld [vmem:[#allocation7 + $0x7a8] sm:$0xff]
        %v1317 = vld [vmem:[#allocation7 + $0x7b0] sm:$0xff]
        %v1318 = vld [vmem:[#allocation7 + $0x7b8] sm:$0xff]
        %v1319 = vld [vmem:[#allocation7 + $0x7c0] sm:$0xff]
        %v1320 = vld [vmem:[#allocation7 + $0x7c8] sm:$0xff]
        %v1321 = vld [vmem:[#allocation7 + $0x7d0] sm:$0xff]
        %v1322 = vld [vmem:[#allocation7 + $0x7d8] sm:$0xff]
        %v1323 = vld [vmem:[#allocation7 + $0x7e0] sm:$0xff]
        %v1324 = vld [vmem:[#allocation7 + $0x7e8] sm:$0xff]
        %v1325 = vld [vmem:[#allocation7 + $0x7f0] sm:$0xff]
        %v1326 = vld [vmem:[#allocation7 + $0x7f8] sm:$0xff]
        %v1583 = vunpack.c.l.b16 %v1071
        %v1584 = vunpack.c.h.b16 %v1071
        %v1585 = vunpack.c.l.b16 %v1072
        %v1586 = vunpack.c.h.b16 %v1072
        %v1587 = vunpack.c.l.b16 %v1073
        %v1588 = vunpack.c.h.b16 %v1073
        %v1589 = vunpack.c.l.b16 %v1074
        %v1590 = vunpack.c.h.b16 %v1074
        %v1591 = vunpack.c.l.b16 %v1075
        %v1592 = vunpack.c.h.b16 %v1075
        %v1593 = vunpack.c.l.b16 %v1076
        %v1594 = vunpack.c.h.b16 %v1076
        %v1595 = vunpack.c.l.b16 %v1077
        %v1596 = vunpack.c.h.b16 %v1077
        %v1597 = vunpack.c.l.b16 %v1078
        %v1598 = vunpack.c.h.b16 %v1078
        %v1599 = vunpack.c.l.b16 %v1079
        %v1600 = vunpack.c.h.b16 %v1079
        %v1601 = vunpack.c.l.b16 %v1080
        %v1602 = vunpack.c.h.b16 %v1080
        %v1603 = vunpack.c.l.b16 %v1081
        %v1604 = vunpack.c.h.b16 %v1081
        %v1605 = vunpack.c.l.b16 %v1082
        %v1606 = vunpack.c.h.b16 %v1082
        %v1607 = vunpack.c.l.b16 %v1083
        %v1608 = vunpack.c.h.b16 %v1083
        %v1609 = vunpack.c.l.b16 %v1084
        %v1610 = vunpack.c.h.b16 %v1084
        %v1611 = vunpack.c.l.b16 %v1085
        %v1612 = vunpack.c.h.b16 %v1085
        %v1613 = vunpack.c.l.b16 %v1086
        %v1614 = vunpack.c.h.b16 %v1086
        %v1615 = vunpack.c.l.b16 %v1087
        %v1616 = vunpack.c.h.b16 %v1087
        %v1617 = vunpack.c.l.b16 %v1088
        %v1618 = vunpack.c.h.b16 %v1088
        %v1619 = vunpack.c.l.b16 %v1089
        %v1620 = vunpack.c.h.b16 %v1089
        %v1621 = vunpack.c.l.b16 %v1090
        %v1622 = vunpack.c.h.b16 %v1090
        %v1623 = vunpack.c.l.b16 %v1091
        %v1624 = vunpack.c.h.b16 %v1091
        %v1625 = vunpack.c.l.b16 %v1092
        %v1626 = vunpack.c.h.b16 %v1092
        %v1627 = vunpack.c.l.b16 %v1093
        %v1628 = vunpack.c.h.b16 %v1093
        %v1629 = vunpack.c.l.b16 %v1094
        %v1630 = vunpack.c.h.b16 %v1094
        %v1631 = vunpack.c.l.b16 %v1095
        %v1632 = vunpack.c.h.b16 %v1095
        %v1633 = vunpack.c.l.b16 %v1096
        %v1634 = vunpack.c.h.b16 %v1096
        %v1635 = vunpack.c.l.b16 %v1097
        %v1636 = vunpack.c.h.b16 %v1097
        %v1637 = vunpack.c.l.b16 %v1098
        %v1638 = vunpack.c.h.b16 %v1098
        %v1639 = vunpack.c.l.b16 %v1099
        %v1640 = vunpack.c.h.b16 %v1099
        %v1641 = vunpack.c.l.b16 %v1100
        %v1642 = vunpack.c.h.b16 %v1100
        %v1643 = vunpack.c.l.b16 %v1101
        %v1644 = vunpack.c.h.b16 %v1101
        %v1645 = vunpack.c.l.b16 %v1102
        %v1646 = vunpack.c.h.b16 %v1102
        %v1647 = vunpack.c.l.b16 %v1103
        %v1648 = vunpack.c.h.b16 %v1103
        %v1649 = vunpack.c.l.b16 %v1104
        %v1650 = vunpack.c.h.b16 %v1104
        %v1651 = vunpack.c.l.b16 %v1105
        %v1652 = vunpack.c.h.b16 %v1105
        %v1653 = vunpack.c.l.b16 %v1106
        %v1654 = vunpack.c.h.b16 %v1106
        %v1655 = vunpack.c.l.b16 %v1107
        %v1656 = vunpack.c.h.b16 %v1107
        %v1657 = vunpack.c.l.b16 %v1108
        %v1658 = vunpack.c.h.b16 %v1108
        %v1659 = vunpack.c.l.b16 %v1109
        %v1660 = vunpack.c.h.b16 %v1109
        %v1661 = vunpack.c.l.b16 %v1110
        %v1662 = vunpack.c.h.b16 %v1110
        %v1663 = vunpack.c.l.b16 %v1111
        %v1664 = vunpack.c.h.b16 %v1111
        %v1665 = vunpack.c.l.b16 %v1112
        %v1666 = vunpack.c.h.b16 %v1112
        %v1667 = vunpack.c.l.b16 %v1113
        %v1668 = vunpack.c.h.b16 %v1113
        %v1669 = vunpack.c.l.b16 %v1114
        %v1670 = vunpack.c.h.b16 %v1114
        %v1671 = vunpack.c.l.b16 %v1115
        %v1672 = vunpack.c.h.b16 %v1115
        %v1673 = vunpack.c.l.b16 %v1116
        %v1674 = vunpack.c.h.b16 %v1116
        %v1675 = vunpack.c.l.b16 %v1117
        %v1676 = vunpack.c.h.b16 %v1117
        %v1677 = vunpack.c.l.b16 %v1118
        %v1678 = vunpack.c.h.b16 %v1118
        %v1679 = vunpack.c.l.b16 %v1119
        %v1680 = vunpack.c.h.b16 %v1119
        %v1681 = vunpack.c.l.b16 %v1120
        %v1682 = vunpack.c.h.b16 %v1120
        %v1683 = vunpack.c.l.b16 %v1121
        %v1684 = vunpack.c.h.b16 %v1121
        %v1685 = vunpack.c.l.b16 %v1122
        %v1686 = vunpack.c.h.b16 %v1122
        %v1687 = vunpack.c.l.b16 %v1123
        %v1688 = vunpack.c.h.b16 %v1123
        %v1689 = vunpack.c.l.b16 %v1124
        %v1690 = vunpack.c.h.b16 %v1124
        %v1691 = vunpack.c.l.b16 %v1125
        %v1692 = vunpack.c.h.b16 %v1125
        %v1693 = vunpack.c.l.b16 %v1126
        %v1694 = vunpack.c.h.b16 %v1126
        %v1695 = vunpack.c.l.b16 %v1127
        %v1696 = vunpack.c.h.b16 %v1127
        %v1697 = vunpack.c.l.b16 %v1128
        %v1698 = vunpack.c.h.b16 %v1128
        %v1699 = vunpack.c.l.b16 %v1129
        %v1700 = vunpack.c.h.b16 %v1129
        %v1701 = vunpack.c.l.b16 %v1130
        %v1702 = vunpack.c.h.b16 %v1130
        %v1703 = vunpack.c.l.b16 %v1131
        %v1704 = vunpack.c.h.b16 %v1131
        %v1705 = vunpack.c.l.b16 %v1132
        %v1706 = vunpack.c.h.b16 %v1132
        %v1707 = vunpack.c.l.b16 %v1133
        %v1708 = vunpack.c.h.b16 %v1133
        %v1709 = vunpack.c.l.b16 %v1134
        %v1710 = vunpack.c.h.b16 %v1134
        %v1711 = vunpack.c.l.b16 %v1135
        %v1712 = vunpack.c.h.b16 %v1135
        %v1713 = vunpack.c.l.b16 %v1136
        %v1714 = vunpack.c.h.b16 %v1136
        %v1715 = vunpack.c.l.b16 %v1137
        %v1716 = vunpack.c.h.b16 %v1137
        %v1717 = vunpack.c.l.b16 %v1138
        %v1718 = vunpack.c.h.b16 %v1138
        %v1719 = vunpack.c.l.b16 %v1139
        %v1720 = vunpack.c.h.b16 %v1139
        %v1721 = vunpack.c.l.b16 %v1140
        %v1722 = vunpack.c.h.b16 %v1140
        %v1723 = vunpack.c.l.b16 %v1141
        %v1724 = vunpack.c.h.b16 %v1141
        %v1725 = vunpack.c.l.b16 %v1142
        %v1726 = vunpack.c.h.b16 %v1142
        %v1727 = vunpack.c.l.b16 %v1143
        %v1728 = vunpack.c.h.b16 %v1143
        %v1729 = vunpack.c.l.b16 %v1144
        %v1730 = vunpack.c.h.b16 %v1144
        %v1731 = vunpack.c.l.b16 %v1145
        %v1732 = vunpack.c.h.b16 %v1145
        %v1733 = vunpack.c.l.b16 %v1146
        %v1734 = vunpack.c.h.b16 %v1146
        %v1735 = vunpack.c.l.b16 %v1147
        %v1736 = vunpack.c.h.b16 %v1147
        %v1737 = vunpack.c.l.b16 %v1148
        %v1738 = vunpack.c.h.b16 %v1148
        %v1739 = vunpack.c.l.b16 %v1149
        %v1740 = vunpack.c.h.b16 %v1149
        %v1741 = vunpack.c.l.b16 %v1150
        %v1742 = vunpack.c.h.b16 %v1150
        %v1743 = vunpack.c.l.b16 %v1151
        %v1744 = vunpack.c.h.b16 %v1151
        %v1745 = vunpack.c.l.b16 %v1152
        %v1746 = vunpack.c.h.b16 %v1152
        %v1747 = vunpack.c.l.b16 %v1153
        %v1748 = vunpack.c.h.b16 %v1153
        %v1749 = vunpack.c.l.b16 %v1154
        %v1750 = vunpack.c.h.b16 %v1154
        %v1751 = vunpack.c.l.b16 %v1155
        %v1752 = vunpack.c.h.b16 %v1155
        %v1753 = vunpack.c.l.b16 %v1156
        %v1754 = vunpack.c.h.b16 %v1156
        %v1755 = vunpack.c.l.b16 %v1157
        %v1756 = vunpack.c.h.b16 %v1157
        %v1757 = vunpack.c.l.b16 %v1158
        %v1758 = vunpack.c.h.b16 %v1158
        %v1759 = vunpack.c.l.b16 %v1159
        %v1760 = vunpack.c.h.b16 %v1159
        %v1761 = vunpack.c.l.b16 %v1160
        %v1762 = vunpack.c.h.b16 %v1160
        %v1763 = vunpack.c.l.b16 %v1161
        %v1764 = vunpack.c.h.b16 %v1161
        %v1765 = vunpack.c.l.b16 %v1162
        %v1766 = vunpack.c.h.b16 %v1162
        %v1767 = vunpack.c.l.b16 %v1163
        %v1768 = vunpack.c.h.b16 %v1163
        %v1769 = vunpack.c.l.b16 %v1164
        %v1770 = vunpack.c.h.b16 %v1164
        %v1771 = vunpack.c.l.b16 %v1165
        %v1772 = vunpack.c.h.b16 %v1165
        %v1773 = vunpack.c.l.b16 %v1166
        %v1774 = vunpack.c.h.b16 %v1166
        %v1775 = vunpack.c.l.b16 %v1167
        %v1776 = vunpack.c.h.b16 %v1167
        %v1777 = vunpack.c.l.b16 %v1168
        %v1778 = vunpack.c.h.b16 %v1168
        %v1779 = vunpack.c.l.b16 %v1169
        %v1780 = vunpack.c.h.b16 %v1169
        %v1781 = vunpack.c.l.b16 %v1170
        %v1782 = vunpack.c.h.b16 %v1170
        %v1783 = vunpack.c.l.b16 %v1171
        %v1784 = vunpack.c.h.b16 %v1171
        %v1785 = vunpack.c.l.b16 %v1172
        %v1786 = vunpack.c.h.b16 %v1172
        %v1787 = vunpack.c.l.b16 %v1173
        %v1788 = vunpack.c.h.b16 %v1173
        %v1789 = vunpack.c.l.b16 %v1174
        %v1790 = vunpack.c.h.b16 %v1174
        %v1791 = vunpack.c.l.b16 %v1175
        %v1792 = vunpack.c.h.b16 %v1175
        %v1793 = vunpack.c.l.b16 %v1176
        %v1794 = vunpack.c.h.b16 %v1176
        %v1795 = vunpack.c.l.b16 %v1177
        %v1796 = vunpack.c.h.b16 %v1177
        %v1797 = vunpack.c.l.b16 %v1178
        %v1798 = vunpack.c.h.b16 %v1178
        %v1799 = vunpack.c.l.b16 %v1179
        %v1800 = vunpack.c.h.b16 %v1179
        %v1801 = vunpack.c.l.b16 %v1180
        %v1802 = vunpack.c.h.b16 %v1180
        %v1803 = vunpack.c.l.b16 %v1181
        %v1804 = vunpack.c.h.b16 %v1181
        %v1805 = vunpack.c.l.b16 %v1182
        %v1806 = vunpack.c.h.b16 %v1182
        %v1807 = vunpack.c.l.b16 %v1183
        %v1808 = vunpack.c.h.b16 %v1183
        %v1809 = vunpack.c.l.b16 %v1184
        %v1810 = vunpack.c.h.b16 %v1184
        %v1811 = vunpack.c.l.b16 %v1185
        %v1812 = vunpack.c.h.b16 %v1185
        %v1813 = vunpack.c.l.b16 %v1186
        %v1814 = vunpack.c.h.b16 %v1186
        %v1815 = vunpack.c.l.b16 %v1187
        %v1816 = vunpack.c.h.b16 %v1187
        %v1817 = vunpack.c.l.b16 %v1188
        %v1818 = vunpack.c.h.b16 %v1188
        %v1819 = vunpack.c.l.b16 %v1189
        %v1820 = vunpack.c.h.b16 %v1189
        %v1821 = vunpack.c.l.b16 %v1190
        %v1822 = vunpack.c.h.b16 %v1190
        %v1823 = vunpack.c.l.b16 %v1191
        %v1824 = vunpack.c.h.b16 %v1191
        %v1825 = vunpack.c.l.b16 %v1192
        %v1826 = vunpack.c.h.b16 %v1192
        %v1827 = vunpack.c.l.b16 %v1193
        %v1828 = vunpack.c.h.b16 %v1193
        %v1829 = vunpack.c.l.b16 %v1194
        %v1830 = vunpack.c.h.b16 %v1194
        %v1831 = vunpack.c.l.b16 %v1195
        %v1832 = vunpack.c.h.b16 %v1195
        %v1833 = vunpack.c.l.b16 %v1196
        %v1834 = vunpack.c.h.b16 %v1196
        %v1835 = vunpack.c.l.b16 %v1197
        %v1836 = vunpack.c.h.b16 %v1197
        %v1837 = vunpack.c.l.b16 %v1198
        %v1838 = vunpack.c.h.b16 %v1198
        %v1839 = vunpack.c.l.b16 %v1199
        %v1840 = vunpack.c.h.b16 %v1199
        %v1841 = vunpack.c.l.b16 %v1200
        %v1842 = vunpack.c.h.b16 %v1200
        %v1843 = vunpack.c.l.b16 %v1201
        %v1844 = vunpack.c.h.b16 %v1201
        %v1845 = vunpack.c.l.b16 %v1202
        %v1846 = vunpack.c.h.b16 %v1202
        %v1847 = vunpack.c.l.b16 %v1203
        %v1848 = vunpack.c.h.b16 %v1203
        %v1849 = vunpack.c.l.b16 %v1204
        %v1850 = vunpack.c.h.b16 %v1204
        %v1851 = vunpack.c.l.b16 %v1205
        %v1852 = vunpack.c.h.b16 %v1205
        %v1853 = vunpack.c.l.b16 %v1206
        %v1854 = vunpack.c.h.b16 %v1206
        %v1855 = vunpack.c.l.b16 %v1207
        %v1856 = vunpack.c.h.b16 %v1207
        %v1857 = vunpack.c.l.b16 %v1208
        %v1858 = vunpack.c.h.b16 %v1208
        %v1859 = vunpack.c.l.b16 %v1209
        %v1860 = vunpack.c.h.b16 %v1209
        %v1861 = vunpack.c.l.b16 %v1210
        %v1862 = vunpack.c.h.b16 %v1210
        %v1863 = vunpack.c.l.b16 %v1211
        %v1864 = vunpack.c.h.b16 %v1211
        %v1865 = vunpack.c.l.b16 %v1212
        %v1866 = vunpack.c.h.b16 %v1212
        %v1867 = vunpack.c.l.b16 %v1213
        %v1868 = vunpack.c.h.b16 %v1213
        %v1869 = vunpack.c.l.b16 %v1214
        %v1870 = vunpack.c.h.b16 %v1214
        %v1871 = vunpack.c.l.b16 %v1215
        %v1872 = vunpack.c.h.b16 %v1215
        %v1873 = vunpack.c.l.b16 %v1216
        %v1874 = vunpack.c.h.b16 %v1216
        %v1875 = vunpack.c.l.b16 %v1217
        %v1876 = vunpack.c.h.b16 %v1217
        %v1877 = vunpack.c.l.b16 %v1218
        %v1878 = vunpack.c.h.b16 %v1218
        %v1879 = vunpack.c.l.b16 %v1219
        %v1880 = vunpack.c.h.b16 %v1219
        %v1881 = vunpack.c.l.b16 %v1220
        %v1882 = vunpack.c.h.b16 %v1220
        %v1883 = vunpack.c.l.b16 %v1221
        %v1884 = vunpack.c.h.b16 %v1221
        %v1885 = vunpack.c.l.b16 %v1222
        %v1886 = vunpack.c.h.b16 %v1222
        %v1887 = vunpack.c.l.b16 %v1223
        %v1888 = vunpack.c.h.b16 %v1223
        %v1889 = vunpack.c.l.b16 %v1224
        %v1890 = vunpack.c.h.b16 %v1224
        %v1891 = vunpack.c.l.b16 %v1225
        %v1892 = vunpack.c.h.b16 %v1225
        %v1893 = vunpack.c.l.b16 %v1226
        %v1894 = vunpack.c.h.b16 %v1226
        %v1895 = vunpack.c.l.b16 %v1227
        %v1896 = vunpack.c.h.b16 %v1227
        %v1897 = vunpack.c.l.b16 %v1228
        %v1898 = vunpack.c.h.b16 %v1228
        %v1899 = vunpack.c.l.b16 %v1229
        %v1900 = vunpack.c.h.b16 %v1229
        %v1901 = vunpack.c.l.b16 %v1230
        %v1902 = vunpack.c.h.b16 %v1230
        %v1903 = vunpack.c.l.b16 %v1231
        %v1904 = vunpack.c.h.b16 %v1231
        %v1905 = vunpack.c.l.b16 %v1232
        %v1906 = vunpack.c.h.b16 %v1232
        %v1907 = vunpack.c.l.b16 %v1233
        %v1908 = vunpack.c.h.b16 %v1233
        %v1909 = vunpack.c.l.b16 %v1234
        %v1910 = vunpack.c.h.b16 %v1234
        %v1911 = vunpack.c.l.b16 %v1235
        %v1912 = vunpack.c.h.b16 %v1235
        %v1913 = vunpack.c.l.b16 %v1236
        %v1914 = vunpack.c.h.b16 %v1236
        %v1915 = vunpack.c.l.b16 %v1237
        %v1916 = vunpack.c.h.b16 %v1237
        %v1917 = vunpack.c.l.b16 %v1238
        %v1918 = vunpack.c.h.b16 %v1238
        %v1919 = vunpack.c.l.b16 %v1239
        %v1920 = vunpack.c.h.b16 %v1239
        %v1921 = vunpack.c.l.b16 %v1240
        %v1922 = vunpack.c.h.b16 %v1240
        %v1923 = vunpack.c.l.b16 %v1241
        %v1924 = vunpack.c.h.b16 %v1241
        %v1925 = vunpack.c.l.b16 %v1242
        %v1926 = vunpack.c.h.b16 %v1242
        %v1927 = vunpack.c.l.b16 %v1243
        %v1928 = vunpack.c.h.b16 %v1243
        %v1929 = vunpack.c.l.b16 %v1244
        %v1930 = vunpack.c.h.b16 %v1244
        %v1931 = vunpack.c.l.b16 %v1245
        %v1932 = vunpack.c.h.b16 %v1245
        %v1933 = vunpack.c.l.b16 %v1246
        %v1934 = vunpack.c.h.b16 %v1246
        %v1935 = vunpack.c.l.b16 %v1247
        %v1936 = vunpack.c.h.b16 %v1247
        %v1937 = vunpack.c.l.b16 %v1248
        %v1938 = vunpack.c.h.b16 %v1248
        %v1939 = vunpack.c.l.b16 %v1249
        %v1940 = vunpack.c.h.b16 %v1249
        %v1941 = vunpack.c.l.b16 %v1250
        %v1942 = vunpack.c.h.b16 %v1250
        %v1943 = vunpack.c.l.b16 %v1251
        %v1944 = vunpack.c.h.b16 %v1251
        %v1945 = vunpack.c.l.b16 %v1252
        %v1946 = vunpack.c.h.b16 %v1252
        %v1947 = vunpack.c.l.b16 %v1253
        %v1948 = vunpack.c.h.b16 %v1253
        %v1949 = vunpack.c.l.b16 %v1254
        %v1950 = vunpack.c.h.b16 %v1254
        %v1951 = vunpack.c.l.b16 %v1255
        %v1952 = vunpack.c.h.b16 %v1255
        %v1953 = vunpack.c.l.b16 %v1256
        %v1954 = vunpack.c.h.b16 %v1256
        %v1955 = vunpack.c.l.b16 %v1257
        %v1956 = vunpack.c.h.b16 %v1257
        %v1957 = vunpack.c.l.b16 %v1258
        %v1958 = vunpack.c.h.b16 %v1258
        %v1959 = vunpack.c.l.b16 %v1259
        %v1960 = vunpack.c.h.b16 %v1259
        %v1961 = vunpack.c.l.b16 %v1260
        %v1962 = vunpack.c.h.b16 %v1260
        %v1963 = vunpack.c.l.b16 %v1261
        %v1964 = vunpack.c.h.b16 %v1261
        %v1965 = vunpack.c.l.b16 %v1262
        %v1966 = vunpack.c.h.b16 %v1262
        %v1967 = vunpack.c.l.b16 %v1263
        %v1968 = vunpack.c.h.b16 %v1263
        %v1969 = vunpack.c.l.b16 %v1264
        %v1970 = vunpack.c.h.b16 %v1264
        %v1971 = vunpack.c.l.b16 %v1265
        %v1972 = vunpack.c.h.b16 %v1265
        %v1973 = vunpack.c.l.b16 %v1266
        %v1974 = vunpack.c.h.b16 %v1266
        %v1975 = vunpack.c.l.b16 %v1267
        %v1976 = vunpack.c.h.b16 %v1267
        %v1977 = vunpack.c.l.b16 %v1268
        %v1978 = vunpack.c.h.b16 %v1268
        %v1979 = vunpack.c.l.b16 %v1269
        %v1980 = vunpack.c.h.b16 %v1269
        %v1981 = vunpack.c.l.b16 %v1270
        %v1982 = vunpack.c.h.b16 %v1270
        %v1983 = vunpack.c.l.b16 %v1271
        %v1984 = vunpack.c.h.b16 %v1271
        %v1985 = vunpack.c.l.b16 %v1272
        %v1986 = vunpack.c.h.b16 %v1272
        %v1987 = vunpack.c.l.b16 %v1273
        %v1988 = vunpack.c.h.b16 %v1273
        %v1989 = vunpack.c.l.b16 %v1274
        %v1990 = vunpack.c.h.b16 %v1274
        %v1991 = vunpack.c.l.b16 %v1275
        %v1992 = vunpack.c.h.b16 %v1275
        %v1993 = vunpack.c.l.b16 %v1276
        %v1994 = vunpack.c.h.b16 %v1276
        %v1995 = vunpack.c.l.b16 %v1277
        %v1996 = vunpack.c.h.b16 %v1277
        %v1997 = vunpack.c.l.b16 %v1278
        %v1998 = vunpack.c.h.b16 %v1278
        %v1999 = vunpack.c.l.b16 %v1279
        %v2000 = vunpack.c.h.b16 %v1279
        %v2001 = vunpack.c.l.b16 %v1280
        %v2002 = vunpack.c.h.b16 %v1280
        %v2003 = vunpack.c.l.b16 %v1281
        %v2004 = vunpack.c.h.b16 %v1281
        %v2005 = vunpack.c.l.b16 %v1282
        %v2006 = vunpack.c.h.b16 %v1282
        %v2007 = vunpack.c.l.b16 %v1283
        %v2008 = vunpack.c.h.b16 %v1283
        %v2009 = vunpack.c.l.b16 %v1284
        %v2010 = vunpack.c.h.b16 %v1284
        %v2011 = vunpack.c.l.b16 %v1285
        %v2012 = vunpack.c.h.b16 %v1285
        %v2013 = vunpack.c.l.b16 %v1286
        %v2014 = vunpack.c.h.b16 %v1286
        %v2015 = vunpack.c.l.b16 %v1287
        %v2016 = vunpack.c.h.b16 %v1287
        %v2017 = vunpack.c.l.b16 %v1288
        %v2018 = vunpack.c.h.b16 %v1288
        %v2019 = vunpack.c.l.b16 %v1289
        %v2020 = vunpack.c.h.b16 %v1289
        %v2021 = vunpack.c.l.b16 %v1290
        %v2022 = vunpack.c.h.b16 %v1290
        %v2023 = vunpack.c.l.b16 %v1291
        %v2024 = vunpack.c.h.b16 %v1291
        %v2025 = vunpack.c.l.b16 %v1292
        %v2026 = vunpack.c.h.b16 %v1292
        %v2027 = vunpack.c.l.b16 %v1293
        %v2028 = vunpack.c.h.b16 %v1293
        %v2029 = vunpack.c.l.b16 %v1294
        %v2030 = vunpack.c.h.b16 %v1294
        %v2031 = vunpack.c.l.b16 %v1295
        %v2032 = vunpack.c.h.b16 %v1295
        %v2033 = vunpack.c.l.b16 %v1296
        %v2034 = vunpack.c.h.b16 %v1296
        %v2035 = vunpack.c.l.b16 %v1297
        %v2036 = vunpack.c.h.b16 %v1297
        %v2037 = vunpack.c.l.b16 %v1298
        %v2038 = vunpack.c.h.b16 %v1298
        %v2039 = vunpack.c.l.b16 %v1299
        %v2040 = vunpack.c.h.b16 %v1299
        %v2041 = vunpack.c.l.b16 %v1300
        %v2042 = vunpack.c.h.b16 %v1300
        %v2043 = vunpack.c.l.b16 %v1301
        %v2044 = vunpack.c.h.b16 %v1301
        %v2045 = vunpack.c.l.b16 %v1302
        %v2046 = vunpack.c.h.b16 %v1302
        %v2047 = vunpack.c.l.b16 %v1303
        %v2048 = vunpack.c.h.b16 %v1303
        %v2049 = vunpack.c.l.b16 %v1304
        %v2050 = vunpack.c.h.b16 %v1304
        %v2051 = vunpack.c.l.b16 %v1305
        %v2052 = vunpack.c.h.b16 %v1305
        %v2053 = vunpack.c.l.b16 %v1306
        %v2054 = vunpack.c.h.b16 %v1306
        %v2055 = vunpack.c.l.b16 %v1307
        %v2056 = vunpack.c.h.b16 %v1307
        %v2057 = vunpack.c.l.b16 %v1308
        %v2058 = vunpack.c.h.b16 %v1308
        %v2059 = vunpack.c.l.b16 %v1309
        %v2060 = vunpack.c.h.b16 %v1309
        %v2061 = vunpack.c.l.b16 %v1310
        %v2062 = vunpack.c.h.b16 %v1310
        %v2063 = vunpack.c.l.b16 %v1311
        %v2064 = vunpack.c.h.b16 %v1311
        %v2065 = vunpack.c.l.b16 %v1312
        %v2066 = vunpack.c.h.b16 %v1312
        %v2067 = vunpack.c.l.b16 %v1313
        %v2068 = vunpack.c.h.b16 %v1313
        %v2069 = vunpack.c.l.b16 %v1314
        %v2070 = vunpack.c.h.b16 %v1314
        %v2071 = vunpack.c.l.b16 %v1315
        %v2072 = vunpack.c.h.b16 %v1315
        %v2073 = vunpack.c.l.b16 %v1316
        %v2074 = vunpack.c.h.b16 %v1316
        %v2075 = vunpack.c.l.b16 %v1317
        %v2076 = vunpack.c.h.b16 %v1317
        %v2077 = vunpack.c.l.b16 %v1318
        %v2078 = vunpack.c.h.b16 %v1318
        %v2079 = vunpack.c.l.b16 %v1319
        %v2080 = vunpack.c.h.b16 %v1319
        %v2081 = vunpack.c.l.b16 %v1320
        %v2082 = vunpack.c.h.b16 %v1320
        %v2083 = vunpack.c.l.b16 %v1321
        %v2084 = vunpack.c.h.b16 %v1321
        %v2085 = vunpack.c.l.b16 %v1322
        %v2086 = vunpack.c.h.b16 %v1322
        %v2087 = vunpack.c.l.b16 %v1323
        %v2088 = vunpack.c.h.b16 %v1323
        %v2089 = vunpack.c.l.b16 %v1324
        %v2090 = vunpack.c.h.b16 %v1324
        %v2091 = vunpack.c.l.b16 %v1325
        %v2092 = vunpack.c.h.b16 %v1325
        %v2093 = vunpack.c.l.b16 %v1326
        %v2094 = vunpack.c.h.b16 %v1326
        %v2095 = vpack.c.b16 %v1591, %v1583
        %v2096 = vpack.c.b16 %v1592, %v1584
        %v2097 = vpack.c.b16 %v1593, %v1585
        %v2098 = vpack.c.b16 %v1594, %v1586
        %v2099 = vpack.c.b16 %v1595, %v1587
        %v2100 = vpack.c.b16 %v1596, %v1588
        %v2101 = vpack.c.b16 %v1597, %v1589
        %v2102 = vpack.c.b16 %v1598, %v1590
        %v2103 = vpack.c.b16 %v1607, %v1599
        %v2104 = vpack.c.b16 %v1608, %v1600
        %v2105 = vpack.c.b16 %v1609, %v1601
        %v2106 = vpack.c.b16 %v1610, %v1602
        %v2107 = vpack.c.b16 %v1611, %v1603
        %v2108 = vpack.c.b16 %v1612, %v1604
        %v2109 = vpack.c.b16 %v1613, %v1605
        %v2110 = vpack.c.b16 %v1614, %v1606
        %v2111 = vpack.c.b16 %v1623, %v1615
        %v2112 = vpack.c.b16 %v1624, %v1616
        %v2113 = vpack.c.b16 %v1625, %v1617
        %v2114 = vpack.c.b16 %v1626, %v1618
        %v2115 = vpack.c.b16 %v1627, %v1619
        %v2116 = vpack.c.b16 %v1628, %v1620
        %v2117 = vpack.c.b16 %v1629, %v1621
        %v2118 = vpack.c.b16 %v1630, %v1622
        %v2119 = vpack.c.b16 %v1639, %v1631
        %v2120 = vpack.c.b16 %v1640, %v1632
        %v2121 = vpack.c.b16 %v1641, %v1633
        %v2122 = vpack.c.b16 %v1642, %v1634
        %v2123 = vpack.c.b16 %v1643, %v1635
        %v2124 = vpack.c.b16 %v1644, %v1636
        %v2125 = vpack.c.b16 %v1645, %v1637
        %v2126 = vpack.c.b16 %v1646, %v1638
        %v2127 = vpack.c.b16 %v1655, %v1647
        %v2128 = vpack.c.b16 %v1656, %v1648
        %v2129 = vpack.c.b16 %v1657, %v1649
        %v2130 = vpack.c.b16 %v1658, %v1650
        %v2131 = vpack.c.b16 %v1659, %v1651
        %v2132 = vpack.c.b16 %v1660, %v1652
        %v2133 = vpack.c.b16 %v1661, %v1653
        %v2134 = vpack.c.b16 %v1662, %v1654
        %v2135 = vpack.c.b16 %v1671, %v1663
        %v2136 = vpack.c.b16 %v1672, %v1664
        %v2137 = vpack.c.b16 %v1673, %v1665
        %v2138 = vpack.c.b16 %v1674, %v1666
        %v2139 = vpack.c.b16 %v1675, %v1667
        %v2140 = vpack.c.b16 %v1676, %v1668
        %v2141 = vpack.c.b16 %v1677, %v1669
        %v2142 = vpack.c.b16 %v1678, %v1670
        %v2143 = vpack.c.b16 %v1687, %v1679
        %v2144 = vpack.c.b16 %v1688, %v1680
        %v2145 = vpack.c.b16 %v1689, %v1681
        %v2146 = vpack.c.b16 %v1690, %v1682
        %v2147 = vpack.c.b16 %v1691, %v1683
        %v2148 = vpack.c.b16 %v1692, %v1684
        %v2149 = vpack.c.b16 %v1693, %v1685
        %v2150 = vpack.c.b16 %v1694, %v1686
        %v2151 = vpack.c.b16 %v1703, %v1695
        %v2152 = vpack.c.b16 %v1704, %v1696
        %v2153 = vpack.c.b16 %v1705, %v1697
        %v2154 = vpack.c.b16 %v1706, %v1698
        %v2155 = vpack.c.b16 %v1707, %v1699
        %v2156 = vpack.c.b16 %v1708, %v1700
        %v2157 = vpack.c.b16 %v1709, %v1701
        %v2158 = vpack.c.b16 %v1710, %v1702
        %v2159 = vpack.c.b16 %v1719, %v1711
        %v2160 = vpack.c.b16 %v1720, %v1712
        %v2161 = vpack.c.b16 %v1721, %v1713
        %v2162 = vpack.c.b16 %v1722, %v1714
        %v2163 = vpack.c.b16 %v1723, %v1715
        %v2164 = vpack.c.b16 %v1724, %v1716
        %v2165 = vpack.c.b16 %v1725, %v1717
        %v2166 = vpack.c.b16 %v1726, %v1718
        %v2167 = vpack.c.b16 %v1735, %v1727
        %v2168 = vpack.c.b16 %v1736, %v1728
        %v2169 = vpack.c.b16 %v1737, %v1729
        %v2170 = vpack.c.b16 %v1738, %v1730
        %v2171 = vpack.c.b16 %v1739, %v1731
        %v2172 = vpack.c.b16 %v1740, %v1732
        %v2173 = vpack.c.b16 %v1741, %v1733
        %v2174 = vpack.c.b16 %v1742, %v1734
        %v2175 = vpack.c.b16 %v1751, %v1743
        %v2176 = vpack.c.b16 %v1752, %v1744
        %v2177 = vpack.c.b16 %v1753, %v1745
        %v2178 = vpack.c.b16 %v1754, %v1746
        %v2179 = vpack.c.b16 %v1755, %v1747
        %v2180 = vpack.c.b16 %v1756, %v1748
        %v2181 = vpack.c.b16 %v1757, %v1749
        %v2182 = vpack.c.b16 %v1758, %v1750
        %v2183 = vpack.c.b16 %v1767, %v1759
        %v2184 = vpack.c.b16 %v1768, %v1760
        %v2185 = vpack.c.b16 %v1769, %v1761
        %v2186 = vpack.c.b16 %v1770, %v1762
        %v2187 = vpack.c.b16 %v1771, %v1763
        %v2188 = vpack.c.b16 %v1772, %v1764
        %v2189 = vpack.c.b16 %v1773, %v1765
        %v2190 = vpack.c.b16 %v1774, %v1766
        %v2191 = vpack.c.b16 %v1783, %v1775
        %v2192 = vpack.c.b16 %v1784, %v1776
        %v2193 = vpack.c.b16 %v1785, %v1777
        %v2194 = vpack.c.b16 %v1786, %v1778
        %v2195 = vpack.c.b16 %v1787, %v1779
        %v2196 = vpack.c.b16 %v1788, %v1780
        %v2197 = vpack.c.b16 %v1789, %v1781
        %v2198 = vpack.c.b16 %v1790, %v1782
        %v2199 = vpack.c.b16 %v1799, %v1791
        %v2200 = vpack.c.b16 %v1800, %v1792
        %v2201 = vpack.c.b16 %v1801, %v1793
        %v2202 = vpack.c.b16 %v1802, %v1794
        %v2203 = vpack.c.b16 %v1803, %v1795
        %v2204 = vpack.c.b16 %v1804, %v1796
        %v2205 = vpack.c.b16 %v1805, %v1797
        %v2206 = vpack.c.b16 %v1806, %v1798
        %v2207 = vpack.c.b16 %v1815, %v1807
        %v2208 = vpack.c.b16 %v1816, %v1808
        %v2209 = vpack.c.b16 %v1817, %v1809
        %v2210 = vpack.c.b16 %v1818, %v1810
        %v2211 = vpack.c.b16 %v1819, %v1811
        %v2212 = vpack.c.b16 %v1820, %v1812
        %v2213 = vpack.c.b16 %v1821, %v1813
        %v2214 = vpack.c.b16 %v1822, %v1814
        %v2215 = vpack.c.b16 %v1831, %v1823
        %v2216 = vpack.c.b16 %v1832, %v1824
        %v2217 = vpack.c.b16 %v1833, %v1825
        %v2218 = vpack.c.b16 %v1834, %v1826
        %v2219 = vpack.c.b16 %v1835, %v1827
        %v2220 = vpack.c.b16 %v1836, %v1828
        %v2221 = vpack.c.b16 %v1837, %v1829
        %v2222 = vpack.c.b16 %v1838, %v1830
        %v2223 = vpack.c.b16 %v1847, %v1839
        %v2224 = vpack.c.b16 %v1848, %v1840
        %v2225 = vpack.c.b16 %v1849, %v1841
        %v2226 = vpack.c.b16 %v1850, %v1842
        %v2227 = vpack.c.b16 %v1851, %v1843
        %v2228 = vpack.c.b16 %v1852, %v1844
        %v2229 = vpack.c.b16 %v1853, %v1845
        %v2230 = vpack.c.b16 %v1854, %v1846
        %v2231 = vpack.c.b16 %v1863, %v1855
        %v2232 = vpack.c.b16 %v1864, %v1856
        %v2233 = vpack.c.b16 %v1865, %v1857
        %v2234 = vpack.c.b16 %v1866, %v1858
        %v2235 = vpack.c.b16 %v1867, %v1859
        %v2236 = vpack.c.b16 %v1868, %v1860
        %v2237 = vpack.c.b16 %v1869, %v1861
        %v2238 = vpack.c.b16 %v1870, %v1862
        %v2239 = vpack.c.b16 %v1879, %v1871
        %v2240 = vpack.c.b16 %v1880, %v1872
        %v2241 = vpack.c.b16 %v1881, %v1873
        %v2242 = vpack.c.b16 %v1882, %v1874
        %v2243 = vpack.c.b16 %v1883, %v1875
        %v2244 = vpack.c.b16 %v1884, %v1876
        %v2245 = vpack.c.b16 %v1885, %v1877
        %v2246 = vpack.c.b16 %v1886, %v1878
        %v2247 = vpack.c.b16 %v1895, %v1887
        %v2248 = vpack.c.b16 %v1896, %v1888
        %v2249 = vpack.c.b16 %v1897, %v1889
        %v2250 = vpack.c.b16 %v1898, %v1890
        %v2251 = vpack.c.b16 %v1899, %v1891
        %v2252 = vpack.c.b16 %v1900, %v1892
        %v2253 = vpack.c.b16 %v1901, %v1893
        %v2254 = vpack.c.b16 %v1902, %v1894
        %v2255 = vpack.c.b16 %v1911, %v1903
        %v2256 = vpack.c.b16 %v1912, %v1904
        %v2257 = vpack.c.b16 %v1913, %v1905
        %v2258 = vpack.c.b16 %v1914, %v1906
        %v2259 = vpack.c.b16 %v1915, %v1907
        %v2260 = vpack.c.b16 %v1916, %v1908
        %v2261 = vpack.c.b16 %v1917, %v1909
        %v2262 = vpack.c.b16 %v1918, %v1910
        %v2263 = vpack.c.b16 %v1927, %v1919
        %v2264 = vpack.c.b16 %v1928, %v1920
        %v2265 = vpack.c.b16 %v1929, %v1921
        %v2266 = vpack.c.b16 %v1930, %v1922
        %v2267 = vpack.c.b16 %v1931, %v1923
        %v2268 = vpack.c.b16 %v1932, %v1924
        %v2269 = vpack.c.b16 %v1933, %v1925
        %v2270 = vpack.c.b16 %v1934, %v1926
        %v2271 = vpack.c.b16 %v1943, %v1935
        %v2272 = vpack.c.b16 %v1944, %v1936
        %v2273 = vpack.c.b16 %v1945, %v1937
        %v2274 = vpack.c.b16 %v1946, %v1938
        %v2275 = vpack.c.b16 %v1947, %v1939
        %v2276 = vpack.c.b16 %v1948, %v1940
        %v2277 = vpack.c.b16 %v1949, %v1941
        %v2278 = vpack.c.b16 %v1950, %v1942
        %v2279 = vpack.c.b16 %v1959, %v1951
        %v2280 = vpack.c.b16 %v1960, %v1952
        %v2281 = vpack.c.b16 %v1961, %v1953
        %v2282 = vpack.c.b16 %v1962, %v1954
        %v2283 = vpack.c.b16 %v1963, %v1955
        %v2284 = vpack.c.b16 %v1964, %v1956
        %v2285 = vpack.c.b16 %v1965, %v1957
        %v2286 = vpack.c.b16 %v1966, %v1958
        %v2287 = vpack.c.b16 %v1975, %v1967
        %v2288 = vpack.c.b16 %v1976, %v1968
        %v2289 = vpack.c.b16 %v1977, %v1969
        %v2290 = vpack.c.b16 %v1978, %v1970
        %v2291 = vpack.c.b16 %v1979, %v1971
        %v2292 = vpack.c.b16 %v1980, %v1972
        %v2293 = vpack.c.b16 %v1981, %v1973
        %v2294 = vpack.c.b16 %v1982, %v1974
        %v2295 = vpack.c.b16 %v1991, %v1983
        %v2296 = vpack.c.b16 %v1992, %v1984
        %v2297 = vpack.c.b16 %v1993, %v1985
        %v2298 = vpack.c.b16 %v1994, %v1986
        %v2299 = vpack.c.b16 %v1995, %v1987
        %v2300 = vpack.c.b16 %v1996, %v1988
        %v2301 = vpack.c.b16 %v1997, %v1989
        %v2302 = vpack.c.b16 %v1998, %v1990
        %v2303 = vpack.c.b16 %v2007, %v1999
        %v2304 = vpack.c.b16 %v2008, %v2000
        %v2305 = vpack.c.b16 %v2009, %v2001
        %v2306 = vpack.c.b16 %v2010, %v2002
        %v2307 = vpack.c.b16 %v2011, %v2003
        %v2308 = vpack.c.b16 %v2012, %v2004
        %v2309 = vpack.c.b16 %v2013, %v2005
        %v2310 = vpack.c.b16 %v2014, %v2006
        %v2311 = vpack.c.b16 %v2023, %v2015
        %v2312 = vpack.c.b16 %v2024, %v2016
        %v2313 = vpack.c.b16 %v2025, %v2017
        %v2314 = vpack.c.b16 %v2026, %v2018
        %v2315 = vpack.c.b16 %v2027, %v2019
        %v2316 = vpack.c.b16 %v2028, %v2020
        %v2317 = vpack.c.b16 %v2029, %v2021
        %v2318 = vpack.c.b16 %v2030, %v2022
        %v2319 = vpack.c.b16 %v2039, %v2031
        %v2320 = vpack.c.b16 %v2040, %v2032
        %v2321 = vpack.c.b16 %v2041, %v2033
        %v2322 = vpack.c.b16 %v2042, %v2034
        %v2323 = vpack.c.b16 %v2043, %v2035
        %v2324 = vpack.c.b16 %v2044, %v2036
        %v2325 = vpack.c.b16 %v2045, %v2037
        %v2326 = vpack.c.b16 %v2046, %v2038
        %v2327 = vpack.c.b16 %v2055, %v2047
        %v2328 = vpack.c.b16 %v2056, %v2048
        %v2329 = vpack.c.b16 %v2057, %v2049
        %v2330 = vpack.c.b16 %v2058, %v2050
        %v2331 = vpack.c.b16 %v2059, %v2051
        %v2332 = vpack.c.b16 %v2060, %v2052
        %v2333 = vpack.c.b16 %v2061, %v2053
        %v2334 = vpack.c.b16 %v2062, %v2054
        %v2335 = vpack.c.b16 %v2071, %v2063
        %v2336 = vpack.c.b16 %v2072, %v2064
        %v2337 = vpack.c.b16 %v2073, %v2065
        %v2338 = vpack.c.b16 %v2074, %v2066
        %v2339 = vpack.c.b16 %v2075, %v2067
        %v2340 = vpack.c.b16 %v2076, %v2068
        %v2341 = vpack.c.b16 %v2077, %v2069
        %v2342 = vpack.c.b16 %v2078, %v2070
        %v2343 = vpack.c.b16 %v2087, %v2079
        %v2344 = vpack.c.b16 %v2088, %v2080
        %v2345 = vpack.c.b16 %v2089, %v2081
        %v2346 = vpack.c.b16 %v2090, %v2082
        %v2347 = vpack.c.b16 %v2091, %v2083
        %v2348 = vpack.c.b16 %v2092, %v2084
        %v2349 = vpack.c.b16 %v2093, %v2085
        %v2350 = vpack.c.b16 %v2094, %v2086
        %2607 = vmatprep.subr.bf16.mxu0 %v2152
        %2608 = vmatpush1.bf16.msra.mxu0 %v2151
        %2609 = vmatprep.subr.bf16.mxu0 %v2144
        %2610 = vmatpush1.bf16.msra.mxu0 %v2143
        %2611 = vmatprep.subr.bf16.mxu0 %v2136
        %2612 = vmatpush1.bf16.msra.mxu0 %v2135
        %2613 = vmatprep.subr.bf16.mxu0 %v2128
        %2614 = vmatpush1.bf16.msra.mxu0 %v2127
        %2615 = vmatprep.subr.bf16.mxu0 %v2120
        %2616 = vmatpush1.bf16.msra.mxu0 %v2119
        %2617 = vmatprep.subr.bf16.mxu0 %v2112
        %2618 = vmatpush1.bf16.msra.mxu0 %v2111
        %2619 = vmatprep.subr.bf16.mxu0 %v2104
        %2620 = vmatpush1.bf16.msra.mxu0 %v2103
        %2621 = vmatprep.subr.bf16.mxu0 %v2096
        %2622 = vmatpush1.bf16.msra.mxu0 %v2095
        %2623 = vmatprep.subr.bf16.mxu0 %v2216
        %2624 = vmatpush2.bf16.msra.mxu0 %v2215
        %2625 = vmatprep.subr.bf16.mxu0 %v2208
        %2626 = vmatpush2.bf16.msra.mxu0 %v2207
        %2627 = vmatprep.subr.bf16.mxu0 %v2200
        %2628 = vmatpush2.bf16.msra.mxu0 %v2199
        %2629 = vmatprep.subr.bf16.mxu0 %v2192
        %2630 = vmatpush2.bf16.msra.mxu0 %v2191
        %2631 = vmatprep.subr.bf16.mxu0 %v2184
        %2632 = vmatpush2.bf16.msra.mxu0 %v2183
        %2633 = vmatprep.subr.bf16.mxu0 %v2176
        %2634 = vmatpush2.bf16.msra.mxu0 %v2175
        %2635 = vmatprep.subr.bf16.mxu0 %v2168
        %2636 = vmatpush2.bf16.msra.mxu0 %v2167
        %2637 = vmatprep.subr.bf16.mxu0 %v2160
        %2638 = vmatpush2.bf16.msra.mxu0 %v2159
        %2639 = vmatprep.mubr.bf16.mxu0 %v1056
        %2640 = vmatmul.mubr.bf16.gmra.mxu0 %v1055
        %v2641 = vpop.f32.mrf.mxu0
        %v2642 = vadd.f32 0.0, %v2641
        %v2643 = vpop.f32.mrf.mxu0
        %v2644 = vadd.f32 0.0, %v2643
        %v2645 = vpop.f32.mrf.mxu0
        %v2646 = vadd.f32 0.0, %v2645
        %v2647 = vpop.f32.mrf.mxu0
        %v2648 = vadd.f32 0.0, %v2647
        %2649 = vmatprep.mubr.bf16.mxu0 %v1060
        %2650 = vmatmul.mubr.bf16.gmra.mxu0 %v1059
        %v2651 = vpop.f32.mrf.mxu0
        %v2652 = vadd.f32 0.0, %v2651
        %v2653 = vpop.f32.mrf.mxu0
        %v2654 = vadd.f32 0.0, %v2653
        %v2655 = vpop.f32.mrf.mxu0
        %v2656 = vpop.f32.mrf.mxu0
        %2657 = vdwg.mxu0
        %2658 = vmatprep.subr.bf16.mxu0 %v2280
        %2659 = vmatpush1.bf16.msra.mxu0 %v2279
        %2660 = vmatprep.subr.bf16.mxu0 %v2272
        %2661 = vmatpush1.bf16.msra.mxu0 %v2271
        %2662 = vmatprep.subr.bf16.mxu0 %v2264
        %2663 = vmatpush1.bf16.msra.mxu0 %v2263
        %2664 = vmatprep.subr.bf16.mxu0 %v2256
        %2665 = vmatpush1.bf16.msra.mxu0 %v2255
        %2666 = vmatprep.subr.bf16.mxu0 %v2248
        %2667 = vmatpush1.bf16.msra.mxu0 %v2247
        %2668 = vmatprep.subr.bf16.mxu0 %v2240
        %2669 = vmatpush1.bf16.msra.mxu0 %v2239
        %2670 = vmatprep.subr.bf16.mxu0 %v2232
        %2671 = vmatpush1.bf16.msra.mxu0 %v2231
        %2672 = vmatprep.subr.bf16.mxu0 %v2224
        %2673 = vmatpush1.bf16.msra.mxu0 %v2223
        %2674 = vmatprep.subr.bf16.mxu0 %v2344
        %2675 = vmatpush2.bf16.msra.mxu0 %v2343
        %2676 = vmatprep.subr.bf16.mxu0 %v2336
        %2677 = vmatpush2.bf16.msra.mxu0 %v2335
        %2678 = vmatprep.subr.bf16.mxu0 %v2328
        %2679 = vmatpush2.bf16.msra.mxu0 %v2327
        %2680 = vmatprep.subr.bf16.mxu0 %v2320
        %2681 = vmatpush2.bf16.msra.mxu0 %v2319
        %2682 = vmatprep.subr.bf16.mxu0 %v2312
        %2683 = vmatpush2.bf16.msra.mxu0 %v2311
        %2684 = vmatprep.subr.bf16.mxu0 %v2304
        %2685 = vmatpush2.bf16.msra.mxu0 %v2303
        %2686 = vmatprep.subr.bf16.mxu0 %v2296
        %2687 = vmatpush2.bf16.msra.mxu0 %v2295
        %2688 = vmatprep.subr.bf16.mxu0 %v2288
        %2689 = vmatpush2.bf16.msra.mxu0 %v2287
        %2690 = vmatprep.mubr.bf16.mxu0 %v1058
        %2691 = vmatmul.mubr.bf16.gmra.mxu0 %v1057
        %v2692 = vpop.f32.mrf.mxu0
        %v2693 = vadd.f32 %v2642, %v2692
        %v2694 = vpop.f32.mrf.mxu0
        %v2695 = vadd.f32 %v2644, %v2694
        %v2696 = vpop.f32.mrf.mxu0
        %v2697 = vadd.f32 %v2646, %v2696
        %v2698 = vpop.f32.mrf.mxu0
        %v2699 = vadd.f32 %v2648, %v2698
        %2700 = vmatprep.mubr.bf16.mxu0 %v1062
        %2701 = vmatmul.mubr.bf16.gmra.mxu0 %v1061
        %v2702 = vpop.f32.mrf.mxu0
        %v2703 = vadd.f32 %v2652, %v2702
        %v2704 = vpop.f32.mrf.mxu0
        %v2705 = vadd.f32 %v2654, %v2704
        %v2706 = vpop.f32.mrf.mxu0
        %v2707 = vpop.f32.mrf.mxu0
        %2708 = vdwg.mxu0
        %2709 = vmatprep.subr.bf16.mxu0 %v2154
        %2710 = vmatpush1.bf16.msra.mxu0 %v2153
        %2711 = vmatprep.subr.bf16.mxu0 %v2146
        %2712 = vmatpush1.bf16.msra.mxu0 %v2145
        %2713 = vmatprep.subr.bf16.mxu0 %v2138
        %2714 = vmatpush1.bf16.msra.mxu0 %v2137
        %2715 = vmatprep.subr.bf16.mxu0 %v2130
        %2716 = vmatpush1.bf16.msra.mxu0 %v2129
        %2717 = vmatprep.subr.bf16.mxu0 %v2122
        %2718 = vmatpush1.bf16.msra.mxu0 %v2121
        %2719 = vmatprep.subr.bf16.mxu0 %v2114
        %2720 = vmatpush1.bf16.msra.mxu0 %v2113
        %2721 = vmatprep.subr.bf16.mxu0 %v2106
        %2722 = vmatpush1.bf16.msra.mxu0 %v2105
        %2723 = vmatprep.subr.bf16.mxu0 %v2098
        %2724 = vmatpush1.bf16.msra.mxu0 %v2097
        %2725 = vmatprep.subr.bf16.mxu0 %v2218
        %2726 = vmatpush2.bf16.msra.mxu0 %v2217
        %2727 = vmatprep.subr.bf16.mxu0 %v2210
        %2728 = vmatpush2.bf16.msra.mxu0 %v2209
        %2729 = vmatprep.subr.bf16.mxu0 %v2202
        %2730 = vmatpush2.bf16.msra.mxu0 %v2201
        %2731 = vmatprep.subr.bf16.mxu0 %v2194
        %2732 = vmatpush2.bf16.msra.mxu0 %v2193
        %2733 = vmatprep.subr.bf16.mxu0 %v2186
        %2734 = vmatpush2.bf16.msra.mxu0 %v2185
        %2735 = vmatprep.subr.bf16.mxu0 %v2178
        %2736 = vmatpush2.bf16.msra.mxu0 %v2177
        %2737 = vmatprep.subr.bf16.mxu0 %v2170
        %2738 = vmatpush2.bf16.msra.mxu0 %v2169
        %2739 = vmatprep.subr.bf16.mxu0 %v2162
        %2740 = vmatpush2.bf16.msra.mxu0 %v2161
        %2741 = vmatprep.mubr.bf16.mxu0 %v1056
        %2742 = vmatmul.mubr.bf16.gmra.mxu0 %v1055
        %v2743 = vpop.f32.mrf.mxu0
        %v2744 = vadd.f32 0.0, %v2743
        %v2745 = vpop.f32.mrf.mxu0
        %v2746 = vadd.f32 0.0, %v2745
        %v2747 = vpop.f32.mrf.mxu0
        %v2748 = vadd.f32 0.0, %v2747
        %v2749 = vpop.f32.mrf.mxu0
        %v2750 = vadd.f32 0.0, %v2749
        %2751 = vmatprep.mubr.bf16.mxu0 %v1060
        %2752 = vmatmul.mubr.bf16.gmra.mxu0 %v1059
        %v2753 = vpop.f32.mrf.mxu0
        %v2754 = vpop.f32.mrf.mxu0
        %v2755 = vpop.f32.mrf.mxu0
        %v2756 = vpop.f32.mrf.mxu0
        %2757 = vdwg.mxu0
        %2758 = vmatprep.subr.bf16.mxu0 %v2282
        %2759 = vmatpush1.bf16.msra.mxu0 %v2281
        %2760 = vmatprep.subr.bf16.mxu0 %v2274
        %2761 = vmatpush1.bf16.msra.mxu0 %v2273
        %2762 = vmatprep.subr.bf16.mxu0 %v2266
        %2763 = vmatpush1.bf16.msra.mxu0 %v2265
        %2764 = vmatprep.subr.bf16.mxu0 %v2258
        %2765 = vmatpush1.bf16.msra.mxu0 %v2257
        %2766 = vmatprep.subr.bf16.mxu0 %v2250
        %2767 = vmatpush1.bf16.msra.mxu0 %v2249
        %2768 = vmatprep.subr.bf16.mxu0 %v2242
        %2769 = vmatpush1.bf16.msra.mxu0 %v2241
        %2770 = vmatprep.subr.bf16.mxu0 %v2234
        %2771 = vmatpush1.bf16.msra.mxu0 %v2233
        %2772 = vmatprep.subr.bf16.mxu0 %v2226
        %2773 = vmatpush1.bf16.msra.mxu0 %v2225
        %2774 = vmatprep.subr.bf16.mxu0 %v2346
        %2775 = vmatpush2.bf16.msra.mxu0 %v2345
        %2776 = vmatprep.subr.bf16.mxu0 %v2338
        %2777 = vmatpush2.bf16.msra.mxu0 %v2337
        %2778 = vmatprep.subr.bf16.mxu0 %v2330
        %2779 = vmatpush2.bf16.msra.mxu0 %v2329
        %2780 = vmatprep.subr.bf16.mxu0 %v2322
        %2781 = vmatpush2.bf16.msra.mxu0 %v2321
        %2782 = vmatprep.subr.bf16.mxu0 %v2314
        %2783 = vmatpush2.bf16.msra.mxu0 %v2313
        %2784 = vmatprep.subr.bf16.mxu0 %v2306
        %2785 = vmatpush2.bf16.msra.mxu0 %v2305
        %2786 = vmatprep.subr.bf16.mxu0 %v2298
        %2787 = vmatpush2.bf16.msra.mxu0 %v2297
        %2788 = vmatprep.subr.bf16.mxu0 %v2290
        %2789 = vmatpush2.bf16.msra.mxu0 %v2289
        %2790 = vmatprep.mubr.bf16.mxu0 %v1058
        %2791 = vmatmul.mubr.bf16.gmra.mxu0 %v1057
        %v2792 = vpop.f32.mrf.mxu0
        %v2793 = vadd.f32 %v2744, %v2792
        %v2794 = vpop.f32.mrf.mxu0
        %v2795 = vadd.f32 %v2746, %v2794
        %v2796 = vpop.f32.mrf.mxu0
        %v2797 = vadd.f32 %v2748, %v2796
        %v2798 = vpop.f32.mrf.mxu0
        %v2799 = vadd.f32 %v2750, %v2798
        %2800 = vmatprep.mubr.bf16.mxu0 %v1062
        %2801 = vmatmul.mubr.bf16.gmra.mxu0 %v1061
        %v2802 = vpop.f32.mrf.mxu0
        %v2803 = vpop.f32.mrf.mxu0
        %v2804 = vpop.f32.mrf.mxu0
        %v2805 = vpop.f32.mrf.mxu0
        %2806 = vdwg.mxu0
        %2807 = vmatprep.subr.bf16.mxu0 %v2156
        %2808 = vmatpush1.bf16.msra.mxu0 %v2155
        %2809 = vmatprep.subr.bf16.mxu0 %v2148
        %2810 = vmatpush1.bf16.msra.mxu0 %v2147
        %2811 = vmatprep.subr.bf16.mxu0 %v2140
        %2812 = vmatpush1.bf16.msra.mxu0 %v2139
        %2813 = vmatprep.subr.bf16.mxu0 %v2132
        %2814 = vmatpush1.bf16.msra.mxu0 %v2131
        %2815 = vmatprep.subr.bf16.mxu0 %v2124
        %2816 = vmatpush1.bf16.msra.mxu0 %v2123
        %2817 = vmatprep.subr.bf16.mxu0 %v2116
        %2818 = vmatpush1.bf16.msra.mxu0 %v2115
        %2819 = vmatprep.subr.bf16.mxu0 %v2108
        %2820 = vmatpush1.bf16.msra.mxu0 %v2107
        %2821 = vmatprep.subr.bf16.mxu0 %v2100
        %2822 = vmatpush1.bf16.msra.mxu0 %v2099
        %2823 = vmatprep.subr.bf16.mxu0 %v2220
        %2824 = vmatpush2.bf16.msra.mxu0 %v2219
        %2825 = vmatprep.subr.bf16.mxu0 %v2212
        %2826 = vmatpush2.bf16.msra.mxu0 %v2211
        %2827 = vmatprep.subr.bf16.mxu0 %v2204
        %2828 = vmatpush2.bf16.msra.mxu0 %v2203
        %2829 = vmatprep.subr.bf16.mxu0 %v2196
        %2830 = vmatpush2.bf16.msra.mxu0 %v2195
        %2831 = vmatprep.subr.bf16.mxu0 %v2188
        %2832 = vmatpush2.bf16.msra.mxu0 %v2187
        %2833 = vmatprep.subr.bf16.mxu0 %v2180
        %2834 = vmatpush2.bf16.msra.mxu0 %v2179
        %2835 = vmatprep.subr.bf16.mxu0 %v2172
        %2836 = vmatpush2.bf16.msra.mxu0 %v2171
        %2837 = vmatprep.subr.bf16.mxu0 %v2164
        %2838 = vmatpush2.bf16.msra.mxu0 %v2163
        %2839 = vmatprep.mubr.bf16.mxu0 %v1056
        %2840 = vmatmul.mubr.bf16.gmra.mxu0 %v1055
        %v2841 = vpop.f32.mrf.mxu0
        %v2842 = vadd.f32 0.0, %v2841
        %v2843 = vpop.f32.mrf.mxu0
        %v2844 = vadd.f32 0.0, %v2843
        %v2845 = vpop.f32.mrf.mxu0
        %v2846 = vadd.f32 0.0, %v2845
        %v2847 = vpop.f32.mrf.mxu0
        %v2848 = vadd.f32 0.0, %v2847
        %2849 = vmatprep.mubr.bf16.mxu0 %v1060
        %2850 = vmatmul.mubr.bf16.gmra.mxu0 %v1059
        %v2851 = vpop.f32.mrf.mxu0
        %v2852 = vpop.f32.mrf.mxu0
        %v2853 = vpop.f32.mrf.mxu0
        %v2854 = vpop.f32.mrf.mxu0
        %2855 = vdwg.mxu0
        %2856 = vmatprep.subr.bf16.mxu0 %v2284
        %2857 = vmatpush1.bf16.msra.mxu0 %v2283
        %2858 = vmatprep.subr.bf16.mxu0 %v2276
        %2859 = vmatpush1.bf16.msra.mxu0 %v2275
        %2860 = vmatprep.subr.bf16.mxu0 %v2268
        %2861 = vmatpush1.bf16.msra.mxu0 %v2267
        %2862 = vmatprep.subr.bf16.mxu0 %v2260
        %2863 = vmatpush1.bf16.msra.mxu0 %v2259
        %2864 = vmatprep.subr.bf16.mxu0 %v2252
        %2865 = vmatpush1.bf16.msra.mxu0 %v2251
        %2866 = vmatprep.subr.bf16.mxu0 %v2244
        %2867 = vmatpush1.bf16.msra.mxu0 %v2243
        %2868 = vmatprep.subr.bf16.mxu0 %v2236
        %2869 = vmatpush1.bf16.msra.mxu0 %v2235
        %2870 = vmatprep.subr.bf16.mxu0 %v2228
        %2871 = vmatpush1.bf16.msra.mxu0 %v2227
        %2872 = vmatprep.subr.bf16.mxu0 %v2348
        %2873 = vmatpush2.bf16.msra.mxu0 %v2347
        %2874 = vmatprep.subr.bf16.mxu0 %v2340
        %2875 = vmatpush2.bf16.msra.mxu0 %v2339
        %2876 = vmatprep.subr.bf16.mxu0 %v2332
        %2877 = vmatpush2.bf16.msra.mxu0 %v2331
        %2878 = vmatprep.subr.bf16.mxu0 %v2324
        %2879 = vmatpush2.bf16.msra.mxu0 %v2323
        %2880 = vmatprep.subr.bf16.mxu0 %v2316
        %2881 = vmatpush2.bf16.msra.mxu0 %v2315
        %2882 = vmatprep.subr.bf16.mxu0 %v2308
        %2883 = vmatpush2.bf16.msra.mxu0 %v2307
        %2884 = vmatprep.subr.bf16.mxu0 %v2300
        %2885 = vmatpush2.bf16.msra.mxu0 %v2299
        %2886 = vmatprep.subr.bf16.mxu0 %v2292
        %2887 = vmatpush2.bf16.msra.mxu0 %v2291
        %2888 = vmatprep.mubr.bf16.mxu0 %v1058
        %2889 = vmatmul.mubr.bf16.gmra.mxu0 %v1057
        %v2890 = vpop.f32.mrf.mxu0
        %v2891 = vadd.f32 %v2842, %v2890
        %v2892 = vpop.f32.mrf.mxu0
        %v2893 = vadd.f32 %v2844, %v2892
        %v2894 = vpop.f32.mrf.mxu0
        %v2895 = vadd.f32 %v2846, %v2894
        %v2896 = vpop.f32.mrf.mxu0
        %v2897 = vadd.f32 %v2848, %v2896
        %2898 = vmatprep.mubr.bf16.mxu0 %v1062
        %2899 = vmatmul.mubr.bf16.gmra.mxu0 %v1061
        %v2900 = vpop.f32.mrf.mxu0
        %v2901 = vpop.f32.mrf.mxu0
        %v2902 = vpop.f32.mrf.mxu0
        %v2903 = vpop.f32.mrf.mxu0
        %2904 = vdwg.mxu0
        %2905 = vmatprep.subr.bf16.mxu0 %v2158
        %2906 = vmatpush1.bf16.msra.mxu0 %v2157
        %2907 = vmatprep.subr.bf16.mxu0 %v2150
        %2908 = vmatpush1.bf16.msra.mxu0 %v2149
        %2909 = vmatprep.subr.bf16.mxu0 %v2142
        %2910 = vmatpush1.bf16.msra.mxu0 %v2141
        %2911 = vmatprep.subr.bf16.mxu0 %v2134
        %2912 = vmatpush1.bf16.msra.mxu0 %v2133
        %2913 = vmatprep.subr.bf16.mxu0 %v2126
        %2914 = vmatpush1.bf16.msra.mxu0 %v2125
        %2915 = vmatprep.subr.bf16.mxu0 %v2118
        %2916 = vmatpush1.bf16.msra.mxu0 %v2117
        %2917 = vmatprep.subr.bf16.mxu0 %v2110
        %2918 = vmatpush1.bf16.msra.mxu0 %v2109
        %2919 = vmatprep.subr.bf16.mxu0 %v2102
        %2920 = vmatpush1.bf16.msra.mxu0 %v2101
        %2921 = vmatprep.subr.bf16.mxu0 %v2222
        %2922 = vmatpush2.bf16.msra.mxu0 %v2221
        %2923 = vmatprep.subr.bf16.mxu0 %v2214
        %2924 = vmatpush2.bf16.msra.mxu0 %v2213
        %2925 = vmatprep.subr.bf16.mxu0 %v2206
        %2926 = vmatpush2.bf16.msra.mxu0 %v2205
        %2927 = vmatprep.subr.bf16.mxu0 %v2198
        %2928 = vmatpush2.bf16.msra.mxu0 %v2197
        %2929 = vmatprep.subr.bf16.mxu0 %v2190
        %2930 = vmatpush2.bf16.msra.mxu0 %v2189
        %2931 = vmatprep.subr.bf16.mxu0 %v2182
        %2932 = vmatpush2.bf16.msra.mxu0 %v2181
        %2933 = vmatprep.subr.bf16.mxu0 %v2174
        %2934 = vmatpush2.bf16.msra.mxu0 %v2173
        %2935 = vmatprep.subr.bf16.mxu0 %v2166
        %2936 = vmatpush2.bf16.msra.mxu0 %v2165
        %2937 = vmatprep.mubr.bf16.mxu0 %v1056
        %2938 = vmatmul.mubr.bf16.gmra.mxu0 %v1055
        %v2939 = vpop.f32.mrf.mxu0
        %v2940 = vadd.f32 0.0, %v2939
        %v2941 = vpop.f32.mrf.mxu0
        %v2942 = vadd.f32 0.0, %v2941
        %v2943 = vpop.f32.mrf.mxu0
        %v2944 = vadd.f32 0.0, %v2943
        %v2945 = vpop.f32.mrf.mxu0
        %v2946 = vadd.f32 0.0, %v2945
        %2947 = vmatprep.mubr.bf16.mxu0 %v1060
        %2948 = vmatmul.mubr.bf16.gmra.mxu0 %v1059
        %v2949 = vpop.f32.mrf.mxu0
        %v2950 = vpop.f32.mrf.mxu0
        %v2951 = vpop.f32.mrf.mxu0
        %v2952 = vpop.f32.mrf.mxu0
        %2953 = vdwg.mxu0
        %2954 = vmatprep.subr.bf16.mxu0 %v2286
        %2955 = vmatpush1.bf16.msra.mxu0 %v2285
        %2956 = vmatprep.subr.bf16.mxu0 %v2278
        %2957 = vmatpush1.bf16.msra.mxu0 %v2277
        %2958 = vmatprep.subr.bf16.mxu0 %v2270
        %2959 = vmatpush1.bf16.msra.mxu0 %v2269
        %2960 = vmatprep.subr.bf16.mxu0 %v2262
        %2961 = vmatpush1.bf16.msra.mxu0 %v2261
        %2962 = vmatprep.subr.bf16.mxu0 %v2254
        %2963 = vmatpush1.bf16.msra.mxu0 %v2253
        %2964 = vmatprep.subr.bf16.mxu0 %v2246
        %2965 = vmatpush1.bf16.msra.mxu0 %v2245
        %2966 = vmatprep.subr.bf16.mxu0 %v2238
        %2967 = vmatpush1.bf16.msra.mxu0 %v2237
        %2968 = vmatprep.subr.bf16.mxu0 %v2230
        %2969 = vmatpush1.bf16.msra.mxu0 %v2229
        %2970 = vmatprep.subr.bf16.mxu0 %v2350
        %2971 = vmatpush2.bf16.msra.mxu0 %v2349
        %2972 = vmatprep.subr.bf16.mxu0 %v2342
        %2973 = vmatpush2.bf16.msra.mxu0 %v2341
        %2974 = vmatprep.subr.bf16.mxu0 %v2334
        %2975 = vmatpush2.bf16.msra.mxu0 %v2333
        %2976 = vmatprep.subr.bf16.mxu0 %v2326
        %2977 = vmatpush2.bf16.msra.mxu0 %v2325
        %2978 = vmatprep.subr.bf16.mxu0 %v2318
        %2979 = vmatpush2.bf16.msra.mxu0 %v2317
        %2980 = vmatprep.subr.bf16.mxu0 %v2310
        %2981 = vmatpush2.bf16.msra.mxu0 %v2309
        %2982 = vmatprep.subr.bf16.mxu0 %v2302
        %2983 = vmatpush2.bf16.msra.mxu0 %v2301
        %2984 = vmatprep.subr.bf16.mxu0 %v2294
        %2985 = vmatpush2.bf16.msra.mxu0 %v2293
        %2986 = vmatprep.mubr.bf16.mxu0 %v1058
        %2987 = vmatmul.mubr.bf16.gmra.mxu0 %v1057
        %v2988 = vpop.f32.mrf.mxu0
        %v2989 = vadd.f32 %v2940, %v2988
        %v2990 = vpop.f32.mrf.mxu0
        %v2991 = vadd.f32 %v2942, %v2990
        %v2992 = vpop.f32.mrf.mxu0
        %v2993 = vadd.f32 %v2944, %v2992
        %v2994 = vpop.f32.mrf.mxu0
        %v2995 = vadd.f32 %v2946, %v2994
        %2996 = vmatprep.mubr.bf16.mxu0 %v1062
        %2997 = vmatmul.mubr.bf16.gmra.mxu0 %v1061
        %v2998 = vpop.f32.mrf.mxu0
        %v2999 = vpop.f32.mrf.mxu0
        %v3000 = vpop.f32.mrf.mxu0
        %v3001 = vpop.f32.mrf.mxu0
        %3002 = vdwg.mxu0
        %3003 = vmatprep.subr.bf16.mxu0 %v2152
        %3004 = vmatpush1.bf16.msra.mxu0 %v2151
        %3005 = vmatprep.subr.bf16.mxu0 %v2144
        %3006 = vmatpush1.bf16.msra.mxu0 %v2143
        %3007 = vmatprep.subr.bf16.mxu0 %v2136
        %3008 = vmatpush1.bf16.msra.mxu0 %v2135
        %3009 = vmatprep.subr.bf16.mxu0 %v2128
        %3010 = vmatpush1.bf16.msra.mxu0 %v2127
        %3011 = vmatprep.subr.bf16.mxu0 %v2120
        %3012 = vmatpush1.bf16.msra.mxu0 %v2119
        %3013 = vmatprep.subr.bf16.mxu0 %v2112
        %3014 = vmatpush1.bf16.msra.mxu0 %v2111
        %3015 = vmatprep.subr.bf16.mxu0 %v2104
        %3016 = vmatpush1.bf16.msra.mxu0 %v2103
        %3017 = vmatprep.subr.bf16.mxu0 %v2096
        %3018 = vmatpush1.bf16.msra.mxu0 %v2095
        %3019 = vmatprep.subr.bf16.mxu0 %v2216
        %3020 = vmatpush2.bf16.msra.mxu0 %v2215
        %3021 = vmatprep.subr.bf16.mxu0 %v2208
        %3022 = vmatpush2.bf16.msra.mxu0 %v2207
        %3023 = vmatprep.subr.bf16.mxu0 %v2200
        %3024 = vmatpush2.bf16.msra.mxu0 %v2199
        %3025 = vmatprep.subr.bf16.mxu0 %v2192
        %3026 = vmatpush2.bf16.msra.mxu0 %v2191
        %3027 = vmatprep.subr.bf16.mxu0 %v2184
        %3028 = vmatpush2.bf16.msra.mxu0 %v2183
        %3029 = vmatprep.subr.bf16.mxu0 %v2176
        %3030 = vmatpush2.bf16.msra.mxu0 %v2175
        %3031 = vmatprep.subr.bf16.mxu0 %v2168
        %3032 = vmatpush2.bf16.msra.mxu0 %v2167
        %3033 = vmatprep.subr.bf16.mxu0 %v2160
        %3034 = vmatpush2.bf16.msra.mxu0 %v2159
        %3035 = vmatprep.mubr.bf16.mxu0 %v1064
        %3036 = vmatmul.mubr.bf16.gmra.mxu0 %v1063
        %v3037 = vpop.f32.mrf.mxu0
        %v3038 = vadd.f32 0.0, %v3037
        %v3039 = vpop.f32.mrf.mxu0
        %v3040 = vadd.f32 0.0, %v3039
        %v3041 = vpop.f32.mrf.mxu0
        %v3042 = vadd.f32 0.0, %v3041
        %v3043 = vpop.f32.mrf.mxu0
        %v3044 = vadd.f32 0.0, %v3043
        %3045 = vmatprep.mubr.bf16.mxu0 %v1068
        %3046 = vmatmul.mubr.bf16.gmra.mxu0 %v1067
        %v3047 = vpop.f32.mrf.mxu0
        %v3048 = vadd.f32 0.0, %v3047
        %v3049 = vpop.f32.mrf.mxu0
        %v3050 = vadd.f32 0.0, %v3049
        %v3051 = vpop.f32.mrf.mxu0
        %v3052 = vpop.f32.mrf.mxu0
        %3053 = vdwg.mxu0
        %3054 = vmatprep.subr.bf16.mxu0 %v2280
        %3055 = vmatpush1.bf16.msra.mxu0 %v2279
        %3056 = vmatprep.subr.bf16.mxu0 %v2272
        %3057 = vmatpush1.bf16.msra.mxu0 %v2271
        %3058 = vmatprep.subr.bf16.mxu0 %v2264
        %3059 = vmatpush1.bf16.msra.mxu0 %v2263
        %3060 = vmatprep.subr.bf16.mxu0 %v2256
        %3061 = vmatpush1.bf16.msra.mxu0 %v2255
        %3062 = vmatprep.subr.bf16.mxu0 %v2248
        %3063 = vmatpush1.bf16.msra.mxu0 %v2247
        %3064 = vmatprep.subr.bf16.mxu0 %v2240
        %3065 = vmatpush1.bf16.msra.mxu0 %v2239
        %3066 = vmatprep.subr.bf16.mxu0 %v2232
        %3067 = vmatpush1.bf16.msra.mxu0 %v2231
        %3068 = vmatprep.subr.bf16.mxu0 %v2224
        %3069 = vmatpush1.bf16.msra.mxu0 %v2223
        %3070 = vmatprep.subr.bf16.mxu0 %v2344
        %3071 = vmatpush2.bf16.msra.mxu0 %v2343
        %3072 = vmatprep.subr.bf16.mxu0 %v2336
        %3073 = vmatpush2.bf16.msra.mxu0 %v2335
        %3074 = vmatprep.subr.bf16.mxu0 %v2328
        %3075 = vmatpush2.bf16.msra.mxu0 %v2327
        %3076 = vmatprep.subr.bf16.mxu0 %v2320
        %3077 = vmatpush2.bf16.msra.mxu0 %v2319
        %3078 = vmatprep.subr.bf16.mxu0 %v2312
        %3079 = vmatpush2.bf16.msra.mxu0 %v2311
        %3080 = vmatprep.subr.bf16.mxu0 %v2304
        %3081 = vmatpush2.bf16.msra.mxu0 %v2303
        %3082 = vmatprep.subr.bf16.mxu0 %v2296
        %3083 = vmatpush2.bf16.msra.mxu0 %v2295
        %3084 = vmatprep.subr.bf16.mxu0 %v2288
        %3085 = vmatpush2.bf16.msra.mxu0 %v2287
        %3086 = vmatprep.mubr.bf16.mxu0 %v1066
        %3087 = vmatmul.mubr.bf16.gmra.mxu0 %v1065
        %v3088 = vpop.f32.mrf.mxu0
        %v3089 = vadd.f32 %v3038, %v3088
        %v3090 = vpop.f32.mrf.mxu0
        %v3091 = vadd.f32 %v3040, %v3090
        %v3092 = vpop.f32.mrf.mxu0
        %v3093 = vadd.f32 %v3042, %v3092
        %v3094 = vpop.f32.mrf.mxu0
        %v3095 = vadd.f32 %v3044, %v3094
        %3096 = vmatprep.mubr.bf16.mxu0 %v1070
        %3097 = vmatmul.mubr.bf16.gmra.mxu0 %v1069
        %v3098 = vpop.f32.mrf.mxu0
        %v3099 = vadd.f32 %v3048, %v3098
        %v3100 = vpop.f32.mrf.mxu0
        %v3101 = vadd.f32 %v3050, %v3100
        %v3102 = vpop.f32.mrf.mxu0
        %v3103 = vpop.f32.mrf.mxu0
        %3104 = vdwg.mxu0
        %3105 = vmatprep.subr.bf16.mxu0 %v2154
        %3106 = vmatpush1.bf16.msra.mxu0 %v2153
        %3107 = vmatprep.subr.bf16.mxu0 %v2146
        %3108 = vmatpush1.bf16.msra.mxu0 %v2145
        %3109 = vmatprep.subr.bf16.mxu0 %v2138
        %3110 = vmatpush1.bf16.msra.mxu0 %v2137
        %3111 = vmatprep.subr.bf16.mxu0 %v2130
        %3112 = vmatpush1.bf16.msra.mxu0 %v2129
        %3113 = vmatprep.subr.bf16.mxu0 %v2122
        %3114 = vmatpush1.bf16.msra.mxu0 %v2121
        %3115 = vmatprep.subr.bf16.mxu0 %v2114
        %3116 = vmatpush1.bf16.msra.mxu0 %v2113
        %3117 = vmatprep.subr.bf16.mxu0 %v2106
        %3118 = vmatpush1.bf16.msra.mxu0 %v2105
        %3119 = vmatprep.subr.bf16.mxu0 %v2098
        %3120 = vmatpush1.bf16.msra.mxu0 %v2097
        %3121 = vmatprep.subr.bf16.mxu0 %v2218
        %3122 = vmatpush2.bf16.msra.mxu0 %v2217
        %3123 = vmatprep.subr.bf16.mxu0 %v2210
        %3124 = vmatpush2.bf16.msra.mxu0 %v2209
        %3125 = vmatprep.subr.bf16.mxu0 %v2202
        %3126 = vmatpush2.bf16.msra.mxu0 %v2201
        %3127 = vmatprep.subr.bf16.mxu0 %v2194
        %3128 = vmatpush2.bf16.msra.mxu0 %v2193
        %3129 = vmatprep.subr.bf16.mxu0 %v2186
        %3130 = vmatpush2.bf16.msra.mxu0 %v2185
        %3131 = vmatprep.subr.bf16.mxu0 %v2178
        %3132 = vmatpush2.bf16.msra.mxu0 %v2177
        %3133 = vmatprep.subr.bf16.mxu0 %v2170
        %3134 = vmatpush2.bf16.msra.mxu0 %v2169
        %3135 = vmatprep.subr.bf16.mxu0 %v2162
        %3136 = vmatpush2.bf16.msra.mxu0 %v2161
        %3137 = vmatprep.mubr.bf16.mxu0 %v1064
        %3138 = vmatmul.mubr.bf16.gmra.mxu0 %v1063
        %v3139 = vpop.f32.mrf.mxu0
        %v3140 = vadd.f32 0.0, %v3139
        %v3141 = vpop.f32.mrf.mxu0
        %v3142 = vadd.f32 0.0, %v3141
        %v3143 = vpop.f32.mrf.mxu0
        %v3144 = vadd.f32 0.0, %v3143
        %v3145 = vpop.f32.mrf.mxu0
        %v3146 = vadd.f32 0.0, %v3145
        %3147 = vmatprep.mubr.bf16.mxu0 %v1068
        %3148 = vmatmul.mubr.bf16.gmra.mxu0 %v1067
        %v3149 = vpop.f32.mrf.mxu0
        %v3150 = vadd.f32 0.0, %v3149
        %v3151 = vpop.f32.mrf.mxu0
        %v3152 = vadd.f32 0.0, %v3151
        %v3153 = vpop.f32.mrf.mxu0
        %v3154 = vpop.f32.mrf.mxu0
        %3155 = vdwg.mxu0
        %3156 = vmatprep.subr.bf16.mxu0 %v2282
        %3157 = vmatpush1.bf16.msra.mxu0 %v2281
        %3158 = vmatprep.subr.bf16.mxu0 %v2274
        %3159 = vmatpush1.bf16.msra.mxu0 %v2273
        %3160 = vmatprep.subr.bf16.mxu0 %v2266
        %3161 = vmatpush1.bf16.msra.mxu0 %v2265
        %3162 = vmatprep.subr.bf16.mxu0 %v2258
        %3163 = vmatpush1.bf16.msra.mxu0 %v2257
        %3164 = vmatprep.subr.bf16.mxu0 %v2250
        %3165 = vmatpush1.bf16.msra.mxu0 %v2249
        %3166 = vmatprep.subr.bf16.mxu0 %v2242
        %3167 = vmatpush1.bf16.msra.mxu0 %v2241
        %3168 = vmatprep.subr.bf16.mxu0 %v2234
        %3169 = vmatpush1.bf16.msra.mxu0 %v2233
        %3170 = vmatprep.subr.bf16.mxu0 %v2226
        %3171 = vmatpush1.bf16.msra.mxu0 %v2225
        %3172 = vmatprep.subr.bf16.mxu0 %v2346
        %3173 = vmatpush2.bf16.msra.mxu0 %v2345
        %3174 = vmatprep.subr.bf16.mxu0 %v2338
        %3175 = vmatpush2.bf16.msra.mxu0 %v2337
        %3176 = vmatprep.subr.bf16.mxu0 %v2330
        %3177 = vmatpush2.bf16.msra.mxu0 %v2329
        %3178 = vmatprep.subr.bf16.mxu0 %v2322
        %3179 = vmatpush2.bf16.msra.mxu0 %v2321
        %3180 = vmatprep.subr.bf16.mxu0 %v2314
        %3181 = vmatpush2.bf16.msra.mxu0 %v2313
        %3182 = vmatprep.subr.bf16.mxu0 %v2306
        %3183 = vmatpush2.bf16.msra.mxu0 %v2305
        %3184 = vmatprep.subr.bf16.mxu0 %v2298
        %3185 = vmatpush2.bf16.msra.mxu0 %v2297
        %3186 = vmatprep.subr.bf16.mxu0 %v2290
        %3187 = vmatpush2.bf16.msra.mxu0 %v2289
        %3188 = vmatprep.mubr.bf16.mxu0 %v1066
        %3189 = vmatmul.mubr.bf16.gmra.mxu0 %v1065
        %v3190 = vpop.f32.mrf.mxu0
        %v3191 = vadd.f32 %v3140, %v3190
        %v3192 = vpop.f32.mrf.mxu0
        %v3193 = vadd.f32 %v3142, %v3192
        %v3194 = vpop.f32.mrf.mxu0
        %v3195 = vadd.f32 %v3144, %v3194
        %v3196 = vpop.f32.mrf.mxu0
        %v3197 = vadd.f32 %v3146, %v3196
        %3198 = vmatprep.mubr.bf16.mxu0 %v1070
        %3199 = vmatmul.mubr.bf16.gmra.mxu0 %v1069
        %v3200 = vpop.f32.mrf.mxu0
        %v3201 = vadd.f32 %v3150, %v3200
        %v3202 = vpop.f32.mrf.mxu0
        %v3203 = vadd.f32 %v3152, %v3202
        %v3204 = vpop.f32.mrf.mxu0
        %v3205 = vpop.f32.mrf.mxu0
        %3206 = vdwg.mxu0
        %3207 = vmatprep.subr.bf16.mxu0 %v2156
        %3208 = vmatpush1.bf16.msra.mxu0 %v2155
        %3209 = vmatprep.subr.bf16.mxu0 %v2148
        %3210 = vmatpush1.bf16.msra.mxu0 %v2147
        %3211 = vmatprep.subr.bf16.mxu0 %v2140
        %3212 = vmatpush1.bf16.msra.mxu0 %v2139
        %3213 = vmatprep.subr.bf16.mxu0 %v2132
        %3214 = vmatpush1.bf16.msra.mxu0 %v2131
        %3215 = vmatprep.subr.bf16.mxu0 %v2124
        %3216 = vmatpush1.bf16.msra.mxu0 %v2123
        %3217 = vmatprep.subr.bf16.mxu0 %v2116
        %3218 = vmatpush1.bf16.msra.mxu0 %v2115
        %3219 = vmatprep.subr.bf16.mxu0 %v2108
        %3220 = vmatpush1.bf16.msra.mxu0 %v2107
        %3221 = vmatprep.subr.bf16.mxu0 %v2100
        %3222 = vmatpush1.bf16.msra.mxu0 %v2099
        %3223 = vmatprep.subr.bf16.mxu0 %v2220
        %3224 = vmatpush2.bf16.msra.mxu0 %v2219
        %3225 = vmatprep.subr.bf16.mxu0 %v2212
        %3226 = vmatpush2.bf16.msra.mxu0 %v2211
        %3227 = vmatprep.subr.bf16.mxu0 %v2204
        %3228 = vmatpush2.bf16.msra.mxu0 %v2203
        %3229 = vmatprep.subr.bf16.mxu0 %v2196
        %3230 = vmatpush2.bf16.msra.mxu0 %v2195
        %3231 = vmatprep.subr.bf16.mxu0 %v2188
        %3232 = vmatpush2.bf16.msra.mxu0 %v2187
        %3233 = vmatprep.subr.bf16.mxu0 %v2180
        %3234 = vmatpush2.bf16.msra.mxu0 %v2179
        %3235 = vmatprep.subr.bf16.mxu0 %v2172
        %3236 = vmatpush2.bf16.msra.mxu0 %v2171
        %3237 = vmatprep.subr.bf16.mxu0 %v2164
        %3238 = vmatpush2.bf16.msra.mxu0 %v2163
        %3239 = vmatprep.mubr.bf16.mxu0 %v1064
        %3240 = vmatmul.mubr.bf16.gmra.mxu0 %v1063
        %v3241 = vpop.f32.mrf.mxu0
        %v3242 = vadd.f32 0.0, %v3241
        %v3243 = vpop.f32.mrf.mxu0
        %v3244 = vadd.f32 0.0, %v3243
        %v3245 = vpop.f32.mrf.mxu0
        %v3246 = vadd.f32 0.0, %v3245
        %v3247 = vpop.f32.mrf.mxu0
        %v3248 = vadd.f32 0.0, %v3247
        %3249 = vmatprep.mubr.bf16.mxu0 %v1068
        %3250 = vmatmul.mubr.bf16.gmra.mxu0 %v1067
        %v3251 = vpop.f32.mrf.mxu0
        %v3252 = vadd.f32 0.0, %v3251
        %v3253 = vpop.f32.mrf.mxu0
        %v3254 = vadd.f32 0.0, %v3253
        %v3255 = vpop.f32.mrf.mxu0
        %v3256 = vpop.f32.mrf.mxu0
        %3257 = vdwg.mxu0
        %3258 = vmatprep.subr.bf16.mxu0 %v2284
        %3259 = vmatpush1.bf16.msra.mxu0 %v2283
        %3260 = vmatprep.subr.bf16.mxu0 %v2276
        %3261 = vmatpush1.bf16.msra.mxu0 %v2275
        %3262 = vmatprep.subr.bf16.mxu0 %v2268
        %3263 = vmatpush1.bf16.msra.mxu0 %v2267
        %3264 = vmatprep.subr.bf16.mxu0 %v2260
        %3265 = vmatpush1.bf16.msra.mxu0 %v2259
        %3266 = vmatprep.subr.bf16.mxu0 %v2252
        %3267 = vmatpush1.bf16.msra.mxu0 %v2251
        %3268 = vmatprep.subr.bf16.mxu0 %v2244
        %3269 = vmatpush1.bf16.msra.mxu0 %v2243
        %3270 = vmatprep.subr.bf16.mxu0 %v2236
        %3271 = vmatpush1.bf16.msra.mxu0 %v2235
        %3272 = vmatprep.subr.bf16.mxu0 %v2228
        %3273 = vmatpush1.bf16.msra.mxu0 %v2227
        %3274 = vmatprep.subr.bf16.mxu0 %v2348
        %3275 = vmatpush2.bf16.msra.mxu0 %v2347
        %3276 = vmatprep.subr.bf16.mxu0 %v2340
        %3277 = vmatpush2.bf16.msra.mxu0 %v2339
        %3278 = vmatprep.subr.bf16.mxu0 %v2332
        %3279 = vmatpush2.bf16.msra.mxu0 %v2331
        %3280 = vmatprep.subr.bf16.mxu0 %v2324
        %3281 = vmatpush2.bf16.msra.mxu0 %v2323
        %3282 = vmatprep.subr.bf16.mxu0 %v2316
        %3283 = vmatpush2.bf16.msra.mxu0 %v2315
        %3284 = vmatprep.subr.bf16.mxu0 %v2308
        %3285 = vmatpush2.bf16.msra.mxu0 %v2307
        %3286 = vmatprep.subr.bf16.mxu0 %v2300
        %3287 = vmatpush2.bf16.msra.mxu0 %v2299
        %3288 = vmatprep.subr.bf16.mxu0 %v2292
        %3289 = vmatpush2.bf16.msra.mxu0 %v2291
        %3290 = vmatprep.mubr.bf16.mxu0 %v1066
        %3291 = vmatmul.mubr.bf16.gmra.mxu0 %v1065
        %v3292 = vpop.f32.mrf.mxu0
        %v3293 = vadd.f32 %v3242, %v3292
        %v3294 = vpop.f32.mrf.mxu0
        %v3295 = vadd.f32 %v3244, %v3294
        %v3296 = vpop.f32.mrf.mxu0
        %v3297 = vadd.f32 %v3246, %v3296
        %v3298 = vpop.f32.mrf.mxu0
        %v3299 = vadd.f32 %v3248, %v3298
        %3300 = vmatprep.mubr.bf16.mxu0 %v1070
        %3301 = vmatmul.mubr.bf16.gmra.mxu0 %v1069
        %v3302 = vpop.f32.mrf.mxu0
        %v3303 = vadd.f32 %v3252, %v3302
        %v3304 = vpop.f32.mrf.mxu0
        %v3305 = vadd.f32 %v3254, %v3304
        %v3306 = vpop.f32.mrf.mxu0
        %v3307 = vpop.f32.mrf.mxu0
        %3308 = vdwg.mxu0
        %3309 = vmatprep.subr.bf16.mxu0 %v2158
        %3310 = vmatpush1.bf16.msra.mxu0 %v2157
        %3311 = vmatprep.subr.bf16.mxu0 %v2150
        %3312 = vmatpush1.bf16.msra.mxu0 %v2149
        %3313 = vmatprep.subr.bf16.mxu0 %v2142
        %3314 = vmatpush1.bf16.msra.mxu0 %v2141
        %3315 = vmatprep.subr.bf16.mxu0 %v2134
        %3316 = vmatpush1.bf16.msra.mxu0 %v2133
        %3317 = vmatprep.subr.bf16.mxu0 %v2126
        %3318 = vmatpush1.bf16.msra.mxu0 %v2125
        %3319 = vmatprep.subr.bf16.mxu0 %v2118
        %3320 = vmatpush1.bf16.msra.mxu0 %v2117
        %3321 = vmatprep.subr.bf16.mxu0 %v2110
        %3322 = vmatpush1.bf16.msra.mxu0 %v2109
        %3323 = vmatprep.subr.bf16.mxu0 %v2102
        %3324 = vmatpush1.bf16.msra.mxu0 %v2101
        %3325 = vmatprep.subr.bf16.mxu0 %v2222
        %3326 = vmatpush2.bf16.msra.mxu0 %v2221
        %3327 = vmatprep.subr.bf16.mxu0 %v2214
        %3328 = vmatpush2.bf16.msra.mxu0 %v2213
        %3329 = vmatprep.subr.bf16.mxu0 %v2206
        %3330 = vmatpush2.bf16.msra.mxu0 %v2205
        %3331 = vmatprep.subr.bf16.mxu0 %v2198
        %3332 = vmatpush2.bf16.msra.mxu0 %v2197
        %3333 = vmatprep.subr.bf16.mxu0 %v2190
        %3334 = vmatpush2.bf16.msra.mxu0 %v2189
        %3335 = vmatprep.subr.bf16.mxu0 %v2182
        %3336 = vmatpush2.bf16.msra.mxu0 %v2181
        %3337 = vmatprep.subr.bf16.mxu0 %v2174
        %3338 = vmatpush2.bf16.msra.mxu0 %v2173
        %3339 = vmatprep.subr.bf16.mxu0 %v2166
        %3340 = vmatpush2.bf16.msra.mxu0 %v2165
        %3341 = vmatprep.mubr.bf16.mxu0 %v1064
        %3342 = vmatmul.mubr.bf16.gmra.mxu0 %v1063
        %v3343 = vpop.f32.mrf.mxu0
        %v3344 = vadd.f32 0.0, %v3343
        %v3345 = vpop.f32.mrf.mxu0
        %v3346 = vadd.f32 0.0, %v3345
        %v3347 = vpop.f32.mrf.mxu0
        %v3348 = vadd.f32 0.0, %v3347
        %v3349 = vpop.f32.mrf.mxu0
        %v3350 = vadd.f32 0.0, %v3349
        %3351 = vmatprep.mubr.bf16.mxu0 %v1068
        %3352 = vmatmul.mubr.bf16.gmra.mxu0 %v1067
        %v3353 = vpop.f32.mrf.mxu0
        %v3354 = vpop.f32.mrf.mxu0
        %v3355 = vpop.f32.mrf.mxu0
        %v3356 = vpop.f32.mrf.mxu0
        %3357 = vdwg.mxu0
        %3358 = vmatprep.subr.bf16.mxu0 %v2286
        %3359 = vmatpush1.bf16.msra.mxu0 %v2285
        %3360 = vmatprep.subr.bf16.mxu0 %v2278
        %3361 = vmatpush1.bf16.msra.mxu0 %v2277
        %3362 = vmatprep.subr.bf16.mxu0 %v2270
        %3363 = vmatpush1.bf16.msra.mxu0 %v2269
        %3364 = vmatprep.subr.bf16.mxu0 %v2262
        %3365 = vmatpush1.bf16.msra.mxu0 %v2261
        %3366 = vmatprep.subr.bf16.mxu0 %v2254
        %3367 = vmatpush1.bf16.msra.mxu0 %v2253
        %3368 = vmatprep.subr.bf16.mxu0 %v2246
        %3369 = vmatpush1.bf16.msra.mxu0 %v2245
        %3370 = vmatprep.subr.bf16.mxu0 %v2238
        %3371 = vmatpush1.bf16.msra.mxu0 %v2237
        %3372 = vmatprep.subr.bf16.mxu0 %v2230
        %3373 = vmatpush1.bf16.msra.mxu0 %v2229
        %3374 = vmatprep.subr.bf16.mxu0 %v2350
        %3375 = vmatpush2.bf16.msra.mxu0 %v2349
        %3376 = vmatprep.subr.bf16.mxu0 %v2342
        %3377 = vmatpush2.bf16.msra.mxu0 %v2341
        %3378 = vmatprep.subr.bf16.mxu0 %v2334
        %3379 = vmatpush2.bf16.msra.mxu0 %v2333
        %3380 = vmatprep.subr.bf16.mxu0 %v2326
        %3381 = vmatpush2.bf16.msra.mxu0 %v2325
        %3382 = vmatprep.subr.bf16.mxu0 %v2318
        %3383 = vmatpush2.bf16.msra.mxu0 %v2317
        %3384 = vmatprep.subr.bf16.mxu0 %v2310
        %3385 = vmatpush2.bf16.msra.mxu0 %v2309
        %3386 = vmatprep.subr.bf16.mxu0 %v2302
        %3387 = vmatpush2.bf16.msra.mxu0 %v2301
        %3388 = vmatprep.subr.bf16.mxu0 %v2294
        %3389 = vmatpush2.bf16.msra.mxu0 %v2293
        %3390 = vmatprep.mubr.bf16.mxu0 %v1066
        %3391 = vmatmul.mubr.bf16.gmra.mxu0 %v1065
        %v3392 = vpop.f32.mrf.mxu0
        %v3393 = vadd.f32 %v3344, %v3392
        %v3394 = vpop.f32.mrf.mxu0
        %v3395 = vadd.f32 %v3346, %v3394
        %v3396 = vpop.f32.mrf.mxu0
        %v3397 = vadd.f32 %v3348, %v3396
        %v3398 = vpop.f32.mrf.mxu0
        %v3399 = vadd.f32 %v3350, %v3398
        %3400 = vmatprep.mubr.bf16.mxu0 %v1070
        %3401 = vmatmul.mubr.bf16.gmra.mxu0 %v1069
        %v3402 = vpop.f32.mrf.mxu0
        %v3403 = vpop.f32.mrf.mxu0
        %v3404 = vpop.f32.mrf.mxu0
        %v3405 = vpop.f32.mrf.mxu0
        %3406 = vdwg.mxu0
        %v3407 = vadd.f32 %v3393, %v2793
        %v3408 = vadd.f32 %v3395, %v2795
        %v3409 = vadd.f32 %v3397, %v2797
        %v3410 = vadd.f32 %v3399, %v2799
        %v3412 = vlaneseq
        %v3413 = vshrl.u32 %v3412, 7
        %v3414 = vsub.s32 0, %v3413
        %v3415 = vrot.slane %v355, %v3414
        %v3416 = vlaneseq
        %v3417 = vshrl.u32 %v3416, 7
        %v3418 = vsub.s32 1, %v3417
        %v3419 = vrot.slane %v355, %v3418
        %v3422 = vadd.f32 %v3407, %v3415
        %v3423 = vadd.f32 %v3408, %v3419
        %v3424 = vadd.f32 %v3409, %v3415
        %v3425 = vadd.f32 %v3410, %v3419
        %v3426 = vmax.f32 %v3422, 0.0
        %v3427 = vmax.f32 %v3423, 0.0
        %v3428 = vmax.f32 %v3424, 0.0
        %v3429 = vmax.f32 %v3425, 0.0
        %v3430 = vpack.c.bf16 %v3428, %v3426
        %v3431 = vpack.c.bf16 %v3429, %v3427
        %vm3438 = vcmask 1046528
        %v3439 = vrot.slane %v3089, 1
        %v3440 = vrot.slane %v3093, 1
        %v3441 = vsel %vm3438, %v3439, %v3440
        %v3442 = vrot.slane %v3091, 1
        %v3443 = vrot.slane %v3095, 1
        %v3444 = vsel %vm3438, %v3442, %v3443
        %v3445 = vrot.slane %v3099, 1
        %v3446 = vsel %vm3438, %v3440, %v3445
        %v3447 = vrot.slane %v3101, 1
        %v3448 = vsel %vm3438, %v3443, %v3447
        %v3453 = vadd.f32 %v2891, %v3441
        %v3454 = vadd.f32 %v2893, %v3444
        %v3455 = vadd.f32 %v2895, %v3446
        %v3456 = vadd.f32 %v2897, %v3448
        %v3457 = vadd.f32 %v3453, %v3415
        %v3458 = vadd.f32 %v3454, %v3419
        %v3459 = vadd.f32 %v3455, %v3415
        %v3460 = vadd.f32 %v3456, %v3419
        %v3461 = vmax.f32 %v3457, 0.0
        %v3462 = vmax.f32 %v3458, 0.0
        %v3463 = vmax.f32 %v3459, 0.0
        %v3464 = vmax.f32 %v3460, 0.0
        %v3465 = vpack.c.bf16 %v3463, %v3461
        %v3466 = vpack.c.bf16 %v3464, %v3462
        %v3473 = vrot.slane %v3191, 1
        %v3474 = vrot.slane %v3195, 1
        %v3475 = vsel %vm3438, %v3473, %v3474
        %v3476 = vrot.slane %v3193, 1
        %v3477 = vrot.slane %v3197, 1
        %v3478 = vsel %vm3438, %v3476, %v3477
        %v3479 = vrot.slane %v3201, 1
        %v3480 = vsel %vm3438, %v3474, %v3479
        %v3481 = vrot.slane %v3203, 1
        %v3482 = vsel %vm3438, %v3477, %v3481
        %v3487 = vadd.f32 %v2989, %v3475
        %v3488 = vadd.f32 %v2991, %v3478
        %v3489 = vadd.f32 %v2993, %v3480
        %v3490 = vadd.f32 %v2995, %v3482
        %v3491 = vadd.f32 %v3487, %v3415
        %v3492 = vadd.f32 %v3488, %v3419
        %v3493 = vadd.f32 %v3489, %v3415
        %v3494 = vadd.f32 %v3490, %v3419
        %v3495 = vmax.f32 %v3491, 0.0
        %v3496 = vmax.f32 %v3492, 0.0
        %v3497 = vmax.f32 %v3493, 0.0
        %v3498 = vmax.f32 %v3494, 0.0
        %v3499 = vpack.c.bf16 %v3497, %v3495
        %v3500 = vpack.c.bf16 %v3498, %v3496
        %v3501 = vadd.f32 %v3293, %v2693
        %v3502 = vadd.f32 %v3295, %v2695
        %v3503 = vadd.f32 %v3297, %v2697
        %v3504 = vadd.f32 %v3299, %v2699
        %v3505 = vadd.f32 %v3303, %v2703
        %v3506 = vadd.f32 %v3305, %v2705
        %v3507 = vadd.f32 %v3501, %v3415
        %v3508 = vadd.f32 %v3502, %v3419
        %v3509 = vadd.f32 %v3503, %v3415
        %v3510 = vadd.f32 %v3504, %v3419
        %v3511 = vadd.f32 %v3505, %v3415
        %v3512 = vadd.f32 %v3506, %v3419
        %v3513 = vmax.f32 %v3507, 0.0
        %v3514 = vmax.f32 %v3508, 0.0
        %v3515 = vmax.f32 %v3509, 0.0
        %v3516 = vmax.f32 %v3510, 0.0
        %v3517 = vmax.f32 %v3511, 0.0
        %v3518 = vmax.f32 %v3512, 0.0
        %v3519 = vpack.c.bf16 %v3515, %v3513
        %v3520 = vpack.c.bf16 %v3516, %v3514
        %v3521 = vpack.c.bf16 %v3517, %v3517
        %v3522 = vpack.c.bf16 %v3518, %v3518
        %v3523 = vld [vmem:[%s4] sm:$0xf]
        %v3524 = vld [vmem:[%s4 + $0x4] sm:$0xf]
        %v3525 = vld [vmem:[%s4 + $0x8] sm:$0xf]
        %v3526 = vld [vmem:[%s4 + $0xc] sm:$0xf]
        %v3527 = vld [vmem:[%s4 + $0x10] sm:$0xf]
        %v3528 = vld [vmem:[%s4 + $0x14] sm:$0xf]
        %v3529 = vld [vmem:[%s4 + $0x18] sm:$0xf]
        %v3530 = vld [vmem:[%s4 + $0x1c] sm:$0xf]
        %v3531 = vld [vmem:[%s4 + $0x20] sm:$0xf]
        %v3532 = vld [vmem:[%s4 + $0x24] sm:$0xf]
        %v3533 = vld [vmem:[%s4 + $0x28] sm:$0xf]
        %v3534 = vld [vmem:[%s4 + $0x2c] sm:$0xf]
        %v3535 = vld [vmem:[%s4 + $0x30] sm:$0xf]
        %v3536 = vld [vmem:[%s4 + $0x34] sm:$0xf]
        %v3537 = vld [vmem:[%s4 + $0x38] sm:$0xf]
        %v3538 = vld [vmem:[%s4 + $0x3c] sm:$0xf]
        %v3539 = vld [vmem:[%s4 + $0x40] sm:$0xf]
        %v3540 = vld [vmem:[%s4 + $0x44] sm:$0xf]
        %v3541 = vld [vmem:[%s4 + $0x48] sm:$0xf]
        %v3542 = vld [vmem:[%s4 + $0x4c] sm:$0xf]
        %v3543 = vld [vmem:[%s4 + $0x50] sm:$0xf]
        %v3544 = vld [vmem:[%s4 + $0x54] sm:$0xf]
        %v3545 = vld [vmem:[%s4 + $0x58] sm:$0xf]
        %v3546 = vld [vmem:[%s4 + $0x5c] sm:$0xf]
        %v3547 = vld [vmem:[%s4 + $0x60] sm:$0xf]
        %v3548 = vld [vmem:[%s4 + $0x64] sm:$0xf]
        %v3549 = vld [vmem:[%s4 + $0x68] sm:$0xf]
        %v3550 = vld [vmem:[%s4 + $0x6c] sm:$0xf]
        %v3551 = vld [vmem:[%s4 + $0x70] sm:$0xf]
        %v3552 = vld [vmem:[%s4 + $0x74] sm:$0xf]
        %v3553 = vld [vmem:[%s4 + $0x78] sm:$0xf]
        %v3554 = vld [vmem:[%s4 + $0x7c] sm:$0xf]
        %v3587 = vunpack.c.l.b16 %v3523
        %v3588 = vunpack.c.l.b16 %v3524
        %v3589 = vunpack.c.l.b16 %v3525
        %v3590 = vunpack.c.l.b16 %v3526
        %v3591 = vunpack.c.l.b16 %v3527
        %v3592 = vunpack.c.l.b16 %v3528
        %v3593 = vunpack.c.l.b16 %v3529
        %v3594 = vunpack.c.l.b16 %v3530
        %v3595 = vunpack.c.l.b16 %v3531
        %v3596 = vunpack.c.l.b16 %v3532
        %v3597 = vunpack.c.l.b16 %v3533
        %v3598 = vunpack.c.l.b16 %v3534
        %v3599 = vunpack.c.l.b16 %v3535
        %v3600 = vunpack.c.l.b16 %v3536
        %v3601 = vunpack.c.l.b16 %v3537
        %v3602 = vunpack.c.l.b16 %v3538
        %v3603 = vunpack.c.l.b16 %v3539
        %v3604 = vunpack.c.l.b16 %v3540
        %v3605 = vunpack.c.l.b16 %v3541
        %v3606 = vunpack.c.l.b16 %v3542
        %v3607 = vunpack.c.l.b16 %v3543
        %v3608 = vunpack.c.l.b16 %v3544
        %v3609 = vunpack.c.l.b16 %v3545
        %v3610 = vunpack.c.l.b16 %v3546
        %v3611 = vunpack.c.l.b16 %v3547
        %v3612 = vunpack.c.l.b16 %v3548
        %v3613 = vunpack.c.l.b16 %v3549
        %v3614 = vunpack.c.l.b16 %v3550
        %v3615 = vunpack.c.l.b16 %v3551
        %v3616 = vunpack.c.l.b16 %v3552
        %v3617 = vunpack.c.l.b16 %v3553
        %v3618 = vunpack.c.l.b16 %v3554
        %v3619 = vpack.c.b16 %v3588, %v3587
        %v3620 = vpack.c.b16 %v3590, %v3589
        %v3621 = vpack.c.b16 %v3592, %v3591
        %v3622 = vpack.c.b16 %v3594, %v3593
        %v3623 = vpack.c.b16 %v3596, %v3595
        %v3624 = vpack.c.b16 %v3598, %v3597
        %v3625 = vpack.c.b16 %v3600, %v3599
        %v3626 = vpack.c.b16 %v3602, %v3601
        %v3627 = vpack.c.b16 %v3604, %v3603
        %v3628 = vpack.c.b16 %v3606, %v3605
        %v3629 = vpack.c.b16 %v3608, %v3607
        %v3630 = vpack.c.b16 %v3610, %v3609
        %v3631 = vpack.c.b16 %v3612, %v3611
        %v3632 = vpack.c.b16 %v3614, %v3613
        %v3633 = vpack.c.b16 %v3616, %v3615
        %v3634 = vpack.c.b16 %v3618, %v3617
        %3651 = vmatprep.subr.bf16.mxu0 0
        %3652 = vmatpush1.bf16.msra.mxu0 %v3626
        %3653 = vmatprep.subr.bf16.mxu0 0
        %3654 = vmatpush1.bf16.msra.mxu0 %v3625
        %3655 = vmatprep.subr.bf16.mxu0 0
        %3656 = vmatpush1.bf16.msra.mxu0 %v3624
        %3657 = vmatprep.subr.bf16.mxu0 0
        %3658 = vmatpush1.bf16.msra.mxu0 %v3623
        %3659 = vmatprep.subr.bf16.mxu0 0
        %3660 = vmatpush1.bf16.msra.mxu0 %v3622
        %3661 = vmatprep.subr.bf16.mxu0 0
        %3662 = vmatpush1.bf16.msra.mxu0 %v3621
        %3663 = vmatprep.subr.bf16.mxu0 0
        %3664 = vmatpush1.bf16.msra.mxu0 %v3620
        %3665 = vmatprep.subr.bf16.mxu0 0
        %3666 = vmatpush1.bf16.msra.mxu0 %v3619
        %3667 = vmatprep.subr.bf16.mxu0 0
        %3668 = vmatpush2.bf16.msra.mxu0 %v3634
        %3669 = vmatprep.subr.bf16.mxu0 0
        %3670 = vmatpush2.bf16.msra.mxu0 %v3633
        %3671 = vmatprep.subr.bf16.mxu0 0
        %3672 = vmatpush2.bf16.msra.mxu0 %v3632
        %3673 = vmatprep.subr.bf16.mxu0 0
        %3674 = vmatpush2.bf16.msra.mxu0 %v3631
        %3675 = vmatprep.subr.bf16.mxu0 0
        %3676 = vmatpush2.bf16.msra.mxu0 %v3630
        %3677 = vmatprep.subr.bf16.mxu0 0
        %3678 = vmatpush2.bf16.msra.mxu0 %v3629
        %3679 = vmatprep.subr.bf16.mxu0 0
        %3680 = vmatpush2.bf16.msra.mxu0 %v3628
        %3681 = vmatprep.subr.bf16.mxu0 0
        %3682 = vmatpush2.bf16.msra.mxu0 %v3627
        %3683 = vmatprep.mubr.bf16.mxu0 %v3431
        %3684 = vmatmul.mubr.bf16.gmra.mxu0 %v3430
        %v3685 = vpop.f32.mrf.mxu0
        %v3686 = vadd.f32 0.0, %v3685
        %v3687 = vpop.f32.mrf.mxu0
        %v3688 = vpop.f32.mrf.mxu0
        %v3689 = vadd.f32 0.0, %v3688
        %v3690 = vpop.f32.mrf.mxu0
        %3691 = vdwg.mxu0
        %vm3692 = vcmask 130048
        %3693 = vst.msk [vmem:[%s339] sm:$0xff] %vm3692, %v3686
        %3694 = vst.msk [vmem:[%s339 + $0x8] sm:$0xff] %vm3692, %v3689
        %3695 = vmatprep.subr.bf16.mxu0 0
        %3696 = vmatpush1.bf16.msra.mxu0 %v3626
        %3697 = vmatprep.subr.bf16.mxu0 0
        %3698 = vmatpush1.bf16.msra.mxu0 %v3625
        %3699 = vmatprep.subr.bf16.mxu0 0
        %3700 = vmatpush1.bf16.msra.mxu0 %v3624
        %3701 = vmatprep.subr.bf16.mxu0 0
        %3702 = vmatpush1.bf16.msra.mxu0 %v3623
        %3703 = vmatprep.subr.bf16.mxu0 0
        %3704 = vmatpush1.bf16.msra.mxu0 %v3622
        %3705 = vmatprep.subr.bf16.mxu0 0
        %3706 = vmatpush1.bf16.msra.mxu0 %v3621
        %3707 = vmatprep.subr.bf16.mxu0 0
        %3708 = vmatpush1.bf16.msra.mxu0 %v3620
        %3709 = vmatprep.subr.bf16.mxu0 0
        %3710 = vmatpush1.bf16.msra.mxu0 %v3619
        %3711 = vmatprep.subr.bf16.mxu0 0
        %3712 = vmatpush2.bf16.msra.mxu0 %v3634
        %3713 = vmatprep.subr.bf16.mxu0 0
        %3714 = vmatpush2.bf16.msra.mxu0 %v3633
        %3715 = vmatprep.subr.bf16.mxu0 0
        %3716 = vmatpush2.bf16.msra.mxu0 %v3632
        %3717 = vmatprep.subr.bf16.mxu0 0
        %3718 = vmatpush2.bf16.msra.mxu0 %v3631
        %3719 = vmatprep.subr.bf16.mxu0 0
        %3720 = vmatpush2.bf16.msra.mxu0 %v3630
        %3721 = vmatprep.subr.bf16.mxu0 0
        %3722 = vmatpush2.bf16.msra.mxu0 %v3629
        %3723 = vmatprep.subr.bf16.mxu0 0
        %3724 = vmatpush2.bf16.msra.mxu0 %v3628
        %3725 = vmatprep.subr.bf16.mxu0 0
        %3726 = vmatpush2.bf16.msra.mxu0 %v3627
        %3727 = vmatprep.mubr.bf16.mxu0 %v3466
        %3728 = vmatmul.mubr.bf16.gmra.mxu0 %v3465
        %v3729 = vpop.f32.mrf.mxu0
        %v3730 = vadd.f32 0.0, %v3729
        %v3731 = vpop.f32.mrf.mxu0
        %v3732 = vpop.f32.mrf.mxu0
        %v3733 = vadd.f32 0.0, %v3732
        %v3734 = vpop.f32.mrf.mxu0
        %3735 = vdwg.mxu0
        %s3736 = scalar_lea.vmem %s339, 16 [#allocation8]
        %3737 = vst.msk [vmem:[%s3736] sm:$0xff] %vm3692, %v3730
        %3738 = vst.msk [vmem:[%s3736 + $0x8] sm:$0xff] %vm3692, %v3733
        %3739 = vmatprep.subr.bf16.mxu0 0
        %3740 = vmatpush1.bf16.msra.mxu0 %v3626
        %3741 = vmatprep.subr.bf16.mxu0 0
        %3742 = vmatpush1.bf16.msra.mxu0 %v3625
        %3743 = vmatprep.subr.bf16.mxu0 0
        %3744 = vmatpush1.bf16.msra.mxu0 %v3624
        %3745 = vmatprep.subr.bf16.mxu0 0
        %3746 = vmatpush1.bf16.msra.mxu0 %v3623
        %3747 = vmatprep.subr.bf16.mxu0 0
        %3748 = vmatpush1.bf16.msra.mxu0 %v3622
        %3749 = vmatprep.subr.bf16.mxu0 0
        %3750 = vmatpush1.bf16.msra.mxu0 %v3621
        %3751 = vmatprep.subr.bf16.mxu0 0
        %3752 = vmatpush1.bf16.msra.mxu0 %v3620
        %3753 = vmatprep.subr.bf16.mxu0 0
        %3754 = vmatpush1.bf16.msra.mxu0 %v3619
        %3755 = vmatprep.subr.bf16.mxu0 0
        %3756 = vmatpush2.bf16.msra.mxu0 %v3634
        %3757 = vmatprep.subr.bf16.mxu0 0
        %3758 = vmatpush2.bf16.msra.mxu0 %v3633
        %3759 = vmatprep.subr.bf16.mxu0 0
        %3760 = vmatpush2.bf16.msra.mxu0 %v3632
        %3761 = vmatprep.subr.bf16.mxu0 0
        %3762 = vmatpush2.bf16.msra.mxu0 %v3631
        %3763 = vmatprep.subr.bf16.mxu0 0
        %3764 = vmatpush2.bf16.msra.mxu0 %v3630
        %3765 = vmatprep.subr.bf16.mxu0 0
        %3766 = vmatpush2.bf16.msra.mxu0 %v3629
        %3767 = vmatprep.subr.bf16.mxu0 0
        %3768 = vmatpush2.bf16.msra.mxu0 %v3628
        %3769 = vmatprep.subr.bf16.mxu0 0
        %3770 = vmatpush2.bf16.msra.mxu0 %v3627
        %3771 = vmatprep.mubr.bf16.mxu0 %v3500
        %3772 = vmatmul.mubr.bf16.gmra.mxu0 %v3499
        %v3773 = vpop.f32.mrf.mxu0
        %v3774 = vadd.f32 0.0, %v3773
        %v3775 = vpop.f32.mrf.mxu0
        %v3776 = vpop.f32.mrf.mxu0
        %v3777 = vadd.f32 0.0, %v3776
        %v3778 = vpop.f32.mrf.mxu0
        %3779 = vdwg.mxu0
        %s3780 = scalar_lea.vmem %s339, 32 [#allocation8]
        %3781 = vst.msk [vmem:[%s3780] sm:$0xff] %vm3692, %v3774
        %3782 = vst.msk [vmem:[%s3780 + $0x8] sm:$0xff] %vm3692, %v3777
        %vm3783 = vsmask.f32 7424
        %v3785 = vshrl.u32 %v3519, 16
        %v3787 = vshll.u32 %v3519, 16
        %v3789 = vrot.slane %v3787, 1
        %v3790 = vor.u32 %v3785, %v3789
        %v3792 = vshll.u32 %v3521, 16
        %v3794 = vrot.slane %v3792, 1
        %v3795 = vsel %vm3783, %v3790, %v3794
        %v3797 = vshrl.u32 %v3520, 16
        %v3799 = vshll.u32 %v3520, 16
        %v3801 = vrot.slane %v3799, 1
        %v3802 = vor.u32 %v3797, %v3801
        %v3804 = vshll.u32 %v3522, 16
        %v3806 = vrot.slane %v3804, 1
        %v3807 = vsel %vm3783, %v3802, %v3806
        %3810 = vmatprep.subr.bf16.mxu0 0
        %3811 = vmatpush1.bf16.msra.mxu0 %v3626
        %3812 = vmatprep.subr.bf16.mxu0 0
        %3813 = vmatpush1.bf16.msra.mxu0 %v3625
        %3814 = vmatprep.subr.bf16.mxu0 0
        %3815 = vmatpush1.bf16.msra.mxu0 %v3624
        %3816 = vmatprep.subr.bf16.mxu0 0
        %3817 = vmatpush1.bf16.msra.mxu0 %v3623
        %3818 = vmatprep.subr.bf16.mxu0 0
        %3819 = vmatpush1.bf16.msra.mxu0 %v3622
        %3820 = vmatprep.subr.bf16.mxu0 0
        %3821 = vmatpush1.bf16.msra.mxu0 %v3621
        %3822 = vmatprep.subr.bf16.mxu0 0
        %3823 = vmatpush1.bf16.msra.mxu0 %v3620
        %3824 = vmatprep.subr.bf16.mxu0 0
        %3825 = vmatpush1.bf16.msra.mxu0 %v3619
        %3826 = vmatprep.subr.bf16.mxu0 0
        %3827 = vmatpush2.bf16.msra.mxu0 %v3634
        %3828 = vmatprep.subr.bf16.mxu0 0
        %3829 = vmatpush2.bf16.msra.mxu0 %v3633
        %3830 = vmatprep.subr.bf16.mxu0 0
        %3831 = vmatpush2.bf16.msra.mxu0 %v3632
        %3832 = vmatprep.subr.bf16.mxu0 0
        %3833 = vmatpush2.bf16.msra.mxu0 %v3631
        %3834 = vmatprep.subr.bf16.mxu0 0
        %3835 = vmatpush2.bf16.msra.mxu0 %v3630
        %3836 = vmatprep.subr.bf16.mxu0 0
        %3837 = vmatpush2.bf16.msra.mxu0 %v3629
        %3838 = vmatprep.subr.bf16.mxu0 0
        %3839 = vmatpush2.bf16.msra.mxu0 %v3628
        %3840 = vmatprep.subr.bf16.mxu0 0
        %3841 = vmatpush2.bf16.msra.mxu0 %v3627
        %3842 = vmatprep.mubr.bf16.mxu0 %v3807
        %3843 = vmatmul.mubr.bf16.gmra.mxu0 %v3795
        %v3844 = vpop.f32.mrf.mxu0
        %v3845 = vadd.f32 0.0, %v3844
        %v3846 = vpop.f32.mrf.mxu0
        %v3847 = vpop.f32.mrf.mxu0
        %v3848 = vadd.f32 0.0, %v3847
        %v3849 = vpop.f32.mrf.mxu0
        %3850 = vdwg.mxu0
        %s3851 = scalar_lea.vmem %s339, 48 [#allocation8]
        %3852 = vst.msk [vmem:[%s3851] sm:$0xff] %vm3692, %v3845
        %3853 = vst.msk [vmem:[%s3851 + $0x8] sm:$0xff] %vm3692, %v3848
        %s3854 = sand.u32 %s199, 1
        %s3855 = scalar_lea.sflag [#allocation4], %s3854
        %s3856 = sand.u32 %s199, 1
        %s3857 = smul.addr %s3856, 64
        %s3858 = scalar_lea.vmem [#allocation8], %s3857
        // Predicated region
        $region61: #{tpu_custom_call.1} parent=47 // pred_check
          %p3859 = pneg %p209
        $region62: #{tpu_custom_call.1} parent=47 // pred_check_branch
          %3861 = sbr.rel (%p3859) target = $region64
        $region63: #{tpu_custom_call.1} parent=47 // pred_region
          %s3862 = smul.u32 2, %s28
          %s3864 = ssub.s32 1024, 1024
          %3865 = vsyncadd %s3855, %s3864
          %s3866 = smul.addr %s27, 8
          %s3867 = sadd.s32 %s3862, %s3866
          %s3868 = smul.addr %s3867, 128
          %s3869 = scalar_lea.hbm %s7, %s3868
          %s3870 = sshll.u32 %s3858, 4
          %s3871 = int_to_ptr.vmem [resolvable:$true] %s3870
          %3876 = dma.vmem_to_hbm [thread:$0]  %s3871, 1024, %s3869, %s3855, 128, 128, 8
        $region64: #{tpu_custom_call.1} parent=47 // pred_fallthru
          _
      $region48: #{tpu_custom_call.1} parent=5 // pred_fallthru
        _
      %p3877 = scmp.le.s32.totalorder 2, %s18
      // Predicated region
      $region65: #{tpu_custom_call.1} parent=5 // pred_check
        %p3878 = pneg %p3877
      $region66: #{tpu_custom_call.1} parent=5 // pred_check_branch
        %3880 = sbr.rel (%p3878) target = $region68
      $region67: #{tpu_custom_call.1} parent=5 // pred_region
        %s3881 = ssub.s32 %s18, 2
        // Predicated region
        $region69: #{tpu_custom_call.1} parent=67 // pred_check
          %p3882 = pneg %p215
        $region70: #{tpu_custom_call.1} parent=67 // pred_check_branch
          %3884 = sbr.rel (%p3882) target = $region72
        $region71: #{tpu_custom_call.1} parent=67 // pred_region
          %s3885 = sand.u32 %s200, 1
          %s3886 = scalar_lea.sflag [#allocation4], %s3885
          %s3887 = sand.u32 %s200, 1
          %s3888 = smul.addr %s3887, 64
          %s3889 = scalar_lea.vmem [#allocation8], %s3888
          %3890 = dma.done %s3886, 1024
        $region72: #{tpu_custom_call.1} parent=67 // pred_fallthru
          _
      $region68: #{tpu_custom_call.1} parent=5 // pred_fallthru
        _
    $region6: #{tpu_custom_call.1} parent=1 // loop_footer
      %s22 = sadd.s32 1, %s18
    $region7: #{tpu_custom_call.1} parent=1 // loop_footer_branch
      %17 = sbr.rel target = $region3
    $region8: #{tpu_custom_call.1} parent=1 // loop_exit
      _
    %3891 = vsyncpa [#allocation3], 1
    %s3892 = scalar_lea.sflag [#allocation3], 1
    %3893 = vsyncpa %s3892, 1
    %3894 = vsyncpa [#allocation6], 1
    %3895 = vsyncpa [#allocation4], 1
    %s3896 = scalar_lea.sflag [#allocation4], 1
    %3897 = vsyncpa %s3896, 1

</llo_original>
